<compile_context>
chip_gen: v7x
topology: tpu7x:2x2x1
jax: 0.10.0
libtpu: 0.0.40
codegen_flags: <defaults>
</compile_context>

<pallas_src>
import functools
import math

import jax
import jax.numpy as jnp
from jax import lax
from jax.experimental import pallas as pl
from jax.experimental.pallas import tpu as pltpu

DIM = 64
HEAD = 8
NUM = 4
DH = DIM // HEAD          # 8
VOCAB = 100
BN_EPS = 1e-5

# lane offsets of the fused (Q|K|V) projection slab ([64, 384], each block padded to 128 lanes)
QOFF, KOFF, VOFF, QKVW = 0, 128, 256, 384


# ----------------------------- fused Pallas kernel -----------------------------

def _fused_forward_kernel(idxc_ref, idxr_ref, dirs_ref, eattr_ref, emb_ref,
                          ws_ref, bn_ref, wpack_ref, vecs_ref, o_ref,
                          *, n, e1, e2, g):
    f32, bf16 = jnp.float32, jnp.bfloat16

    def row_onehot(idx_col, num):            # [R,1] int32 -> [R,num] bf16 (0/1 exact)
        cols = lax.broadcasted_iota(jnp.int32, (idx_col.shape[0], num), 1)
        return (cols == idx_col).astype(bf16)

    def col_onehot(idx_row, num):            # [1,C] int32 -> [num,C] bf16
        rows = lax.broadcasted_iota(jnp.int32, (num, idx_row.shape[1]), 0)
        return (rows == idx_row).astype(bf16)

    def dot32(a, b):
        return jnp.dot(a, b, preferred_element_type=f32)

    # ---- unpack the packed operands (all static slices) ----
    idxc = idxc_ref[...]
    idxr = idxr_ref[...]
    dirs = dirs_ref[...]
    vecs = vecs_ref[...]

    ids_both = idxc[0:2 * n, 0:1]            # side-2 ids already offset by VOCAB on host
    src1 = idxc[0:e1, 1:2]
    src2 = idxc[0:e2, 2:3]
    bat1c = idxc[0:n, 3:4]
    bat2c = idxc[0:n, 4:5]
    tg1 = idxc[0:g, 5:6]
    tg2 = idxc[0:g, 6:7]
    dst1 = idxr[0:1, 0:e1]
    dst2 = idxr[1:2, 0:e2]
    bat1r = idxr[2:3, 0:n]
    bat2r = idxr[3:4, 0:n]

    direction = dirs[0:n, 0:1]               # [N,1] f32
    direction2 = dirs[0:g, 1:2]              # [G,1] f32

    dvec1 = vecs[0:1, :]                     # direction rows of the fused QKV projections
    dvec2 = vecs[1:2, :]
    fc11d = vecs[2:3, 0:DIM // 2]
    fc11b = vecs[3:4, 0:DIM // 2]
    fc12b = vecs[4:5, 0:1]

    wqkv1 = wpack_ref[0:DIM, :]                              # [64,384] bf16 (Q|pad|K|pad|V|pad)
    wqkv2 = wpack_ref[DIM:2 * DIM, :]
    fc11x = wpack_ref[2 * DIM:3 * DIM, 0:DIM // 2]           # [64,32]
    fc12w = wpack_ref[3 * DIM:3 * DIM + DIM // 2, 0:1]       # [32,1]

    eattr = eattr_ref[...]                                   # [E1,D] f32

    # scatter/gather/pool operands as bf16 one-hots built in-kernel from int32 indices
    gsrc1 = row_onehot(src1, n)              # [E1,N] gather x at edge src
    sdst1 = col_onehot(dst1, n)              # [N,E1] scatter-add to edge dst
    gsrc2 = row_onehot(src2, n)
    sdst2 = col_onehot(dst2, n)
    t1 = row_onehot(tg1, n)                  # [G,N] target-1 gather
    t2 = row_onehot(tg2, n)                  # [G,N] target-2 gather
    b1 = row_onehot(bat1c, g)                # [N,G] one_hot(batch1)
    b2 = row_onehot(bat2c, g)                # [N,G] one_hot(batch2)
    b1t = col_onehot(bat1r, g)               # [G,N]
    b2t = col_onehot(bat2r, g)               # [G,N]

    # per-head block-diagonal sum / broadcast masks (built in-kernel, bf16)
    dd = (lax.broadcasted_iota(jnp.int32, (DIM, HEAD), 0)
          - DH * lax.broadcasted_iota(jnp.int32, (DIM, HEAD), 1))
    mblk = ((dd >= 0) & (dd < DH)).astype(bf16)          # [D,H]
    ddt = (lax.broadcasted_iota(jnp.int32, (HEAD, DIM), 1)
           - DH * lax.broadcasted_iota(jnp.int32, (HEAD, DIM), 0))
    mblkT = ((ddt >= 0) & (ddt < DH)).astype(bf16)       # [H,D]

    # ---- fused embedding lookup for both sides: one [2N, 2*VOCAB] @ [2*VOCAB, D] matmul ----
    x12 = dot32(row_onehot(ids_both, 2 * VOCAB), emb_ref[...])   # [2N,D] f32
    x1 = x12[0:n]
    x2 = x12[n:2 * n]

    def batchnorm(h, gamma, beta):
        # one-pass stats: single reduction over [h | h*h]
        stats = jnp.mean(jnp.concatenate([h, h * h], axis=1), axis=0, keepdims=True)  # [1,2D]
        mean = stats[:, 0:DIM]
        var = jnp.maximum(stats[:, DIM:2 * DIM] - mean * mean, 0.0)
        return (h - mean) * lax.rsqrt(var + BN_EPS) * gamma + beta

    # ---- side 1: 4 x (GINEConv(eps=0) -> MLP -> BN -> residual), fully unrolled ----
    for i in range(NUM):
        lyr = bn_ref[i]                                            # [4,D]: b1,b2,gamma,beta
        msg = jnp.maximum(dot32(gsrc1, x1.astype(bf16)) + eattr, 0.0)   # ReLU(x_j + e_ji)  [E1,D]
        agg = dot32(sdst1, msg.astype(bf16))                       # sum over in-edges     [N,D]
        h = (x1 + agg).astype(bf16)                                # (1+eps)*x + agg, eps=0
        h = jnp.maximum(dot32(h, ws_ref[2 * i]) + lyr[0:1, :], 0.0)
        h = dot32(h.astype(bf16), ws_ref[2 * i + 1]) + lyr[1:2, :]
        x1 = x1 + batchnorm(h, lyr[2:3, :], lyr[3:4, :])

    # ---- side 2: 4 x (GINConv(eps=0) -> MLP -> BN -> residual), fully unrolled ----
    adj2 = dot32(sdst2, gsrc2).astype(bf16)                        # [N,N], A[i,j] = #edges j->i
    for i in range(NUM):
        lyr = bn_ref[NUM + i]
        agg = dot32(adj2, x2.astype(bf16))
        h = (x2 + agg).astype(bf16)
        h = jnp.maximum(dot32(h, ws_ref[2 * NUM + 2 * i]) + lyr[0:1, :], 0.0)
        h = dot32(h.astype(bf16), ws_ref[2 * NUM + 2 * i + 1]) + lyr[1:2, :]
        x2 = x2 + batchnorm(h, lyr[2:3, :], lyr[3:4, :])

    # ---- fused 8-head attention pooling ----
    def attn_pool(x, wqkv, dvec, bK1, bK2, bS, bSt):
        # fused Q|K|V projection (1/sqrt(DH) folded into Wq; direction column as rank-1 add)
        qkv = dot32(x.astype(bf16), wqkv) + direction * dvec       # [N,384] f32
        q = qkv[:, QOFF:QOFF + DIM]
        k_all = qkv[:, KOFF:KOFF + DIM].astype(bf16)
        v = qkv[:, VOFF:VOFF + DIM]
        k1 = dot32(t1, k_all)                                      # [G,D] K at target-1 nodes
        k2 = dot32(t2, k_all)                                      # [G,D] K at target-2 nodes
        k1n = dot32(bK1, k1.astype(bf16))                          # broadcast to nodes [N,D]
        k2n = dot32(bK2, k2.astype(bf16))
        # both per-head QK reductions in one stacked matmul
        qk = dot32(jnp.concatenate([q * k1n, q * k2n], axis=0).astype(bf16), mblk)  # [2N,H]
        m = jnp.max(qk, axis=0, keepdims=True)    # global per-head max (constant within segments)
        e = jnp.exp(qk - m)
        e_lane = jnp.concatenate([e[0:n], e[n:2 * n]], axis=1)     # [N,2H]
        # both segment-softmax denominators with one segment-sum + one broadcast matmul
        denom = dot32(bS, dot32(bSt, e_lane.astype(bf16)).astype(bf16))             # [N,2H]
        w = e_lane / jnp.maximum(denom, 1e-30)    # clamp: all-underflow segment can't yield NaN
        wsum = w[:, 0:HEAD] + w[:, HEAD:2 * HEAD]                  # sQK1 + sQK2   [N,H]
        wexp = dot32(wsum.astype(bf16), mblkT)                     # per-head -> per-feature [N,D]
        return dot32(bSt, (wexp * v).astype(bf16))                 # global_add_pool [G,D]

    # side 1: all masks/softmax/pool use x1.batch
    # side 2: QK1 mask uses x1.batch; QK2 mask, softmax and pool use x2.batch (as in reference)
    pooled = (attn_pool(x1, wqkv1, dvec1, b1, b1, b1, b1t)
              + attn_pool(x2, wqkv2, dvec2, b1, b2, b2, b2t))

    # ---- head: fc11 -> GELU -> (Dropout = identity) -> fc12 -> sigmoid ----
    h = dot32(pooled.astype(bf16), fc11x) + direction2 * fc11d + fc11b
    h = 0.5 * h * (1.0 + lax.erf(h * (1.0 / math.sqrt(2.0))))      # exact GELU
    # TODO(synk): torch.nn.Dropout(0.5) implemented as identity (eval-mode semantics).
    h = dot32(h.astype(bf16), fc12w) + fc12b
    # lane-dense output: broadcast the [G,1] result across 128 lanes (unmasked vst)
    o_ref[...] = jnp.broadcast_to(jax.nn.sigmoid(h), (g, 128))


# ------------------------------ parameters ------------------------------

def init_params(key):
    keys = jax.random.split(key, 64)
    it = iter(keys)

    def unif(shape, fan_in):
        bound = 1.0 / math.sqrt(fan_in)
        return jax.random.uniform(next(it), shape, jnp.float32, -bound, bound)

    p = {}
    p["emb1"] = jax.random.normal(next(it), (VOCAB, DIM), jnp.float32)
    p["emb2"] = jax.random.normal(next(it), (VOCAB, DIM), jnp.float32)
    for side in (1, 2):
        layers = []
        for _ in range(NUM):
            layers.append(dict(
                w1=unif((DIM, DIM), DIM), b1=unif((1, DIM), DIM),
                w2=unif((DIM, DIM), DIM), b2=unif((1, DIM), DIM),
                gamma=jnp.ones((1, DIM), jnp.float32),
                beta=jnp.zeros((1, DIM), jnp.float32)))
        p[f"layers{side}"] = layers
        # per-head [DIM+1, DH] weights stacked head-major into [DIM+1, DIM]
        p[f"wq{side}"] = unif((DIM + 1, DIM), DIM + 1)
        p[f"wk{side}"] = unif((DIM + 1, DIM), DIM + 1)
        p[f"wv{side}"] = unif((DIM + 1, DIM), DIM + 1)
    p["fc11_w"] = unif((DIM + 1, DIM // 2), DIM + 1)
    p["fc11_b"] = unif((1, DIM // 2), DIM + 1)
    p["fc12_w"] = unif((DIM // 2, 1), DIM // 2)
    p["fc12_b"] = unif((1, 1), DIM // 2)
    return p


def prepare_params(p):
    """Pack all kernel weights into 5 arrays (fewer DMAs), fold the 1/sqrt(DH) attention
    scale into Wq, and cast matmul weights to bf16 (BN/bias/direction rows stay f32)."""
    f32, bf16 = jnp.float32, jnp.bfloat16
    scale = 1.0 / math.sqrt(DH)

    # fused embedding table [2*VOCAB, D]
    emb = jnp.concatenate([p["emb1"], p["emb2"]], axis=0).astype(bf16)

    # GNN MLP weights [16, D, D]  (side1: 2*i / 2*i+1 ; side2: 8+2*i / 8+2*i+1)
    # BN/bias slab    [8, 4, D]   rows per layer: b1, b2, gamma, beta
    ws, bn = [], []
    for side in (1, 2):
        for l in p[f"layers{side}"]:
            ws += [l["w1"], l["w2"]]
            bn.append(jnp.concatenate([l["b1"], l["b2"], l["gamma"], l["beta"]], axis=0))
    ws = jnp.stack(ws).astype(bf16)
    bn = jnp.stack(bn)

    def qkv_pack(side):
        wq = p[f"wq{side}"] * scale          # fold attention scale into Q (x-part and dir-part)
        wk = p[f"wk{side}"]
        wv = p[f"wv{side}"]
        blk = jnp.zeros((DIM + 1, QKVW), f32)
        blk = blk.at[:, QOFF:QOFF + DIM].set(wq)
        blk = blk.at[:, KOFF:KOFF + DIM].set(wk)
        blk = blk.at[:, VOFF:VOFF + DIM].set(wv)
        return blk[:DIM], blk[DIM:DIM + 1]

    x1blk, dvec1 = qkv_pack(1)
    x2blk, dvec2 = qkv_pack(2)

    # weight slab [224, 384] bf16: rows 0:64 QKV1, 64:128 QKV2, 128:192 fc11 (cols 0:32),
    # 192:224 fc12 (col 0)
    wpack = jnp.zeros((3 * DIM + DIM // 2, QKVW), f32)
    wpack = wpack.at[0:DIM].set(x1blk)
    wpack = wpack.at[DIM:2 * DIM].set(x2blk)
    wpack = wpack.at[2 * DIM:3 * DIM, 0:DIM // 2].set(p["fc11_w"][:DIM])
    wpack = wpack.at[3 * DIM:3 * DIM + DIM // 2, 0:1].set(p["fc12_w"])
    wpack = wpack.astype(bf16)

    # row-vector slab [5, 384] f32: dvec1, dvec2, fc11 direction col, fc11 bias, fc12 bias
    vecs = jnp.zeros((5, QKVW), f32)
    vecs = vecs.at[0:1].set(dvec1)
    vecs = vecs.at[1:2].set(dvec2)
    vecs = vecs.at[2:3, 0:DIM // 2].set(p["fc11_w"][DIM:DIM + 1])
    vecs = vecs.at[3:4, 0:DIM // 2].set(p["fc11_b"])
    vecs = vecs.at[4:5, 0:1].set(p["fc12_b"])

    return dict(emb=emb, ws=ws, bn=bn, wpack=wpack, vecs=vecs)


# ------------------------------ forward pass ------------------------------

def all_gnn_rg_forward(prep, x1, x2):
    i32, f32 = jnp.int32, jnp.float32
    n = int(x1["x"].shape[0])
    e1 = int(x1["edge_index"].shape[1])
    e2 = int(x2["edge_index"].shape[1])
    g = int(x1["direction2"].shape[0])       # static graph count -> no device->host sync

    # ---- pack graph-side operands into 4 arrays (host/XLA side, once per forward) ----
    maxc = max(2 * n, e1, e2)
    idx_col = jnp.zeros((maxc, 8), i32)

    def put_col(a, col, v):
        v = jnp.asarray(v).astype(i32).reshape(-1)
        return a.at[: v.shape[0], col].set(v)

    ids_both = jnp.concatenate([jnp.asarray(x1["x"]).astype(i32),
                                jnp.asarray(x2["x"]).astype(i32) + VOCAB])
    idx_col = put_col(idx_col, 0, ids_both)
    idx_col = put_col(idx_col, 1, x1["edge_index"][0])
    idx_col = put_col(idx_col, 2, x2["edge_index"][0])
    idx_col = put_col(idx_col, 3, x1["batch"])
    idx_col = put_col(idx_col, 4, x2["batch"])
    idx_col = put_col(idx_col, 5, x1["target1_index"])
    idx_col = put_col(idx_col, 6, x1["target2_index"])

    maxr = max(e1, e2, n)
    idx_row = jnp.zeros((4, maxr), i32)
    idx_row = idx_row.at[0, :e1].set(jnp.asarray(x1["edge_index"][1]).astype(i32))
    idx_row = idx_row.at[1, :e2].set(jnp.asarray(x2["edge_index"][1]).astype(i32))
    idx_row = idx_row.at[2, :n].set(jnp.asarray(x1["batch"]).astype(i32))
    idx_row = idx_row.at[3, :n].set(jnp.asarray(x2["batch"]).astype(i32))

    dirs = jnp.zeros((max(n, g), 2), f32)
    dirs = dirs.at[:n, 0].set(jnp.asarray(x1["direction"]).astype(f32).reshape(-1))
    dirs = dirs.at[:g, 1].set(jnp.asarray(x1["direction2"]).astype(f32).reshape(-1))

    eattr = jnp.asarray(x1["edge_attr"]).astype(f32)

    kernel = functools.partial(_fused_forward_kernel, n=n, e1=e1, e2=e2, g=g)
    vspec = pl.BlockSpec(memory_space=pltpu.MemorySpace.VMEM)
    out = pl.pallas_call(
        kernel,
        out_shape=jax.ShapeDtypeStruct((g, 128), f32),
        in_specs=[vspec] * 9,
        out_specs=vspec,
    )(idx_col, idx_row, dirs, eattr,
      prep["emb"], prep["ws"], prep["bn"], prep["wpack"], prep["vecs"])
    # TODO(synk): for a *batch* of samples, add a leading "parallel" grid axis (BlockSpec over
    # the sample axis + dimension_semantics=("parallel",...)) so both v7x TensorCores are used;
    # a single fused sample has no batch axis to shard.
    # TODO(synk): for large graphs the dense one-hots / adjacency grow O(N*E)/O(N^2); switch to a
    # node-tiled BlockSpec grid or a CSR scalar-prefetch gather (thresholds ~2x lower on v7x's
    # 64 MiB VMEM), and set vmem_limit_bytes explicitly when doing so.
    return out[:, 0:1]


# ------------------------------ pure-JAX reference (for self-validation) ------------------------------

def reference_forward(p, x1, x2):
    """f32 reference that mirrors the PyTorch module semantics."""
    n = x1["x"].shape[0]
    g = x1["direction2"].shape[0]

    def bn(h, gamma, beta):
        mean = h.mean(0, keepdims=True)
        var = ((h - mean) ** 2).mean(0, keepdims=True)
        return (h - mean) / jnp.sqrt(var + BN_EPS) * gamma + beta

    out1 = p["emb1"][x1["x"]]
    s1, d1 = x1["edge_index"][0], x1["edge_index"][1]
    for l in p["layers1"]:
        msg = jax.nn.relu(out1[s1] + x1["edge_attr"])
        agg = jax.ops.segment_sum(msg, d1, num_segments=n)
        h = out1 + agg
        h = jax.nn.relu(h @ l["w1"] + l["b1"]) @ l["w2"] + l["b2"]
        out1 = out1 + bn(h, l["gamma"], l["beta"])

    out2 = p["emb2"][x2["x"]]
    s2, d2 = x2["edge_index"][0], x2["edge_index"][1]
    for l in p["layers2"]:
        agg = jax.ops.segment_sum(out2[s2], d2, num_segments=n)
        h = out2 + agg
        h = jax.nn.relu(h @ l["w1"] + l["b1"]) @ l["w2"] + l["b2"]
        out2 = out2 + bn(h, l["gamma"], l["beta"])

    direction = x1["direction"]
    o1 = jnp.concatenate([out1, direction], axis=1)
    o2 = jnp.concatenate([out2, direction], axis=1)
    batch1, batch2 = x1["batch"], x2["batch"]
    tg1, tg2 = x1["target1_index"], x1["target2_index"]

    def seg_softmax(v, seg):
        mx = jax.ops.segment_max(v, seg, num_segments=g)
        e = jnp.exp(v - mx[seg])
        s = jax.ops.segment_sum(e, seg, num_segments=g)
        return e / s[seg]

    def side(o, wq, wk, wv, bK1, bK2, bS):
        outs = []
        for hh in range(HEAD):
            c = slice(hh * DH, (hh + 1) * DH)
            Q, V = o @ wq[:, c], o @ wv[:, c]
            K1, K2 = o[tg1] @ wk[:, c], o[tg2] @ wk[:, c]
            qk1 = (Q * K1[bK1]).sum(1) / math.sqrt(DH)
            qk2 = (Q * K2[bK2]).sum(1) / math.sqrt(DH)
            w = seg_softmax(qk1, bS) + seg_softmax(qk2, bS)
            outs.append(jax.ops.segment_sum(w[:, None] * V, bS, num_segments=g))
        return jnp.concatenate(outs, axis=1)

    pooled = (side(o1, p["wq1"], p["wk1"], p["wv1"], batch1, batch1, batch1)
              + side(o2, p["wq2"], p["wk2"], p["wv2"], batch1, batch2, batch2))
    out = jnp.concatenate([pooled, x1["direction2"]], axis=1)
    h = out @ p["fc11_w"] + p["fc11_b"]
    h = 0.5 * h * (1.0 + jax.lax.erf(h / math.sqrt(2.0)))
    h = h @ p["fc12_w"] + p["fc12_b"]
    return jax.nn.sigmoid(h)


# ------------------------------ main ------------------------------

if __name__ == "__main__":
    key = jax.random.PRNGKey(0)
    kp, kd = jax.random.split(key)
    params = init_params(kp)
    prep = prepare_params(params)

    N, E, G = 16, 32, 2
    ks = jax.random.split(kd, 10)
    ids1 = jax.random.randint(ks[0], (N,), 0, VOCAB)
    ids2 = jax.random.randint(ks[1], (N,), 0, VOCAB)
    # edges kept within each graph partition (nodes 0..7 -> graph 0, 8..15 -> graph 1)
    src_a = jax.random.randint(ks[2], (E // 2,), 0, N // 2)
    dst_a = jax.random.randint(ks[3], (E // 2,), 0, N // 2)
    src_b = jax.random.randint(ks[4], (E // 2,), N // 2, N)
    dst_b = jax.random.randint(ks[5], (E // 2,), N // 2, N)
    edge_index1 = jnp.stack([jnp.concatenate([src_a, src_b]),
                             jnp.concatenate([dst_a, dst_b])]).astype(jnp.int32)
    edge_index2 = jnp.stack([jnp.concatenate([dst_a, dst_b]),
                             jnp.concatenate([src_a, src_b])]).astype(jnp.int32)
    edge_attr1 = jax.random.normal(ks[6], (E, DIM), jnp.float32)
    batch = jnp.concatenate([jnp.zeros((N // 2,), jnp.int32),
                             jnp.ones((N // 2,), jnp.int32)])
    direction = jax.random.normal(ks[7], (N, 1), jnp.float32)
    direction2 = jax.random.normal(ks[8], (G, 1), jnp.float32)

    x1 = dict(x=ids1, edge_index=edge_index1, edge_attr=edge_attr1, batch=batch,
              target1_index=jnp.array([2, 10], jnp.int32),
              target2_index=jnp.array([5, 13], jnp.int32),
              direction=direction, direction2=direction2)
    x2 = dict(x=ids2, edge_index=edge_index2, batch=batch)

    out = all_gnn_rg_forward(prep, x1, x2)
    out = jax.block_until_ready(out)
    assert out.shape == (G, 1), out.shape
    assert bool(jnp.all(jnp.isfinite(out)))

    # self-check against the pure-JAX f32 reference (loose tolerance: kernel uses bf16 weights)
    ref = reference_forward(params, x1, x2)
    err = float(jnp.max(jnp.abs(out - ref)))
    assert err < 0.1, f"kernel/reference mismatch: {err}"
    print("KERNEL_OK")
</pallas_src>

<mosaic_0001>
module attributes {stable_mosaic.version = 11 : i64} {
  func.func @_fused_forward_kernel(%arg0: memref<32x8xi32, #tpu.memory_space<vmem>>, %arg1: memref<4x32xi32, #tpu.memory_space<vmem>>, %arg2: memref<16x2xf32, #tpu.memory_space<vmem>>, %arg3: memref<32x64xf32, #tpu.memory_space<vmem>>, %arg4: memref<200x64xbf16, #tpu.memory_space<vmem>>, %arg5: memref<16x64x64xbf16, #tpu.memory_space<vmem>>, %arg6: memref<8x4x64xf32, #tpu.memory_space<vmem>>, %arg7: memref<224x384xbf16, #tpu.memory_space<vmem>>, %arg8: memref<5x384xf32, #tpu.memory_space<vmem>>, %arg9: memref<2x128xf32, #tpu.memory_space<vmem>>) attributes {dimension_semantics = [], scalar_prefetch = 0 : i64, scratch_operands = 0 : i64, tpu.core_type = #tpu.core_type<tc>} {
    %c0 = arith.constant 0 : index
    %c0_0 = arith.constant 0 : index
    %0 = vector.load %arg0[%c0, %c0_0] : memref<32x8xi32, #tpu.memory_space<vmem>>, vector<32x8xi32>
    %c0_1 = arith.constant 0 : index
    %c0_2 = arith.constant 0 : index
    %1 = vector.load %arg1[%c0_1, %c0_2] : memref<4x32xi32, #tpu.memory_space<vmem>>, vector<4x32xi32>
    %c0_3 = arith.constant 0 : index
    %c0_4 = arith.constant 0 : index
    %2 = vector.load %arg2[%c0_3, %c0_4] : memref<16x2xf32, #tpu.memory_space<vmem>>, vector<16x2xf32>
    %c0_5 = arith.constant 0 : index
    %c0_6 = arith.constant 0 : index
    %3 = vector.load %arg8[%c0_5, %c0_6] : memref<5x384xf32, #tpu.memory_space<vmem>>, vector<5x384xf32>
    %4 = vector.extract_strided_slice %0 {offsets = [0, 0], sizes = [32, 1], strides = [1, 1]} : vector<32x8xi32> to vector<32x1xi32>
    %5 = vector.extract_strided_slice %0 {offsets = [0, 1], sizes = [32, 1], strides = [1, 1]} : vector<32x8xi32> to vector<32x1xi32>
    %6 = vector.extract_strided_slice %0 {offsets = [0, 2], sizes = [32, 1], strides = [1, 1]} : vector<32x8xi32> to vector<32x1xi32>
    %7 = vector.extract_strided_slice %0 {offsets = [0, 3], sizes = [16, 1], strides = [1, 1]} : vector<32x8xi32> to vector<16x1xi32>
    %8 = vector.extract_strided_slice %0 {offsets = [0, 4], sizes = [16, 1], strides = [1, 1]} : vector<32x8xi32> to vector<16x1xi32>
    %9 = vector.extract_strided_slice %0 {offsets = [0, 5], sizes = [2, 1], strides = [1, 1]} : vector<32x8xi32> to vector<2x1xi32>
    %10 = vector.extract_strided_slice %0 {offsets = [0, 6], sizes = [2, 1], strides = [1, 1]} : vector<32x8xi32> to vector<2x1xi32>
    %11 = vector.extract_strided_slice %1 {offsets = [0, 0], sizes = [1, 32], strides = [1, 1]} : vector<4x32xi32> to vector<1x32xi32>
    %12 = vector.extract_strided_slice %1 {offsets = [1, 0], sizes = [1, 32], strides = [1, 1]} : vector<4x32xi32> to vector<1x32xi32>
    %13 = vector.extract_strided_slice %1 {offsets = [2, 0], sizes = [1, 16], strides = [1, 1]} : vector<4x32xi32> to vector<1x16xi32>
    %14 = vector.extract_strided_slice %1 {offsets = [3, 0], sizes = [1, 16], strides = [1, 1]} : vector<4x32xi32> to vector<1x16xi32>
    %15 = vector.extract_strided_slice %2 {offsets = [0, 0], sizes = [16, 1], strides = [1, 1]} : vector<16x2xf32> to vector<16x1xf32>
    %16 = vector.extract_strided_slice %2 {offsets = [0, 1], sizes = [2, 1], strides = [1, 1]} : vector<16x2xf32> to vector<2x1xf32>
    %17 = vector.extract_strided_slice %3 {offsets = [0, 0], sizes = [1, 384], strides = [1, 1]} : vector<5x384xf32> to vector<1x384xf32>
    %18 = vector.extract_strided_slice %3 {offsets = [1, 0], sizes = [1, 384], strides = [1, 1]} : vector<5x384xf32> to vector<1x384xf32>
    %19 = vector.extract_strided_slice %3 {offsets = [2, 0], sizes = [1, 32], strides = [1, 1]} : vector<5x384xf32> to vector<1x32xf32>
    %20 = vector.extract_strided_slice %3 {offsets = [3, 0], sizes = [1, 32], strides = [1, 1]} : vector<5x384xf32> to vector<1x32xf32>
    %21 = vector.extract_strided_slice %3 {offsets = [4, 0], sizes = [1, 1], strides = [1, 1]} : vector<5x384xf32> to vector<1x1xf32>
    %c0_7 = arith.constant 0 : index
    %c0_8 = arith.constant 0 : index
    %22 = vector.load %arg7[%c0_7, %c0_8] : memref<224x384xbf16, #tpu.memory_space<vmem>>, vector<64x384xbf16>
    %c64 = arith.constant 64 : index
    %c0_9 = arith.constant 0 : index
    %23 = vector.load %arg7[%c64, %c0_9] : memref<224x384xbf16, #tpu.memory_space<vmem>>, vector<64x384xbf16>
    %c128 = arith.constant 128 : index
    %c0_10 = arith.constant 0 : index
    %24 = vector.load %arg7[%c128, %c0_10] : memref<224x384xbf16, #tpu.memory_space<vmem>>, vector<64x32xbf16>
    %c192 = arith.constant 192 : index
    %c0_11 = arith.constant 0 : index
    %25 = vector.load %arg7[%c192, %c0_11] : memref<224x384xbf16, #tpu.memory_space<vmem>>, vector<32x1xbf16>
    %c0_12 = arith.constant 0 : index
    %c0_13 = arith.constant 0 : index
    %26 = vector.load %arg3[%c0_12, %c0_13] : memref<32x64xf32, #tpu.memory_space<vmem>>, vector<32x64xf32>
    %27 = tpu.iota {dimensions = array<i32: 1>} : vector<32x16xi32>
    %28 = vector.broadcast %5 : vector<32x1xi32> to vector<32x16xi32>
    %29 = arith.cmpi eq, %27, %28 : vector<32x16xi32>
    %30 = arith.extui %29 : vector<32x16xi1> to vector<32x16xi32>
    %31 = arith.sitofp %30 : vector<32x16xi32> to vector<32x16xf32>
    %32 = arith.truncf %31 : vector<32x16xf32> to vector<32x16xbf16>
    %33 = tpu.iota {dimensions = array<i32: 0>} : vector<16x32xi32>
    %34 = vector.broadcast %11 : vector<1x32xi32> to vector<16x32xi32>
    %35 = arith.cmpi eq, %33, %34 : vector<16x32xi32>
    %36 = arith.extui %35 : vector<16x32xi1> to vector<16x32xi32>
    %37 = arith.sitofp %36 : vector<16x32xi32> to vector<16x32xf32>
    %38 = arith.truncf %37 : vector<16x32xf32> to vector<16x32xbf16>
    %39 = tpu.iota {dimensions = array<i32: 1>} : vector<32x16xi32>
    %40 = vector.broadcast %6 : vector<32x1xi32> to vector<32x16xi32>
    %41 = arith.cmpi eq, %39, %40 : vector<32x16xi32>
    %42 = arith.extui %41 : vector<32x16xi1> to vector<32x16xi32>
    %43 = arith.sitofp %42 : vector<32x16xi32> to vector<32x16xf32>
    %44 = arith.truncf %43 : vector<32x16xf32> to vector<32x16xbf16>
    %45 = tpu.iota {dimensions = array<i32: 0>} : vector<16x32xi32>
    %46 = vector.broadcast %12 : vector<1x32xi32> to vector<16x32xi32>
    %47 = arith.cmpi eq, %45, %46 : vector<16x32xi32>
    %48 = arith.extui %47 : vector<16x32xi1> to vector<16x32xi32>
    %49 = arith.sitofp %48 : vector<16x32xi32> to vector<16x32xf32>
    %50 = arith.truncf %49 : vector<16x32xf32> to vector<16x32xbf16>
    %51 = tpu.iota {dimensions = array<i32: 1>} : vector<2x16xi32>
    %52 = vector.broadcast %9 : vector<2x1xi32> to vector<2x16xi32>
    %53 = arith.cmpi eq, %51, %52 : vector<2x16xi32>
    %54 = arith.extui %53 : vector<2x16xi1> to vector<2x16xi32>
    %55 = arith.sitofp %54 : vector<2x16xi32> to vector<2x16xf32>
    %56 = arith.truncf %55 : vector<2x16xf32> to vector<2x16xbf16>
    %57 = tpu.iota {dimensions = array<i32: 1>} : vector<2x16xi32>
    %58 = vector.broadcast %10 : vector<2x1xi32> to vector<2x16xi32>
    %59 = arith.cmpi eq, %57, %58 : vector<2x16xi32>
    %60 = arith.extui %59 : vector<2x16xi1> to vector<2x16xi32>
    %61 = arith.sitofp %60 : vector<2x16xi32> to vector<2x16xf32>
    %62 = arith.truncf %61 : vector<2x16xf32> to vector<2x16xbf16>
    %63 = tpu.iota {dimensions = array<i32: 1>} : vector<16x2xi32>
    %64 = vector.broadcast %7 : vector<16x1xi32> to vector<16x2xi32>
    %65 = arith.cmpi eq, %63, %64 : vector<16x2xi32>
    %66 = arith.extui %65 : vector<16x2xi1> to vector<16x2xi32>
    %67 = arith.sitofp %66 : vector<16x2xi32> to vector<16x2xf32>
    %68 = arith.truncf %67 : vector<16x2xf32> to vector<16x2xbf16>
    %69 = tpu.iota {dimensions = array<i32: 1>} : vector<16x2xi32>
    %70 = vector.broadcast %8 : vector<16x1xi32> to vector<16x2xi32>
    %71 = arith.cmpi eq, %69, %70 : vector<16x2xi32>
    %72 = arith.extui %71 : vector<16x2xi1> to vector<16x2xi32>
    %73 = arith.sitofp %72 : vector<16x2xi32> to vector<16x2xf32>
    %74 = arith.truncf %73 : vector<16x2xf32> to vector<16x2xbf16>
    %75 = tpu.iota {dimensions = array<i32: 0>} : vector<2x16xi32>
    %76 = vector.broadcast %13 : vector<1x16xi32> to vector<2x16xi32>
    %77 = arith.cmpi eq, %75, %76 : vector<2x16xi32>
    %78 = arith.extui %77 : vector<2x16xi1> to vector<2x16xi32>
    %79 = arith.sitofp %78 : vector<2x16xi32> to vector<2x16xf32>
    %80 = arith.truncf %79 : vector<2x16xf32> to vector<2x16xbf16>
    %81 = tpu.iota {dimensions = array<i32: 0>} : vector<2x16xi32>
    %82 = vector.broadcast %14 : vector<1x16xi32> to vector<2x16xi32>
    %83 = arith.cmpi eq, %81, %82 : vector<2x16xi32>
    %84 = arith.extui %83 : vector<2x16xi1> to vector<2x16xi32>
    %85 = arith.sitofp %84 : vector<2x16xi32> to vector<2x16xf32>
    %86 = arith.truncf %85 : vector<2x16xf32> to vector<2x16xbf16>
    %87 = tpu.iota {dimensions = array<i32: 0>} : vector<64x8xi32>
    %88 = tpu.iota {dimensions = array<i32: 1>} : vector<64x8xi32>
    %c8_i32 = arith.constant 8 : i32
    %89 = vector.broadcast %c8_i32 : i32 to vector<64x8xi32>
    %90 = arith.muli %89, %88 : vector<64x8xi32>
    %91 = arith.subi %87, %90 : vector<64x8xi32>
    %c0_i32 = arith.constant 0 : i32
    %92 = vector.broadcast %c0_i32 : i32 to vector<64x8xi32>
    %93 = arith.cmpi sge, %91, %92 : vector<64x8xi32>
    %c8_i32_14 = arith.constant 8 : i32
    %94 = vector.broadcast %c8_i32_14 : i32 to vector<64x8xi32>
    %95 = arith.cmpi slt, %91, %94 : vector<64x8xi32>
    %96 = arith.andi %93, %95 : vector<64x8xi1>
    %97 = arith.extui %96 : vector<64x8xi1> to vector<64x8xi32>
    %98 = arith.sitofp %97 : vector<64x8xi32> to vector<64x8xf32>
    %99 = arith.truncf %98 : vector<64x8xf32> to vector<64x8xbf16>
    %100 = tpu.iota {dimensions = array<i32: 1>} : vector<8x64xi32>
    %101 = tpu.iota {dimensions = array<i32: 0>} : vector<8x64xi32>
    %c8_i32_15 = arith.constant 8 : i32
    %102 = vector.broadcast %c8_i32_15 : i32 to vector<8x64xi32>
    %103 = arith.muli %102, %101 : vector<8x64xi32>
    %104 = arith.subi %100, %103 : vector<8x64xi32>
    %c0_i32_16 = arith.constant 0 : i32
    %105 = vector.broadcast %c0_i32_16 : i32 to vector<8x64xi32>
    %106 = arith.cmpi sge, %104, %105 : vector<8x64xi32>
    %c8_i32_17 = arith.constant 8 : i32
    %107 = vector.broadcast %c8_i32_17 : i32 to vector<8x64xi32>
    %108 = arith.cmpi slt, %104, %107 : vector<8x64xi32>
    %109 = arith.andi %106, %108 : vector<8x64xi1>
    %110 = arith.extui %109 : vector<8x64xi1> to vector<8x64xi32>
    %111 = arith.sitofp %110 : vector<8x64xi32> to vector<8x64xf32>
    %112 = arith.truncf %111 : vector<8x64xf32> to vector<8x64xbf16>
    %113 = tpu.iota {dimensions = array<i32: 1>} : vector<32x200xi32>
    %114 = vector.broadcast %4 : vector<32x1xi32> to vector<32x200xi32>
    %115 = arith.cmpi eq, %113, %114 : vector<32x200xi32>
    %116 = arith.extui %115 : vector<32x200xi1> to vector<32x200xi32>
    %117 = arith.sitofp %116 : vector<32x200xi32> to vector<32x200xf32>
    %118 = arith.truncf %117 : vector<32x200xf32> to vector<32x200xbf16>
    %c0_18 = arith.constant 0 : index
    %c0_19 = arith.constant 0 : index
    %119 = vector.load %arg4[%c0_18, %c0_19] : memref<200x64xbf16, #tpu.memory_space<vmem>>, vector<200x64xbf16>
    %cst = arith.constant dense<0.000000e+00> : vector<32x64xf32>
    %120 = tpu.matmul %118, %119, %cst {dimension_numbers = #tpu.dot_dimension_numbers<[1], [0], [0], [1], [0, 0, 1, 1], [], []>} : vector<32x200xbf16>, vector<200x64xbf16>, vector<32x64xf32> -> vector<32x64xf32>
    %121 = vector.extract_strided_slice %120 {offsets = [0, 0], sizes = [16, 64], strides = [1, 1]} : vector<32x64xf32> to vector<16x64xf32>
    %122 = vector.extract_strided_slice %120 {offsets = [16, 0], sizes = [16, 64], strides = [1, 1]} : vector<32x64xf32> to vector<16x64xf32>
    %c0_20 = arith.constant 0 : index
    %c0_21 = arith.constant 0 : index
    %c0_22 = arith.constant 0 : index
    %123 = vector.load %arg6[%c0_20, %c0_21, %c0_22] : memref<8x4x64xf32, #tpu.memory_space<vmem>>, vector<1x4x64xf32>
    %124 = vector.shape_cast %123 : vector<1x4x64xf32> to vector<4x64xf32>
    %125 = arith.truncf %121 : vector<16x64xf32> to vector<16x64xbf16>
    %cst_23 = arith.constant dense<0.000000e+00> : vector<32x64xf32>
    %126 = tpu.matmul %32, %125, %cst_23 {dimension_numbers = #tpu.dot_dimension_numbers<[1], [0], [0], [1], [0, 0, 1, 1], [], []>} : vector<32x16xbf16>, vector<16x64xbf16>, vector<32x64xf32> -> vector<32x64xf32>
    %127 = arith.addf %126, %26 : vector<32x64xf32>
    %cst_24 = arith.constant 0.000000e+00 : f32
    %128 = vector.broadcast %cst_24 : f32 to vector<32x64xf32>
    %129 = arith.maximumf %127, %128 : vector<32x64xf32>
    %130 = arith.truncf %129 : vector<32x64xf32> to vector<32x64xbf16>
    %cst_25 = arith.constant dense<0.000000e+00> : vector<16x64xf32>
    %131 = tpu.matmul %38, %130, %cst_25 {dimension_numbers = #tpu.dot_dimension_numbers<[1], [0], [0], [1], [0, 0, 1, 1], [], []>} : vector<16x32xbf16>, vector<32x64xbf16>, vector<16x64xf32> -> vector<16x64xf32>
    %132 = arith.addf %121, %131 : vector<16x64xf32>
    %133 = arith.truncf %132 : vector<16x64xf32> to vector<16x64xbf16>
    %c0_26 = arith.constant 0 : index
    %c0_27 = arith.constant 0 : index
    %c0_28 = arith.constant 0 : index
    %134 = vector.load %arg5[%c0_26, %c0_27, %c0_28] : memref<16x64x64xbf16, #tpu.memory_space<vmem>>, vector<1x64x64xbf16>
    %135 = vector.shape_cast %134 : vector<1x64x64xbf16> to vector<64x64xbf16>
    %cst_29 = arith.constant dense<0.000000e+00> : vector<16x64xf32>
    %136 = tpu.matmul %133, %135, %cst_29 {dimension_numbers = #tpu.dot_dimension_numbers<[1], [0], [0], [1], [0, 0, 1, 1], [], []>} : vector<16x64xbf16>, vector<64x64xbf16>, vector<16x64xf32> -> vector<16x64xf32>
    %137 = vector.extract_strided_slice %124 {offsets = [0, 0], sizes = [1, 64], strides = [1, 1]} : vector<4x64xf32> to vector<1x64xf32>
    %138 = vector.broadcast %137 : vector<1x64xf32> to vector<16x64xf32>
    %139 = arith.addf %136, %138 : vector<16x64xf32>
    %cst_30 = arith.constant 0.000000e+00 : f32
    %140 = vector.broadcast %cst_30 : f32 to vector<16x64xf32>
    %141 = arith.maximumf %139, %140 : vector<16x64xf32>
    %142 = arith.truncf %141 : vector<16x64xf32> to vector<16x64xbf16>
    %c1 = arith.constant 1 : index
    %c0_31 = arith.constant 0 : index
    %c0_32 = arith.constant 0 : index
    %143 = vector.load %arg5[%c1, %c0_31, %c0_32] : memref<16x64x64xbf16, #tpu.memory_space<vmem>>, vector<1x64x64xbf16>
    %144 = vector.shape_cast %143 : vector<1x64x64xbf16> to vector<64x64xbf16>
    %cst_33 = arith.constant dense<0.000000e+00> : vector<16x64xf32>
    %145 = tpu.matmul %142, %144, %cst_33 {dimension_numbers = #tpu.dot_dimension_numbers<[1], [0], [0], [1], [0, 0, 1, 1], [], []>} : vector<16x64xbf16>, vector<64x64xbf16>, vector<16x64xf32> -> vector<16x64xf32>
    %146 = vector.extract_strided_slice %124 {offsets = [1, 0], sizes = [1, 64], strides = [1, 1]} : vector<4x64xf32> to vector<1x64xf32>
    %147 = vector.broadcast %146 : vector<1x64xf32> to vector<16x64xf32>
    %148 = arith.addf %145, %147 : vector<16x64xf32>
    %149 = vector.extract_strided_slice %124 {offsets = [2, 0], sizes = [1, 64], strides = [1, 1]} : vector<4x64xf32> to vector<1x64xf32>
    %150 = vector.extract_strided_slice %124 {offsets = [3, 0], sizes = [1, 64], strides = [1, 1]} : vector<4x64xf32> to vector<1x64xf32>
    %151 = arith.mulf %148, %148 : vector<16x64xf32>
    %152 = tpu.concatenate %148, %151 in 1 : vector<16x64xf32>, vector<16x64xf32> -> vector<16x128xf32>
    %cst_34 = arith.constant dense<0.000000e+00> : vector<128xf32>
    %153 = vector.multi_reduction <add>, %152, %cst_34 [0] : vector<16x128xf32> to vector<128xf32>
    %154 = vector.shape_cast %153 : vector<128xf32> to vector<1x128xf32>
    %cst_35 = arith.constant 1.600000e+01 : f32
    %155 = vector.broadcast %cst_35 : f32 to vector<1x128xf32>
    %156 = arith.divf %154, %155 : vector<1x128xf32>
    %157 = vector.extract_strided_slice %156 {offsets = [0, 0], sizes = [1, 64], strides = [1, 1]} : vector<1x128xf32> to vector<1x64xf32>
    %158 = vector.extract_strided_slice %156 {offsets = [0, 64], sizes = [1, 64], strides = [1, 1]} : vector<1x128xf32> to vector<1x64xf32>
    %159 = arith.mulf %157, %157 : vector<1x64xf32>
    %160 = arith.subf %158, %159 : vector<1x64xf32>
    %cst_36 = arith.constant 0.000000e+00 : f32
    %161 = vector.broadcast %cst_36 : f32 to vector<1x64xf32>
    %162 = arith.maximumf %160, %161 : vector<1x64xf32>
    %163 = vector.broadcast %157 : vector<1x64xf32> to vector<16x64xf32>
    %164 = arith.subf %148, %163 : vector<16x64xf32>
    %cst_37 = arith.constant 9.99999974E-6 : f32
    %165 = vector.broadcast %cst_37 : f32 to vector<1x64xf32>
    %166 = arith.addf %162, %165 : vector<1x64xf32>
    %167 = math.rsqrt %166 : vector<1x64xf32>
    %168 = vector.broadcast %167 : vector<1x64xf32> to vector<16x64xf32>
    %169 = arith.mulf %164, %168 : vector<16x64xf32>
    %170 = vector.broadcast %149 : vector<1x64xf32> to vector<16x64xf32>
    %171 = arith.mulf %169, %170 : vector<16x64xf32>
    %172 = vector.broadcast %150 : vector<1x64xf32> to vector<16x64xf32>
    %173 = arith.addf %171, %172 : vector<16x64xf32>
    %174 = arith.addf %121, %173 : vector<16x64xf32>
    %c1_38 = arith.constant 1 : index
    %c0_39 = arith.constant 0 : index
    %c0_40 = arith.constant 0 : index
    %175 = vector.load %arg6[%c1_38, %c0_39, %c0_40] : memref<8x4x64xf32, #tpu.memory_space<vmem>>, vector<1x4x64xf32>
    %176 = vector.shape_cast %175 : vector<1x4x64xf32> to vector<4x64xf32>
    %177 = arith.truncf %174 : vector<16x64xf32> to vector<16x64xbf16>
    %cst_41 = arith.constant dense<0.000000e+00> : vector<32x64xf32>
    %178 = tpu.matmul %32, %177, %cst_41 {dimension_numbers = #tpu.dot_dimension_numbers<[1], [0], [0], [1], [0, 0, 1, 1], [], []>} : vector<32x16xbf16>, vector<16x64xbf16>, vector<32x64xf32> -> vector<32x64xf32>
    %179 = arith.addf %178, %26 : vector<32x64xf32>
    %cst_42 = arith.constant 0.000000e+00 : f32
    %180 = vector.broadcast %cst_42 : f32 to vector<32x64xf32>
    %181 = arith.maximumf %179, %180 : vector<32x64xf32>
    %182 = arith.truncf %181 : vector<32x64xf32> to vector<32x64xbf16>
    %cst_43 = arith.constant dense<0.000000e+00> : vector<16x64xf32>
    %183 = tpu.matmul %38, %182, %cst_43 {dimension_numbers = #tpu.dot_dimension_numbers<[1], [0], [0], [1], [0, 0, 1, 1], [], []>} : vector<16x32xbf16>, vector<32x64xbf16>, vector<16x64xf32> -> vector<16x64xf32>
    %184 = arith.addf %174, %183 : vector<16x64xf32>
    %185 = arith.truncf %184 : vector<16x64xf32> to vector<16x64xbf16>
    %c2 = arith.constant 2 : index
    %c0_44 = arith.constant 0 : index
    %c0_45 = arith.constant 0 : index
    %186 = vector.load %arg5[%c2, %c0_44, %c0_45] : memref<16x64x64xbf16, #tpu.memory_space<vmem>>, vector<1x64x64xbf16>
    %187 = vector.shape_cast %186 : vector<1x64x64xbf16> to vector<64x64xbf16>
    %cst_46 = arith.constant dense<0.000000e+00> : vector<16x64xf32>
    %188 = tpu.matmul %185, %187, %cst_46 {dimension_numbers = #tpu.dot_dimension_numbers<[1], [0], [0], [1], [0, 0, 1, 1], [], []>} : vector<16x64xbf16>, vector<64x64xbf16>, vector<16x64xf32> -> vector<16x64xf32>
    %189 = vector.extract_strided_slice %176 {offsets = [0, 0], sizes = [1, 64], strides = [1, 1]} : vector<4x64xf32> to vector<1x64xf32>
    %190 = vector.broadcast %189 : vector<1x64xf32> to vector<16x64xf32>
    %191 = arith.addf %188, %190 : vector<16x64xf32>
    %cst_47 = arith.constant 0.000000e+00 : f32
    %192 = vector.broadcast %cst_47 : f32 to vector<16x64xf32>
    %193 = arith.maximumf %191, %192 : vector<16x64xf32>
    %194 = arith.truncf %193 : vector<16x64xf32> to vector<16x64xbf16>
    %c3 = arith.constant 3 : index
    %c0_48 = arith.constant 0 : index
    %c0_49 = arith.constant 0 : index
    %195 = vector.load %arg5[%c3, %c0_48, %c0_49] : memref<16x64x64xbf16, #tpu.memory_space<vmem>>, vector<1x64x64xbf16>
    %196 = vector.shape_cast %195 : vector<1x64x64xbf16> to vector<64x64xbf16>
    %cst_50 = arith.constant dense<0.000000e+00> : vector<16x64xf32>
    %197 = tpu.matmul %194, %196, %cst_50 {dimension_numbers = #tpu.dot_dimension_numbers<[1], [0], [0], [1], [0, 0, 1, 1], [], []>} : vector<16x64xbf16>, vector<64x64xbf16>, vector<16x64xf32> -> vector<16x64xf32>
    %198 = vector.extract_strided_slice %176 {offsets = [1, 0], sizes = [1, 64], strides = [1, 1]} : vector<4x64xf32> to vector<1x64xf32>
    %199 = vector.broadcast %198 : vector<1x64xf32> to vector<16x64xf32>
    %200 = arith.addf %197, %199 : vector<16x64xf32>
    %201 = vector.extract_strided_slice %176 {offsets = [2, 0], sizes = [1, 64], strides = [1, 1]} : vector<4x64xf32> to vector<1x64xf32>
    %202 = vector.extract_strided_slice %176 {offsets = [3, 0], sizes = [1, 64], strides = [1, 1]} : vector<4x64xf32> to vector<1x64xf32>
    %203 = arith.mulf %200, %200 : vector<16x64xf32>
    %204 = tpu.concatenate %200, %203 in 1 : vector<16x64xf32>, vector<16x64xf32> -> vector<16x128xf32>
    %cst_51 = arith.constant dense<0.000000e+00> : vector<128xf32>
    %205 = vector.multi_reduction <add>, %204, %cst_51 [0] : vector<16x128xf32> to vector<128xf32>
    %206 = vector.shape_cast %205 : vector<128xf32> to vector<1x128xf32>
    %cst_52 = arith.constant 1.600000e+01 : f32
    %207 = vector.broadcast %cst_52 : f32 to vector<1x128xf32>
    %208 = arith.divf %206, %207 : vector<1x128xf32>
    %209 = vector.extract_strided_slice %208 {offsets = [0, 0], sizes = [1, 64], strides = [1, 1]} : vector<1x128xf32> to vector<1x64xf32>
    %210 = vector.extract_strided_slice %208 {offsets = [0, 64], sizes = [1, 64], strides = [1, 1]} : vector<1x128xf32> to vector<1x64xf32>
    %211 = arith.mulf %209, %209 : vector<1x64xf32>
    %212 = arith.subf %210, %211 : vector<1x64xf32>
    %cst_53 = arith.constant 0.000000e+00 : f32
    %213 = vector.broadcast %cst_53 : f32 to vector<1x64xf32>
    %214 = arith.maximumf %212, %213 : vector<1x64xf32>
    %215 = vector.broadcast %209 : vector<1x64xf32> to vector<16x64xf32>
    %216 = arith.subf %200, %215 : vector<16x64xf32>
    %cst_54 = arith.constant 9.99999974E-6 : f32
    %217 = vector.broadcast %cst_54 : f32 to vector<1x64xf32>
    %218 = arith.addf %214, %217 : vector<1x64xf32>
    %219 = math.rsqrt %218 : vector<1x64xf32>
    %220 = vector.broadcast %219 : vector<1x64xf32> to vector<16x64xf32>
    %221 = arith.mulf %216, %220 : vector<16x64xf32>
    %222 = vector.broadcast %201 : vector<1x64xf32> to vector<16x64xf32>
    %223 = arith.mulf %221, %222 : vector<16x64xf32>
    %224 = vector.broadcast %202 : vector<1x64xf32> to vector<16x64xf32>
    %225 = arith.addf %223, %224 : vector<16x64xf32>
    %226 = arith.addf %174, %225 : vector<16x64xf32>
    %c2_55 = arith.constant 2 : index
    %c0_56 = arith.constant 0 : index
    %c0_57 = arith.constant 0 : index
    %227 = vector.load %arg6[%c2_55, %c0_56, %c0_57] : memref<8x4x64xf32, #tpu.memory_space<vmem>>, vector<1x4x64xf32>
    %228 = vector.shape_cast %227 : vector<1x4x64xf32> to vector<4x64xf32>
    %229 = arith.truncf %226 : vector<16x64xf32> to vector<16x64xbf16>
    %cst_58 = arith.constant dense<0.000000e+00> : vector<32x64xf32>
    %230 = tpu.matmul %32, %229, %cst_58 {dimension_numbers = #tpu.dot_dimension_numbers<[1], [0], [0], [1], [0, 0, 1, 1], [], []>} : vector<32x16xbf16>, vector<16x64xbf16>, vector<32x64xf32> -> vector<32x64xf32>
    %231 = arith.addf %230, %26 : vector<32x64xf32>
    %cst_59 = arith.constant 0.000000e+00 : f32
    %232 = vector.broadcast %cst_59 : f32 to vector<32x64xf32>
    %233 = arith.maximumf %231, %232 : vector<32x64xf32>
    %234 = arith.truncf %233 : vector<32x64xf32> to vector<32x64xbf16>
    %cst_60 = arith.constant dense<0.000000e+00> : vector<16x64xf32>
    %235 = tpu.matmul %38, %234, %cst_60 {dimension_numbers = #tpu.dot_dimension_numbers<[1], [0], [0], [1], [0, 0, 1, 1], [], []>} : vector<16x32xbf16>, vector<32x64xbf16>, vector<16x64xf32> -> vector<16x64xf32>
    %236 = arith.addf %226, %235 : vector<16x64xf32>
    %237 = arith.truncf %236 : vector<16x64xf32> to vector<16x64xbf16>
    %c4 = arith.constant 4 : index
    %c0_61 = arith.constant 0 : index
    %c0_62 = arith.constant 0 : index
    %238 = vector.load %arg5[%c4, %c0_61, %c0_62] : memref<16x64x64xbf16, #tpu.memory_space<vmem>>, vector<1x64x64xbf16>
    %239 = vector.shape_cast %238 : vector<1x64x64xbf16> to vector<64x64xbf16>
    %cst_63 = arith.constant dense<0.000000e+00> : vector<16x64xf32>
    %240 = tpu.matmul %237, %239, %cst_63 {dimension_numbers = #tpu.dot_dimension_numbers<[1], [0], [0], [1], [0, 0, 1, 1], [], []>} : vector<16x64xbf16>, vector<64x64xbf16>, vector<16x64xf32> -> vector<16x64xf32>
    %241 = vector.extract_strided_slice %228 {offsets = [0, 0], sizes = [1, 64], strides = [1, 1]} : vector<4x64xf32> to vector<1x64xf32>
    %242 = vector.broadcast %241 : vector<1x64xf32> to vector<16x64xf32>
    %243 = arith.addf %240, %242 : vector<16x64xf32>
    %cst_64 = arith.constant 0.000000e+00 : f32
    %244 = vector.broadcast %cst_64 : f32 to vector<16x64xf32>
    %245 = arith.maximumf %243, %244 : vector<16x64xf32>
    %246 = arith.truncf %245 : vector<16x64xf32> to vector<16x64xbf16>
    %c5 = arith.constant 5 : index
    %c0_65 = arith.constant 0 : index
    %c0_66 = arith.constant 0 : index
    %247 = vector.load %arg5[%c5, %c0_65, %c0_66] : memref<16x64x64xbf16, #tpu.memory_space<vmem>>, vector<1x64x64xbf16>
    %248 = vector.shape_cast %247 : vector<1x64x64xbf16> to vector<64x64xbf16>
    %cst_67 = arith.constant dense<0.000000e+00> : vector<16x64xf32>
    %249 = tpu.matmul %246, %248, %cst_67 {dimension_numbers = #tpu.dot_dimension_numbers<[1], [0], [0], [1], [0, 0, 1, 1], [], []>} : vector<16x64xbf16>, vector<64x64xbf16>, vector<16x64xf32> -> vector<16x64xf32>
    %250 = vector.extract_strided_slice %228 {offsets = [1, 0], sizes = [1, 64], strides = [1, 1]} : vector<4x64xf32> to vector<1x64xf32>
    %251 = vector.broadcast %250 : vector<1x64xf32> to vector<16x64xf32>
    %252 = arith.addf %249, %251 : vector<16x64xf32>
    %253 = vector.extract_strided_slice %228 {offsets = [2, 0], sizes = [1, 64], strides = [1, 1]} : vector<4x64xf32> to vector<1x64xf32>
    %254 = vector.extract_strided_slice %228 {offsets = [3, 0], sizes = [1, 64], strides = [1, 1]} : vector<4x64xf32> to vector<1x64xf32>
    %255 = arith.mulf %252, %252 : vector<16x64xf32>
    %256 = tpu.concatenate %252, %255 in 1 : vector<16x64xf32>, vector<16x64xf32> -> vector<16x128xf32>
    %cst_68 = arith.constant dense<0.000000e+00> : vector<128xf32>
    %257 = vector.multi_reduction <add>, %256, %cst_68 [0] : vector<16x128xf32> to vector<128xf32>
    %258 = vector.shape_cast %257 : vector<128xf32> to vector<1x128xf32>
    %cst_69 = arith.constant 1.600000e+01 : f32
    %259 = vector.broadcast %cst_69 : f32 to vector<1x128xf32>
    %260 = arith.divf %258, %259 : vector<1x128xf32>
    %261 = vector.extract_strided_slice %260 {offsets = [0, 0], sizes = [1, 64], strides = [1, 1]} : vector<1x128xf32> to vector<1x64xf32>
    %262 = vector.extract_strided_slice %260 {offsets = [0, 64], sizes = [1, 64], strides = [1, 1]} : vector<1x128xf32> to vector<1x64xf32>
    %263 = arith.mulf %261, %261 : vector<1x64xf32>
    %264 = arith.subf %262, %263 : vector<1x64xf32>
    %cst_70 = arith.constant 0.000000e+00 : f32
    %265 = vector.broadcast %cst_70 : f32 to vector<1x64xf32>
    %266 = arith.maximumf %264, %265 : vector<1x64xf32>
    %267 = vector.broadcast %261 : vector<1x64xf32> to vector<16x64xf32>
    %268 = arith.subf %252, %267 : vector<16x64xf32>
    %cst_71 = arith.constant 9.99999974E-6 : f32
    %269 = vector.broadcast %cst_71 : f32 to vector<1x64xf32>
    %270 = arith.addf %266, %269 : vector<1x64xf32>
    %271 = math.rsqrt %270 : vector<1x64xf32>
    %272 = vector.broadcast %271 : vector<1x64xf32> to vector<16x64xf32>
    %273 = arith.mulf %268, %272 : vector<16x64xf32>
    %274 = vector.broadcast %253 : vector<1x64xf32> to vector<16x64xf32>
    %275 = arith.mulf %273, %274 : vector<16x64xf32>
    %276 = vector.broadcast %254 : vector<1x64xf32> to vector<16x64xf32>
    %277 = arith.addf %275, %276 : vector<16x64xf32>
    %278 = arith.addf %226, %277 : vector<16x64xf32>
    %c3_72 = arith.constant 3 : index
    %c0_73 = arith.constant 0 : index
    %c0_74 = arith.constant 0 : index
    %279 = vector.load %arg6[%c3_72, %c0_73, %c0_74] : memref<8x4x64xf32, #tpu.memory_space<vmem>>, vector<1x4x64xf32>
    %280 = vector.shape_cast %279 : vector<1x4x64xf32> to vector<4x64xf32>
    %281 = arith.truncf %278 : vector<16x64xf32> to vector<16x64xbf16>
    %cst_75 = arith.constant dense<0.000000e+00> : vector<32x64xf32>
    %282 = tpu.matmul %32, %281, %cst_75 {dimension_numbers = #tpu.dot_dimension_numbers<[1], [0], [0], [1], [0, 0, 1, 1], [], []>} : vector<32x16xbf16>, vector<16x64xbf16>, vector<32x64xf32> -> vector<32x64xf32>
    %283 = arith.addf %282, %26 : vector<32x64xf32>
    %cst_76 = arith.constant 0.000000e+00 : f32
    %284 = vector.broadcast %cst_76 : f32 to vector<32x64xf32>
    %285 = arith.maximumf %283, %284 : vector<32x64xf32>
    %286 = arith.truncf %285 : vector<32x64xf32> to vector<32x64xbf16>
    %cst_77 = arith.constant dense<0.000000e+00> : vector<16x64xf32>
    %287 = tpu.matmul %38, %286, %cst_77 {dimension_numbers = #tpu.dot_dimension_numbers<[1], [0], [0], [1], [0, 0, 1, 1], [], []>} : vector<16x32xbf16>, vector<32x64xbf16>, vector<16x64xf32> -> vector<16x64xf32>
    %288 = arith.addf %278, %287 : vector<16x64xf32>
    %289 = arith.truncf %288 : vector<16x64xf32> to vector<16x64xbf16>
    %c6 = arith.constant 6 : index
    %c0_78 = arith.constant 0 : index
    %c0_79 = arith.constant 0 : index
    %290 = vector.load %arg5[%c6, %c0_78, %c0_79] : memref<16x64x64xbf16, #tpu.memory_space<vmem>>, vector<1x64x64xbf16>
    %291 = vector.shape_cast %290 : vector<1x64x64xbf16> to vector<64x64xbf16>
    %cst_80 = arith.constant dense<0.000000e+00> : vector<16x64xf32>
    %292 = tpu.matmul %289, %291, %cst_80 {dimension_numbers = #tpu.dot_dimension_numbers<[1], [0], [0], [1], [0, 0, 1, 1], [], []>} : vector<16x64xbf16>, vector<64x64xbf16>, vector<16x64xf32> -> vector<16x64xf32>
    %293 = vector.extract_strided_slice %280 {offsets = [0, 0], sizes = [1, 64], strides = [1, 1]} : vector<4x64xf32> to vector<1x64xf32>
    %294 = vector.broadcast %293 : vector<1x64xf32> to vector<16x64xf32>
    %295 = arith.addf %292, %294 : vector<16x64xf32>
    %cst_81 = arith.constant 0.000000e+00 : f32
    %296 = vector.broadcast %cst_81 : f32 to vector<16x64xf32>
    %297 = arith.maximumf %295, %296 : vector<16x64xf32>
    %298 = arith.truncf %297 : vector<16x64xf32> to vector<16x64xbf16>
    %c7 = arith.constant 7 : index
    %c0_82 = arith.constant 0 : index
    %c0_83 = arith.constant 0 : index
    %299 = vector.load %arg5[%c7, %c0_82, %c0_83] : memref<16x64x64xbf16, #tpu.memory_space<vmem>>, vector<1x64x64xbf16>
    %300 = vector.shape_cast %299 : vector<1x64x64xbf16> to vector<64x64xbf16>
    %cst_84 = arith.constant dense<0.000000e+00> : vector<16x64xf32>
    %301 = tpu.matmul %298, %300, %cst_84 {dimension_numbers = #tpu.dot_dimension_numbers<[1], [0], [0], [1], [0, 0, 1, 1], [], []>} : vector<16x64xbf16>, vector<64x64xbf16>, vector<16x64xf32> -> vector<16x64xf32>
    %302 = vector.extract_strided_slice %280 {offsets = [1, 0], sizes = [1, 64], strides = [1, 1]} : vector<4x64xf32> to vector<1x64xf32>
    %303 = vector.broadcast %302 : vector<1x64xf32> to vector<16x64xf32>
    %304 = arith.addf %301, %303 : vector<16x64xf32>
    %305 = vector.extract_strided_slice %280 {offsets = [2, 0], sizes = [1, 64], strides = [1, 1]} : vector<4x64xf32> to vector<1x64xf32>
    %306 = vector.extract_strided_slice %280 {offsets = [3, 0], sizes = [1, 64], strides = [1, 1]} : vector<4x64xf32> to vector<1x64xf32>
    %307 = arith.mulf %304, %304 : vector<16x64xf32>
    %308 = tpu.concatenate %304, %307 in 1 : vector<16x64xf32>, vector<16x64xf32> -> vector<16x128xf32>
    %cst_85 = arith.constant dense<0.000000e+00> : vector<128xf32>
    %309 = vector.multi_reduction <add>, %308, %cst_85 [0] : vector<16x128xf32> to vector<128xf32>
    %310 = vector.shape_cast %309 : vector<128xf32> to vector<1x128xf32>
    %cst_86 = arith.constant 1.600000e+01 : f32
    %311 = vector.broadcast %cst_86 : f32 to vector<1x128xf32>
    %312 = arith.divf %310, %311 : vector<1x128xf32>
    %313 = vector.extract_strided_slice %312 {offsets = [0, 0], sizes = [1, 64], strides = [1, 1]} : vector<1x128xf32> to vector<1x64xf32>
    %314 = vector.extract_strided_slice %312 {offsets = [0, 64], sizes = [1, 64], strides = [1, 1]} : vector<1x128xf32> to vector<1x64xf32>
    %315 = arith.mulf %313, %313 : vector<1x64xf32>
    %316 = arith.subf %314, %315 : vector<1x64xf32>
    %cst_87 = arith.constant 0.000000e+00 : f32
    %317 = vector.broadcast %cst_87 : f32 to vector<1x64xf32>
    %318 = arith.maximumf %316, %317 : vector<1x64xf32>
    %319 = vector.broadcast %313 : vector<1x64xf32> to vector<16x64xf32>
    %320 = arith.subf %304, %319 : vector<16x64xf32>
    %cst_88 = arith.constant 9.99999974E-6 : f32
    %321 = vector.broadcast %cst_88 : f32 to vector<1x64xf32>
    %322 = arith.addf %318, %321 : vector<1x64xf32>
    %323 = math.rsqrt %322 : vector<1x64xf32>
    %324 = vector.broadcast %323 : vector<1x64xf32> to vector<16x64xf32>
    %325 = arith.mulf %320, %324 : vector<16x64xf32>
    %326 = vector.broadcast %305 : vector<1x64xf32> to vector<16x64xf32>
    %327 = arith.mulf %325, %326 : vector<16x64xf32>
    %328 = vector.broadcast %306 : vector<1x64xf32> to vector<16x64xf32>
    %329 = arith.addf %327, %328 : vector<16x64xf32>
    %330 = arith.addf %278, %329 : vector<16x64xf32>
    %cst_89 = arith.constant dense<0.000000e+00> : vector<16x16xf32>
    %331 = tpu.matmul %50, %44, %cst_89 {dimension_numbers = #tpu.dot_dimension_numbers<[1], [0], [0], [1], [0, 0, 1, 1], [], []>} : vector<16x32xbf16>, vector<32x16xbf16>, vector<16x16xf32> -> vector<16x16xf32>
    %332 = arith.truncf %331 : vector<16x16xf32> to vector<16x16xbf16>
    %c4_90 = arith.constant 4 : index
    %c0_91 = arith.constant 0 : index
    %c0_92 = arith.constant 0 : index
    %333 = vector.load %arg6[%c4_90, %c0_91, %c0_92] : memref<8x4x64xf32, #tpu.memory_space<vmem>>, vector<1x4x64xf32>
    %334 = vector.shape_cast %333 : vector<1x4x64xf32> to vector<4x64xf32>
    %335 = arith.truncf %122 : vector<16x64xf32> to vector<16x64xbf16>
    %cst_93 = arith.constant dense<0.000000e+00> : vector<16x64xf32>
    %336 = tpu.matmul %332, %335, %cst_93 {dimension_numbers = #tpu.dot_dimension_numbers<[1], [0], [0], [1], [0, 0, 1, 1], [], []>} : vector<16x16xbf16>, vector<16x64xbf16>, vector<16x64xf32> -> vector<16x64xf32>
    %337 = arith.addf %122, %336 : vector<16x64xf32>
    %338 = arith.truncf %337 : vector<16x64xf32> to vector<16x64xbf16>
    %c8 = arith.constant 8 : index
    %c0_94 = arith.constant 0 : index
    %c0_95 = arith.constant 0 : index
    %339 = vector.load %arg5[%c8, %c0_94, %c0_95] : memref<16x64x64xbf16, #tpu.memory_space<vmem>>, vector<1x64x64xbf16>
    %340 = vector.shape_cast %339 : vector<1x64x64xbf16> to vector<64x64xbf16>
    %cst_96 = arith.constant dense<0.000000e+00> : vector<16x64xf32>
    %341 = tpu.matmul %338, %340, %cst_96 {dimension_numbers = #tpu.dot_dimension_numbers<[1], [0], [0], [1], [0, 0, 1, 1], [], []>} : vector<16x64xbf16>, vector<64x64xbf16>, vector<16x64xf32> -> vector<16x64xf32>
    %342 = vector.extract_strided_slice %334 {offsets = [0, 0], sizes = [1, 64], strides = [1, 1]} : vector<4x64xf32> to vector<1x64xf32>
    %343 = vector.broadcast %342 : vector<1x64xf32> to vector<16x64xf32>
    %344 = arith.addf %341, %343 : vector<16x64xf32>
    %cst_97 = arith.constant 0.000000e+00 : f32
    %345 = vector.broadcast %cst_97 : f32 to vector<16x64xf32>
    %346 = arith.maximumf %344, %345 : vector<16x64xf32>
    %347 = arith.truncf %346 : vector<16x64xf32> to vector<16x64xbf16>
    %c9 = arith.constant 9 : index
    %c0_98 = arith.constant 0 : index
    %c0_99 = arith.constant 0 : index
    %348 = vector.load %arg5[%c9, %c0_98, %c0_99] : memref<16x64x64xbf16, #tpu.memory_space<vmem>>, vector<1x64x64xbf16>
    %349 = vector.shape_cast %348 : vector<1x64x64xbf16> to vector<64x64xbf16>
    %cst_100 = arith.constant dense<0.000000e+00> : vector<16x64xf32>
    %350 = tpu.matmul %347, %349, %cst_100 {dimension_numbers = #tpu.dot_dimension_numbers<[1], [0], [0], [1], [0, 0, 1, 1], [], []>} : vector<16x64xbf16>, vector<64x64xbf16>, vector<16x64xf32> -> vector<16x64xf32>
    %351 = vector.extract_strided_slice %334 {offsets = [1, 0], sizes = [1, 64], strides = [1, 1]} : vector<4x64xf32> to vector<1x64xf32>
    %352 = vector.broadcast %351 : vector<1x64xf32> to vector<16x64xf32>
    %353 = arith.addf %350, %352 : vector<16x64xf32>
    %354 = vector.extract_strided_slice %334 {offsets = [2, 0], sizes = [1, 64], strides = [1, 1]} : vector<4x64xf32> to vector<1x64xf32>
    %355 = vector.extract_strided_slice %334 {offsets = [3, 0], sizes = [1, 64], strides = [1, 1]} : vector<4x64xf32> to vector<1x64xf32>
    %356 = arith.mulf %353, %353 : vector<16x64xf32>
    %357 = tpu.concatenate %353, %356 in 1 : vector<16x64xf32>, vector<16x64xf32> -> vector<16x128xf32>
    %cst_101 = arith.constant dense<0.000000e+00> : vector<128xf32>
    %358 = vector.multi_reduction <add>, %357, %cst_101 [0] : vector<16x128xf32> to vector<128xf32>
    %359 = vector.shape_cast %358 : vector<128xf32> to vector<1x128xf32>
    %cst_102 = arith.constant 1.600000e+01 : f32
    %360 = vector.broadcast %cst_102 : f32 to vector<1x128xf32>
    %361 = arith.divf %359, %360 : vector<1x128xf32>
    %362 = vector.extract_strided_slice %361 {offsets = [0, 0], sizes = [1, 64], strides = [1, 1]} : vector<1x128xf32> to vector<1x64xf32>
    %363 = vector.extract_strided_slice %361 {offsets = [0, 64], sizes = [1, 64], strides = [1, 1]} : vector<1x128xf32> to vector<1x64xf32>
    %364 = arith.mulf %362, %362 : vector<1x64xf32>
    %365 = arith.subf %363, %364 : vector<1x64xf32>
    %cst_103 = arith.constant 0.000000e+00 : f32
    %366 = vector.broadcast %cst_103 : f32 to vector<1x64xf32>
    %367 = arith.maximumf %365, %366 : vector<1x64xf32>
    %368 = vector.broadcast %362 : vector<1x64xf32> to vector<16x64xf32>
    %369 = arith.subf %353, %368 : vector<16x64xf32>
    %cst_104 = arith.constant 9.99999974E-6 : f32
    %370 = vector.broadcast %cst_104 : f32 to vector<1x64xf32>
    %371 = arith.addf %367, %370 : vector<1x64xf32>
    %372 = math.rsqrt %371 : vector<1x64xf32>
    %373 = vector.broadcast %372 : vector<1x64xf32> to vector<16x64xf32>
    %374 = arith.mulf %369, %373 : vector<16x64xf32>
    %375 = vector.broadcast %354 : vector<1x64xf32> to vector<16x64xf32>
    %376 = arith.mulf %374, %375 : vector<16x64xf32>
    %377 = vector.broadcast %355 : vector<1x64xf32> to vector<16x64xf32>
    %378 = arith.addf %376, %377 : vector<16x64xf32>
    %379 = arith.addf %122, %378 : vector<16x64xf32>
    %c5_105 = arith.constant 5 : index
    %c0_106 = arith.constant 0 : index
    %c0_107 = arith.constant 0 : index
    %380 = vector.load %arg6[%c5_105, %c0_106, %c0_107] : memref<8x4x64xf32, #tpu.memory_space<vmem>>, vector<1x4x64xf32>
    %381 = vector.shape_cast %380 : vector<1x4x64xf32> to vector<4x64xf32>
    %382 = arith.truncf %379 : vector<16x64xf32> to vector<16x64xbf16>
    %cst_108 = arith.constant dense<0.000000e+00> : vector<16x64xf32>
    %383 = tpu.matmul %332, %382, %cst_108 {dimension_numbers = #tpu.dot_dimension_numbers<[1], [0], [0], [1], [0, 0, 1, 1], [], []>} : vector<16x16xbf16>, vector<16x64xbf16>, vector<16x64xf32> -> vector<16x64xf32>
    %384 = arith.addf %379, %383 : vector<16x64xf32>
    %385 = arith.truncf %384 : vector<16x64xf32> to vector<16x64xbf16>
    %c10 = arith.constant 10 : index
    %c0_109 = arith.constant 0 : index
    %c0_110 = arith.constant 0 : index
    %386 = vector.load %arg5[%c10, %c0_109, %c0_110] : memref<16x64x64xbf16, #tpu.memory_space<vmem>>, vector<1x64x64xbf16>
    %387 = vector.shape_cast %386 : vector<1x64x64xbf16> to vector<64x64xbf16>
    %cst_111 = arith.constant dense<0.000000e+00> : vector<16x64xf32>
    %388 = tpu.matmul %385, %387, %cst_111 {dimension_numbers = #tpu.dot_dimension_numbers<[1], [0], [0], [1], [0, 0, 1, 1], [], []>} : vector<16x64xbf16>, vector<64x64xbf16>, vector<16x64xf32> -> vector<16x64xf32>
    %389 = vector.extract_strided_slice %381 {offsets = [0, 0], sizes = [1, 64], strides = [1, 1]} : vector<4x64xf32> to vector<1x64xf32>
    %390 = vector.broadcast %389 : vector<1x64xf32> to vector<16x64xf32>
    %391 = arith.addf %388, %390 : vector<16x64xf32>
    %cst_112 = arith.constant 0.000000e+00 : f32
    %392 = vector.broadcast %cst_112 : f32 to vector<16x64xf32>
    %393 = arith.maximumf %391, %392 : vector<16x64xf32>
    %394 = arith.truncf %393 : vector<16x64xf32> to vector<16x64xbf16>
    %c11 = arith.constant 11 : index
    %c0_113 = arith.constant 0 : index
    %c0_114 = arith.constant 0 : index
    %395 = vector.load %arg5[%c11, %c0_113, %c0_114] : memref<16x64x64xbf16, #tpu.memory_space<vmem>>, vector<1x64x64xbf16>
    %396 = vector.shape_cast %395 : vector<1x64x64xbf16> to vector<64x64xbf16>
    %cst_115 = arith.constant dense<0.000000e+00> : vector<16x64xf32>
    %397 = tpu.matmul %394, %396, %cst_115 {dimension_numbers = #tpu.dot_dimension_numbers<[1], [0], [0], [1], [0, 0, 1, 1], [], []>} : vector<16x64xbf16>, vector<64x64xbf16>, vector<16x64xf32> -> vector<16x64xf32>
    %398 = vector.extract_strided_slice %381 {offsets = [1, 0], sizes = [1, 64], strides = [1, 1]} : vector<4x64xf32> to vector<1x64xf32>
    %399 = vector.broadcast %398 : vector<1x64xf32> to vector<16x64xf32>
    %400 = arith.addf %397, %399 : vector<16x64xf32>
    %401 = vector.extract_strided_slice %381 {offsets = [2, 0], sizes = [1, 64], strides = [1, 1]} : vector<4x64xf32> to vector<1x64xf32>
    %402 = vector.extract_strided_slice %381 {offsets = [3, 0], sizes = [1, 64], strides = [1, 1]} : vector<4x64xf32> to vector<1x64xf32>
    %403 = arith.mulf %400, %400 : vector<16x64xf32>
    %404 = tpu.concatenate %400, %403 in 1 : vector<16x64xf32>, vector<16x64xf32> -> vector<16x128xf32>
    %cst_116 = arith.constant dense<0.000000e+00> : vector<128xf32>
    %405 = vector.multi_reduction <add>, %404, %cst_116 [0] : vector<16x128xf32> to vector<128xf32>
    %406 = vector.shape_cast %405 : vector<128xf32> to vector<1x128xf32>
    %cst_117 = arith.constant 1.600000e+01 : f32
    %407 = vector.broadcast %cst_117 : f32 to vector<1x128xf32>
    %408 = arith.divf %406, %407 : vector<1x128xf32>
    %409 = vector.extract_strided_slice %408 {offsets = [0, 0], sizes = [1, 64], strides = [1, 1]} : vector<1x128xf32> to vector<1x64xf32>
    %410 = vector.extract_strided_slice %408 {offsets = [0, 64], sizes = [1, 64], strides = [1, 1]} : vector<1x128xf32> to vector<1x64xf32>
    %411 = arith.mulf %409, %409 : vector<1x64xf32>
    %412 = arith.subf %410, %411 : vector<1x64xf32>
    %cst_118 = arith.constant 0.000000e+00 : f32
    %413 = vector.broadcast %cst_118 : f32 to vector<1x64xf32>
    %414 = arith.maximumf %412, %413 : vector<1x64xf32>
    %415 = vector.broadcast %409 : vector<1x64xf32> to vector<16x64xf32>
    %416 = arith.subf %400, %415 : vector<16x64xf32>
    %cst_119 = arith.constant 9.99999974E-6 : f32
    %417 = vector.broadcast %cst_119 : f32 to vector<1x64xf32>
    %418 = arith.addf %414, %417 : vector<1x64xf32>
    %419 = math.rsqrt %418 : vector<1x64xf32>
    %420 = vector.broadcast %419 : vector<1x64xf32> to vector<16x64xf32>
    %421 = arith.mulf %416, %420 : vector<16x64xf32>
    %422 = vector.broadcast %401 : vector<1x64xf32> to vector<16x64xf32>
    %423 = arith.mulf %421, %422 : vector<16x64xf32>
    %424 = vector.broadcast %402 : vector<1x64xf32> to vector<16x64xf32>
    %425 = arith.addf %423, %424 : vector<16x64xf32>
    %426 = arith.addf %379, %425 : vector<16x64xf32>
    %c6_120 = arith.constant 6 : index
    %c0_121 = arith.constant 0 : index
    %c0_122 = arith.constant 0 : index
    %427 = vector.load %arg6[%c6_120, %c0_121, %c0_122] : memref<8x4x64xf32, #tpu.memory_space<vmem>>, vector<1x4x64xf32>
    %428 = vector.shape_cast %427 : vector<1x4x64xf32> to vector<4x64xf32>
    %429 = arith.truncf %426 : vector<16x64xf32> to vector<16x64xbf16>
    %cst_123 = arith.constant dense<0.000000e+00> : vector<16x64xf32>
    %430 = tpu.matmul %332, %429, %cst_123 {dimension_numbers = #tpu.dot_dimension_numbers<[1], [0], [0], [1], [0, 0, 1, 1], [], []>} : vector<16x16xbf16>, vector<16x64xbf16>, vector<16x64xf32> -> vector<16x64xf32>
    %431 = arith.addf %426, %430 : vector<16x64xf32>
    %432 = arith.truncf %431 : vector<16x64xf32> to vector<16x64xbf16>
    %c12 = arith.constant 12 : index
    %c0_124 = arith.constant 0 : index
    %c0_125 = arith.constant 0 : index
    %433 = vector.load %arg5[%c12, %c0_124, %c0_125] : memref<16x64x64xbf16, #tpu.memory_space<vmem>>, vector<1x64x64xbf16>
    %434 = vector.shape_cast %433 : vector<1x64x64xbf16> to vector<64x64xbf16>
    %cst_126 = arith.constant dense<0.000000e+00> : vector<16x64xf32>
    %435 = tpu.matmul %432, %434, %cst_126 {dimension_numbers = #tpu.dot_dimension_numbers<[1], [0], [0], [1], [0, 0, 1, 1], [], []>} : vector<16x64xbf16>, vector<64x64xbf16>, vector<16x64xf32> -> vector<16x64xf32>
    %436 = vector.extract_strided_slice %428 {offsets = [0, 0], sizes = [1, 64], strides = [1, 1]} : vector<4x64xf32> to vector<1x64xf32>
    %437 = vector.broadcast %436 : vector<1x64xf32> to vector<16x64xf32>
    %438 = arith.addf %435, %437 : vector<16x64xf32>
    %cst_127 = arith.constant 0.000000e+00 : f32
    %439 = vector.broadcast %cst_127 : f32 to vector<16x64xf32>
    %440 = arith.maximumf %438, %439 : vector<16x64xf32>
    %441 = arith.truncf %440 : vector<16x64xf32> to vector<16x64xbf16>
    %c13 = arith.constant 13 : index
    %c0_128 = arith.constant 0 : index
    %c0_129 = arith.constant 0 : index
    %442 = vector.load %arg5[%c13, %c0_128, %c0_129] : memref<16x64x64xbf16, #tpu.memory_space<vmem>>, vector<1x64x64xbf16>
    %443 = vector.shape_cast %442 : vector<1x64x64xbf16> to vector<64x64xbf16>
    %cst_130 = arith.constant dense<0.000000e+00> : vector<16x64xf32>
    %444 = tpu.matmul %441, %443, %cst_130 {dimension_numbers = #tpu.dot_dimension_numbers<[1], [0], [0], [1], [0, 0, 1, 1], [], []>} : vector<16x64xbf16>, vector<64x64xbf16>, vector<16x64xf32> -> vector<16x64xf32>
    %445 = vector.extract_strided_slice %428 {offsets = [1, 0], sizes = [1, 64], strides = [1, 1]} : vector<4x64xf32> to vector<1x64xf32>
    %446 = vector.broadcast %445 : vector<1x64xf32> to vector<16x64xf32>
    %447 = arith.addf %444, %446 : vector<16x64xf32>
    %448 = vector.extract_strided_slice %428 {offsets = [2, 0], sizes = [1, 64], strides = [1, 1]} : vector<4x64xf32> to vector<1x64xf32>
    %449 = vector.extract_strided_slice %428 {offsets = [3, 0], sizes = [1, 64], strides = [1, 1]} : vector<4x64xf32> to vector<1x64xf32>
    %450 = arith.mulf %447, %447 : vector<16x64xf32>
    %451 = tpu.concatenate %447, %450 in 1 : vector<16x64xf32>, vector<16x64xf32> -> vector<16x128xf32>
    %cst_131 = arith.constant dense<0.000000e+00> : vector<128xf32>
    %452 = vector.multi_reduction <add>, %451, %cst_131 [0] : vector<16x128xf32> to vector<128xf32>
    %453 = vector.shape_cast %452 : vector<128xf32> to vector<1x128xf32>
    %cst_132 = arith.constant 1.600000e+01 : f32
    %454 = vector.broadcast %cst_132 : f32 to vector<1x128xf32>
    %455 = arith.divf %453, %454 : vector<1x128xf32>
    %456 = vector.extract_strided_slice %455 {offsets = [0, 0], sizes = [1, 64], strides = [1, 1]} : vector<1x128xf32> to vector<1x64xf32>
    %457 = vector.extract_strided_slice %455 {offsets = [0, 64], sizes = [1, 64], strides = [1, 1]} : vector<1x128xf32> to vector<1x64xf32>
    %458 = arith.mulf %456, %456 : vector<1x64xf32>
    %459 = arith.subf %457, %458 : vector<1x64xf32>
    %cst_133 = arith.constant 0.000000e+00 : f32
    %460 = vector.broadcast %cst_133 : f32 to vector<1x64xf32>
    %461 = arith.maximumf %459, %460 : vector<1x64xf32>
    %462 = vector.broadcast %456 : vector<1x64xf32> to vector<16x64xf32>
    %463 = arith.subf %447, %462 : vector<16x64xf32>
    %cst_134 = arith.constant 9.99999974E-6 : f32
    %464 = vector.broadcast %cst_134 : f32 to vector<1x64xf32>
    %465 = arith.addf %461, %464 : vector<1x64xf32>
    %466 = math.rsqrt %465 : vector<1x64xf32>
    %467 = vector.broadcast %466 : vector<1x64xf32> to vector<16x64xf32>
    %468 = arith.mulf %463, %467 : vector<16x64xf32>
    %469 = vector.broadcast %448 : vector<1x64xf32> to vector<16x64xf32>
    %470 = arith.mulf %468, %469 : vector<16x64xf32>
    %471 = vector.broadcast %449 : vector<1x64xf32> to vector<16x64xf32>
    %472 = arith.addf %470, %471 : vector<16x64xf32>
    %473 = arith.addf %426, %472 : vector<16x64xf32>
    %c7_135 = arith.constant 7 : index
    %c0_136 = arith.constant 0 : index
    %c0_137 = arith.constant 0 : index
    %474 = vector.load %arg6[%c7_135, %c0_136, %c0_137] : memref<8x4x64xf32, #tpu.memory_space<vmem>>, vector<1x4x64xf32>
    %475 = vector.shape_cast %474 : vector<1x4x64xf32> to vector<4x64xf32>
    %476 = arith.truncf %473 : vector<16x64xf32> to vector<16x64xbf16>
    %cst_138 = arith.constant dense<0.000000e+00> : vector<16x64xf32>
    %477 = tpu.matmul %332, %476, %cst_138 {dimension_numbers = #tpu.dot_dimension_numbers<[1], [0], [0], [1], [0, 0, 1, 1], [], []>} : vector<16x16xbf16>, vector<16x64xbf16>, vector<16x64xf32> -> vector<16x64xf32>
    %478 = arith.addf %473, %477 : vector<16x64xf32>
    %479 = arith.truncf %478 : vector<16x64xf32> to vector<16x64xbf16>
    %c14 = arith.constant 14 : index
    %c0_139 = arith.constant 0 : index
    %c0_140 = arith.constant 0 : index
    %480 = vector.load %arg5[%c14, %c0_139, %c0_140] : memref<16x64x64xbf16, #tpu.memory_space<vmem>>, vector<1x64x64xbf16>
    %481 = vector.shape_cast %480 : vector<1x64x64xbf16> to vector<64x64xbf16>
    %cst_141 = arith.constant dense<0.000000e+00> : vector<16x64xf32>
    %482 = tpu.matmul %479, %481, %cst_141 {dimension_numbers = #tpu.dot_dimension_numbers<[1], [0], [0], [1], [0, 0, 1, 1], [], []>} : vector<16x64xbf16>, vector<64x64xbf16>, vector<16x64xf32> -> vector<16x64xf32>
    %483 = vector.extract_strided_slice %475 {offsets = [0, 0], sizes = [1, 64], strides = [1, 1]} : vector<4x64xf32> to vector<1x64xf32>
    %484 = vector.broadcast %483 : vector<1x64xf32> to vector<16x64xf32>
    %485 = arith.addf %482, %484 : vector<16x64xf32>
    %cst_142 = arith.constant 0.000000e+00 : f32
    %486 = vector.broadcast %cst_142 : f32 to vector<16x64xf32>
    %487 = arith.maximumf %485, %486 : vector<16x64xf32>
    %488 = arith.truncf %487 : vector<16x64xf32> to vector<16x64xbf16>
    %c15 = arith.constant 15 : index
    %c0_143 = arith.constant 0 : index
    %c0_144 = arith.constant 0 : index
    %489 = vector.load %arg5[%c15, %c0_143, %c0_144] : memref<16x64x64xbf16, #tpu.memory_space<vmem>>, vector<1x64x64xbf16>
    %490 = vector.shape_cast %489 : vector<1x64x64xbf16> to vector<64x64xbf16>
    %cst_145 = arith.constant dense<0.000000e+00> : vector<16x64xf32>
    %491 = tpu.matmul %488, %490, %cst_145 {dimension_numbers = #tpu.dot_dimension_numbers<[1], [0], [0], [1], [0, 0, 1, 1], [], []>} : vector<16x64xbf16>, vector<64x64xbf16>, vector<16x64xf32> -> vector<16x64xf32>
    %492 = vector.extract_strided_slice %475 {offsets = [1, 0], sizes = [1, 64], strides = [1, 1]} : vector<4x64xf32> to vector<1x64xf32>
    %493 = vector.broadcast %492 : vector<1x64xf32> to vector<16x64xf32>
    %494 = arith.addf %491, %493 : vector<16x64xf32>
    %495 = vector.extract_strided_slice %475 {offsets = [2, 0], sizes = [1, 64], strides = [1, 1]} : vector<4x64xf32> to vector<1x64xf32>
    %496 = vector.extract_strided_slice %475 {offsets = [3, 0], sizes = [1, 64], strides = [1, 1]} : vector<4x64xf32> to vector<1x64xf32>
    %497 = arith.mulf %494, %494 : vector<16x64xf32>
    %498 = tpu.concatenate %494, %497 in 1 : vector<16x64xf32>, vector<16x64xf32> -> vector<16x128xf32>
    %cst_146 = arith.constant dense<0.000000e+00> : vector<128xf32>
    %499 = vector.multi_reduction <add>, %498, %cst_146 [0] : vector<16x128xf32> to vector<128xf32>
    %500 = vector.shape_cast %499 : vector<128xf32> to vector<1x128xf32>
    %cst_147 = arith.constant 1.600000e+01 : f32
    %501 = vector.broadcast %cst_147 : f32 to vector<1x128xf32>
    %502 = arith.divf %500, %501 : vector<1x128xf32>
    %503 = vector.extract_strided_slice %502 {offsets = [0, 0], sizes = [1, 64], strides = [1, 1]} : vector<1x128xf32> to vector<1x64xf32>
    %504 = vector.extract_strided_slice %502 {offsets = [0, 64], sizes = [1, 64], strides = [1, 1]} : vector<1x128xf32> to vector<1x64xf32>
    %505 = arith.mulf %503, %503 : vector<1x64xf32>
    %506 = arith.subf %504, %505 : vector<1x64xf32>
    %cst_148 = arith.constant 0.000000e+00 : f32
    %507 = vector.broadcast %cst_148 : f32 to vector<1x64xf32>
    %508 = arith.maximumf %506, %507 : vector<1x64xf32>
    %509 = vector.broadcast %503 : vector<1x64xf32> to vector<16x64xf32>
    %510 = arith.subf %494, %509 : vector<16x64xf32>
    %cst_149 = arith.constant 9.99999974E-6 : f32
    %511 = vector.broadcast %cst_149 : f32 to vector<1x64xf32>
    %512 = arith.addf %508, %511 : vector<1x64xf32>
    %513 = math.rsqrt %512 : vector<1x64xf32>
    %514 = vector.broadcast %513 : vector<1x64xf32> to vector<16x64xf32>
    %515 = arith.mulf %510, %514 : vector<16x64xf32>
    %516 = vector.broadcast %495 : vector<1x64xf32> to vector<16x64xf32>
    %517 = arith.mulf %515, %516 : vector<16x64xf32>
    %518 = vector.broadcast %496 : vector<1x64xf32> to vector<16x64xf32>
    %519 = arith.addf %517, %518 : vector<16x64xf32>
    %520 = arith.addf %473, %519 : vector<16x64xf32>
    %521 = arith.truncf %330 : vector<16x64xf32> to vector<16x64xbf16>
    %cst_150 = arith.constant dense<0.000000e+00> : vector<16x384xf32>
    %522 = tpu.matmul %521, %22, %cst_150 {dimension_numbers = #tpu.dot_dimension_numbers<[1], [0], [0], [1], [0, 0, 1, 1], [], []>} : vector<16x64xbf16>, vector<64x384xbf16>, vector<16x384xf32> -> vector<16x384xf32>
    %523 = vector.broadcast %15 : vector<16x1xf32> to vector<16x384xf32>
    %524 = vector.broadcast %17 : vector<1x384xf32> to vector<16x384xf32>
    %525 = arith.mulf %523, %524 : vector<16x384xf32>
    %526 = arith.addf %522, %525 : vector<16x384xf32>
    %527 = vector.extract_strided_slice %526 {offsets = [0, 0], sizes = [16, 64], strides = [1, 1]} : vector<16x384xf32> to vector<16x64xf32>
    %528 = vector.extract_strided_slice %526 {offsets = [0, 128], sizes = [16, 64], strides = [1, 1]} : vector<16x384xf32> to vector<16x64xf32>
    %529 = arith.truncf %528 : vector<16x64xf32> to vector<16x64xbf16>
    %530 = vector.extract_strided_slice %526 {offsets = [0, 256], sizes = [16, 64], strides = [1, 1]} : vector<16x384xf32> to vector<16x64xf32>
    %cst_151 = arith.constant dense<0.000000e+00> : vector<2x64xf32>
    %531 = tpu.matmul %56, %529, %cst_151 {dimension_numbers = #tpu.dot_dimension_numbers<[1], [0], [0], [1], [0, 0, 1, 1], [], []>} : vector<2x16xbf16>, vector<16x64xbf16>, vector<2x64xf32> -> vector<2x64xf32>
    %cst_152 = arith.constant dense<0.000000e+00> : vector<2x64xf32>
    %532 = tpu.matmul %62, %529, %cst_152 {dimension_numbers = #tpu.dot_dimension_numbers<[1], [0], [0], [1], [0, 0, 1, 1], [], []>} : vector<2x16xbf16>, vector<16x64xbf16>, vector<2x64xf32> -> vector<2x64xf32>
    %533 = arith.truncf %531 : vector<2x64xf32> to vector<2x64xbf16>
    %cst_153 = arith.constant dense<0.000000e+00> : vector<16x64xf32>
    %534 = tpu.matmul %68, %533, %cst_153 {dimension_numbers = #tpu.dot_dimension_numbers<[1], [0], [0], [1], [0, 0, 1, 1], [], []>} : vector<16x2xbf16>, vector<2x64xbf16>, vector<16x64xf32> -> vector<16x64xf32>
    %535 = arith.truncf %532 : vector<2x64xf32> to vector<2x64xbf16>
    %cst_154 = arith.constant dense<0.000000e+00> : vector<16x64xf32>
    %536 = tpu.matmul %68, %535, %cst_154 {dimension_numbers = #tpu.dot_dimension_numbers<[1], [0], [0], [1], [0, 0, 1, 1], [], []>} : vector<16x2xbf16>, vector<2x64xbf16>, vector<16x64xf32> -> vector<16x64xf32>
    %537 = arith.mulf %527, %534 : vector<16x64xf32>
    %538 = arith.mulf %527, %536 : vector<16x64xf32>
    %539 = tpu.concatenate %537, %538 in 0 : vector<16x64xf32>, vector<16x64xf32> -> vector<32x64xf32>
    %540 = arith.truncf %539 : vector<32x64xf32> to vector<32x64xbf16>
    %cst_155 = arith.constant dense<0.000000e+00> : vector<32x8xf32>
    %541 = tpu.matmul %540, %99, %cst_155 {dimension_numbers = #tpu.dot_dimension_numbers<[1], [0], [0], [1], [0, 0, 1, 1], [], []>} : vector<32x64xbf16>, vector<64x8xbf16>, vector<32x8xf32> -> vector<32x8xf32>
    %cst_156 = arith.constant dense<0xFF800000> : vector<8xf32>
    %542 = vector.multi_reduction <maximumf>, %541, %cst_156 [0] : vector<32x8xf32> to vector<8xf32>
    %543 = vector.shape_cast %542 : vector<8xf32> to vector<1x8xf32>
    %544 = vector.broadcast %543 : vector<1x8xf32> to vector<32x8xf32>
    %545 = arith.subf %541, %544 : vector<32x8xf32>
    %546 = math.exp %545 : vector<32x8xf32>
    %547 = vector.extract_strided_slice %546 {offsets = [0, 0], sizes = [16, 8], strides = [1, 1]} : vector<32x8xf32> to vector<16x8xf32>
    %548 = vector.extract_strided_slice %546 {offsets = [16, 0], sizes = [16, 8], strides = [1, 1]} : vector<32x8xf32> to vector<16x8xf32>
    %549 = tpu.concatenate %547, %548 in 1 : vector<16x8xf32>, vector<16x8xf32> -> vector<16x16xf32>
    %550 = arith.truncf %549 : vector<16x16xf32> to vector<16x16xbf16>
    %cst_157 = arith.constant dense<0.000000e+00> : vector<2x16xf32>
    %551 = tpu.matmul %80, %550, %cst_157 {dimension_numbers = #tpu.dot_dimension_numbers<[1], [0], [0], [1], [0, 0, 1, 1], [], []>} : vector<2x16xbf16>, vector<16x16xbf16>, vector<2x16xf32> -> vector<2x16xf32>
    %552 = arith.truncf %551 : vector<2x16xf32> to vector<2x16xbf16>
    %cst_158 = arith.constant dense<0.000000e+00> : vector<16x16xf32>
    %553 = tpu.matmul %68, %552, %cst_158 {dimension_numbers = #tpu.dot_dimension_numbers<[1], [0], [0], [1], [0, 0, 1, 1], [], []>} : vector<16x2xbf16>, vector<2x16xbf16>, vector<16x16xf32> -> vector<16x16xf32>
    %cst_159 = arith.constant 1.000000e-30 : f32
    %554 = vector.broadcast %cst_159 : f32 to vector<16x16xf32>
    %555 = arith.maximumf %553, %554 : vector<16x16xf32>
    %556 = arith.divf %549, %555 : vector<16x16xf32>
    %557 = vector.extract_strided_slice %556 {offsets = [0, 0], sizes = [16, 8], strides = [1, 1]} : vector<16x16xf32> to vector<16x8xf32>
    %558 = vector.extract_strided_slice %556 {offsets = [0, 8], sizes = [16, 8], strides = [1, 1]} : vector<16x16xf32> to vector<16x8xf32>
    %559 = arith.addf %557, %558 : vector<16x8xf32>
    %560 = arith.truncf %559 : vector<16x8xf32> to vector<16x8xbf16>
    %cst_160 = arith.constant dense<0.000000e+00> : vector<16x64xf32>
    %561 = tpu.matmul %560, %112, %cst_160 {dimension_numbers = #tpu.dot_dimension_numbers<[1], [0], [0], [1], [0, 0, 1, 1], [], []>} : vector<16x8xbf16>, vector<8x64xbf16>, vector<16x64xf32> -> vector<16x64xf32>
    %562 = arith.mulf %561, %530 : vector<16x64xf32>
    %563 = arith.truncf %562 : vector<16x64xf32> to vector<16x64xbf16>
    %cst_161 = arith.constant dense<0.000000e+00> : vector<2x64xf32>
    %564 = tpu.matmul %80, %563, %cst_161 {dimension_numbers = #tpu.dot_dimension_numbers<[1], [0], [0], [1], [0, 0, 1, 1], [], []>} : vector<2x16xbf16>, vector<16x64xbf16>, vector<2x64xf32> -> vector<2x64xf32>
    %565 = arith.truncf %520 : vector<16x64xf32> to vector<16x64xbf16>
    %cst_162 = arith.constant dense<0.000000e+00> : vector<16x384xf32>
    %566 = tpu.matmul %565, %23, %cst_162 {dimension_numbers = #tpu.dot_dimension_numbers<[1], [0], [0], [1], [0, 0, 1, 1], [], []>} : vector<16x64xbf16>, vector<64x384xbf16>, vector<16x384xf32> -> vector<16x384xf32>
    %567 = vector.broadcast %15 : vector<16x1xf32> to vector<16x384xf32>
    %568 = vector.broadcast %18 : vector<1x384xf32> to vector<16x384xf32>
    %569 = arith.mulf %567, %568 : vector<16x384xf32>
    %570 = arith.addf %566, %569 : vector<16x384xf32>
    %571 = vector.extract_strided_slice %570 {offsets = [0, 0], sizes = [16, 64], strides = [1, 1]} : vector<16x384xf32> to vector<16x64xf32>
    %572 = vector.extract_strided_slice %570 {offsets = [0, 128], sizes = [16, 64], strides = [1, 1]} : vector<16x384xf32> to vector<16x64xf32>
    %573 = arith.truncf %572 : vector<16x64xf32> to vector<16x64xbf16>
    %574 = vector.extract_strided_slice %570 {offsets = [0, 256], sizes = [16, 64], strides = [1, 1]} : vector<16x384xf32> to vector<16x64xf32>
    %cst_163 = arith.constant dense<0.000000e+00> : vector<2x64xf32>
    %575 = tpu.matmul %56, %573, %cst_163 {dimension_numbers = #tpu.dot_dimension_numbers<[1], [0], [0], [1], [0, 0, 1, 1], [], []>} : vector<2x16xbf16>, vector<16x64xbf16>, vector<2x64xf32> -> vector<2x64xf32>
    %cst_164 = arith.constant dense<0.000000e+00> : vector<2x64xf32>
    %576 = tpu.matmul %62, %573, %cst_164 {dimension_numbers = #tpu.dot_dimension_numbers<[1], [0], [0], [1], [0, 0, 1, 1], [], []>} : vector<2x16xbf16>, vector<16x64xbf16>, vector<2x64xf32> -> vector<2x64xf32>
    %577 = arith.truncf %575 : vector<2x64xf32> to vector<2x64xbf16>
    %cst_165 = arith.constant dense<0.000000e+00> : vector<16x64xf32>
    %578 = tpu.matmul %68, %577, %cst_165 {dimension_numbers = #tpu.dot_dimension_numbers<[1], [0], [0], [1], [0, 0, 1, 1], [], []>} : vector<16x2xbf16>, vector<2x64xbf16>, vector<16x64xf32> -> vector<16x64xf32>
    %579 = arith.truncf %576 : vector<2x64xf32> to vector<2x64xbf16>
    %cst_166 = arith.constant dense<0.000000e+00> : vector<16x64xf32>
    %580 = tpu.matmul %74, %579, %cst_166 {dimension_numbers = #tpu.dot_dimension_numbers<[1], [0], [0], [1], [0, 0, 1, 1], [], []>} : vector<16x2xbf16>, vector<2x64xbf16>, vector<16x64xf32> -> vector<16x64xf32>
    %581 = arith.mulf %571, %578 : vector<16x64xf32>
    %582 = arith.mulf %571, %580 : vector<16x64xf32>
    %583 = tpu.concatenate %581, %582 in 0 : vector<16x64xf32>, vector<16x64xf32> -> vector<32x64xf32>
    %584 = arith.truncf %583 : vector<32x64xf32> to vector<32x64xbf16>
    %cst_167 = arith.constant dense<0.000000e+00> : vector<32x8xf32>
    %585 = tpu.matmul %584, %99, %cst_167 {dimension_numbers = #tpu.dot_dimension_numbers<[1], [0], [0], [1], [0, 0, 1, 1], [], []>} : vector<32x64xbf16>, vector<64x8xbf16>, vector<32x8xf32> -> vector<32x8xf32>
    %cst_168 = arith.constant dense<0xFF800000> : vector<8xf32>
    %586 = vector.multi_reduction <maximumf>, %585, %cst_168 [0] : vector<32x8xf32> to vector<8xf32>
    %587 = vector.shape_cast %586 : vector<8xf32> to vector<1x8xf32>
    %588 = vector.broadcast %587 : vector<1x8xf32> to vector<32x8xf32>
    %589 = arith.subf %585, %588 : vector<32x8xf32>
    %590 = math.exp %589 : vector<32x8xf32>
    %591 = vector.extract_strided_slice %590 {offsets = [0, 0], sizes = [16, 8], strides = [1, 1]} : vector<32x8xf32> to vector<16x8xf32>
    %592 = vector.extract_strided_slice %590 {offsets = [16, 0], sizes = [16, 8], strides = [1, 1]} : vector<32x8xf32> to vector<16x8xf32>
    %593 = tpu.concatenate %591, %592 in 1 : vector<16x8xf32>, vector<16x8xf32> -> vector<16x16xf32>
    %594 = arith.truncf %593 : vector<16x16xf32> to vector<16x16xbf16>
    %cst_169 = arith.constant dense<0.000000e+00> : vector<2x16xf32>
    %595 = tpu.matmul %86, %594, %cst_169 {dimension_numbers = #tpu.dot_dimension_numbers<[1], [0], [0], [1], [0, 0, 1, 1], [], []>} : vector<2x16xbf16>, vector<16x16xbf16>, vector<2x16xf32> -> vector<2x16xf32>
    %596 = arith.truncf %595 : vector<2x16xf32> to vector<2x16xbf16>
    %cst_170 = arith.constant dense<0.000000e+00> : vector<16x16xf32>
    %597 = tpu.matmul %74, %596, %cst_170 {dimension_numbers = #tpu.dot_dimension_numbers<[1], [0], [0], [1], [0, 0, 1, 1], [], []>} : vector<16x2xbf16>, vector<2x16xbf16>, vector<16x16xf32> -> vector<16x16xf32>
    %cst_171 = arith.constant 1.000000e-30 : f32
    %598 = vector.broadcast %cst_171 : f32 to vector<16x16xf32>
    %599 = arith.maximumf %597, %598 : vector<16x16xf32>
    %600 = arith.divf %593, %599 : vector<16x16xf32>
    %601 = vector.extract_strided_slice %600 {offsets = [0, 0], sizes = [16, 8], strides = [1, 1]} : vector<16x16xf32> to vector<16x8xf32>
    %602 = vector.extract_strided_slice %600 {offsets = [0, 8], sizes = [16, 8], strides = [1, 1]} : vector<16x16xf32> to vector<16x8xf32>
    %603 = arith.addf %601, %602 : vector<16x8xf32>
    %604 = arith.truncf %603 : vector<16x8xf32> to vector<16x8xbf16>
    %cst_172 = arith.constant dense<0.000000e+00> : vector<16x64xf32>
    %605 = tpu.matmul %604, %112, %cst_172 {dimension_numbers = #tpu.dot_dimension_numbers<[1], [0], [0], [1], [0, 0, 1, 1], [], []>} : vector<16x8xbf16>, vector<8x64xbf16>, vector<16x64xf32> -> vector<16x64xf32>
    %606 = arith.mulf %605, %574 : vector<16x64xf32>
    %607 = arith.truncf %606 : vector<16x64xf32> to vector<16x64xbf16>
    %cst_173 = arith.constant dense<0.000000e+00> : vector<2x64xf32>
    %608 = tpu.matmul %86, %607, %cst_173 {dimension_numbers = #tpu.dot_dimension_numbers<[1], [0], [0], [1], [0, 0, 1, 1], [], []>} : vector<2x16xbf16>, vector<16x64xbf16>, vector<2x64xf32> -> vector<2x64xf32>
    %609 = arith.addf %564, %608 : vector<2x64xf32>
    %610 = arith.truncf %609 : vector<2x64xf32> to vector<2x64xbf16>
    %cst_174 = arith.constant dense<0.000000e+00> : vector<2x32xf32>
    %611 = tpu.matmul %610, %24, %cst_174 {dimension_numbers = #tpu.dot_dimension_numbers<[1], [0], [0], [1], [0, 0, 1, 1], [], []>} : vector<2x64xbf16>, vector<64x32xbf16>, vector<2x32xf32> -> vector<2x32xf32>
    %612 = vector.broadcast %16 : vector<2x1xf32> to vector<2x32xf32>
    %613 = vector.broadcast %19 : vector<1x32xf32> to vector<2x32xf32>
    %614 = arith.mulf %612, %613 : vector<2x32xf32>
    %615 = arith.addf %611, %614 : vector<2x32xf32>
    %616 = vector.broadcast %20 : vector<1x32xf32> to vector<2x32xf32>
    %617 = arith.addf %615, %616 : vector<2x32xf32>
    %cst_175 = arith.constant 5.000000e-01 : f32
    %618 = vector.broadcast %cst_175 : f32 to vector<2x32xf32>
    %619 = arith.mulf %618, %617 : vector<2x32xf32>
    %cst_176 = arith.constant 0.707106769 : f32
    %620 = vector.broadcast %cst_176 : f32 to vector<2x32xf32>
    %621 = arith.mulf %617, %620 : vector<2x32xf32>
    %622 = math.erf %621 : vector<2x32xf32>
    %cst_177 = arith.constant 1.000000e+00 : f32
    %623 = vector.broadcast %cst_177 : f32 to vector<2x32xf32>
    %624 = arith.addf %623, %622 : vector<2x32xf32>
    %625 = arith.mulf %619, %624 : vector<2x32xf32>
    %626 = arith.truncf %625 : vector<2x32xf32> to vector<2x32xbf16>
    %cst_178 = arith.constant dense<0.000000e+00> : vector<2x1xf32>
    %627 = tpu.matmul %626, %25, %cst_178 {dimension_numbers = #tpu.dot_dimension_numbers<[1], [0], [0], [1], [0, 0, 1, 1], [], []>} : vector<2x32xbf16>, vector<32x1xbf16>, vector<2x1xf32> -> vector<2x1xf32>
    %628 = vector.broadcast %21 : vector<1x1xf32> to vector<2x1xf32>
    %629 = arith.addf %627, %628 : vector<2x1xf32>
    %630 = arith.negf %629 : vector<2x1xf32>
    %631 = math.exp %630 : vector<2x1xf32>
    %cst_179 = arith.constant 1.000000e+00 : f32
    %632 = vector.broadcast %cst_179 : f32 to vector<2x1xf32>
    %633 = arith.addf %632, %631 : vector<2x1xf32>
    %634 = arith.divf %632, %633 : vector<2x1xf32>
    %635 = vector.shape_cast %634 : vector<2x1xf32> to vector<2x1xf32>
    %636 = vector.broadcast %635 : vector<2x1xf32> to vector<2x128xf32>
    %c0_180 = arith.constant 0 : index
    %c0_181 = arith.constant 0 : index
    %637 = vector.load %arg9[%c0_180, %c0_181] : memref<2x128xf32, #tpu.memory_space<vmem>>, vector<2x128xf32>
    tpu.vector_store %arg9[%c0_180, %c0_181], %636 {strides = array<i32>} : memref<2x128xf32, #tpu.memory_space<vmem>>, vector<2x128xf32>,
    return
  }
}

</mosaic_0001>

<llo_original>
// kernel: tpu_custom_call.1
$region0: #{tpu_custom_call.1}
  #allocation0 [shape = 'u32[]', space=smem, size = 0x4, offset = 0x4, fixed_abs, tag = 'smem constant byte address 0x4 - core index']
  #allocation1 [shape = 'u32[144,128]{1,0:T(1,128)}', space=vmem, size = 0x12000, scoped, tag = 'internal scratch']
  %s0 = inlined_call_operand.vmem [shape: s32[32,8], index: 0, kind: input, shape index: {}]
  %s1 = inlined_call_operand.vmem [shape: s32[4,32], index: 1, kind: input, shape index: {}]
  %s2 = inlined_call_operand.vmem [shape: f32[16,2], index: 2, kind: input, shape index: {}]
  %s3 = inlined_call_operand.vmem [shape: f32[32,64], index: 3, kind: input, shape index: {}]
  %s4 = inlined_call_operand.vmem [shape: bf16[200,64], index: 4, kind: input, shape index: {}]
  %s5 = inlined_call_operand.hbm [shape: bf16[16,64,64], index: 5, kind: input, shape index: {}]
  %s6 = inlined_call_operand.vmem [shape: f32[8,4,64], index: 6, kind: input, shape index: {}]
  %s7 = inlined_call_operand.hbm [shape: bf16[224,384], index: 7, kind: input, shape index: {}]
  %s8 = inlined_call_operand.vmem [shape: f32[5,384], index: 8, kind: input, shape index: {}]
  %s9 = inlined_call_operand.hbm [shape: f32[2,128], index: 9, kind: output, shape index: {}]
  %s10 = sld [smem:[#allocation0]]
  $region54: #{tpu_custom_call.1} parent=0
    _
  %s12 = ssub.s32 1, %s10
  %s13 = scalar_select 0, %s12, %s10
  $region1: #{tpu_custom_call.1} parent=0
    #allocation2 [shape = 'u8[262144]{0}', space=vmem, size = 0x40000, scoped, tag = 'input window, operand 5, single buffered']
    #allocation3 [shape = 's32[1]{0}', space=sflag, size = 0x4, scoped, tag = 'scoped memory for tpu_custom_call.1']
    #allocation4 [shape = 's32[1]{0}', space=sflag, size = 0x4, scoped, tag = 'scoped memory for tpu_custom_call.1']
    #allocation5 [shape = 'u8[172032]{0}', space=vmem, size = 0x2a000, scoped, tag = 'input window, operand 7, single buffered']
    #allocation6 [shape = 's32[1]{0}', space=sflag, size = 0x4, scoped, tag = 'scoped memory for tpu_custom_call.1']
    #allocation7 [shape = 'u8[1024]{0}', space=vmem, size = 0x400, scoped, tag = 'output window, operand 0, single buffered']
    %14 = vsyncpa [#allocation3], 0
    %15 = vsyncpa [#allocation6], 0
    %16 = vsyncpa [#allocation4], 0
    // Predicated region
    $region2: #{tpu_custom_call.1} parent=1 // pred_check
      _
    $region3: #{tpu_custom_call.1} parent=1 // pred_check_branch
      %18 = sbr.rel (0) target = $region5
    $region4: #{tpu_custom_call.1} parent=1 // pred_region
      _
    $region5: #{tpu_custom_call.1} parent=1 // pred_fallthru
      _
    // Predicated region
    $region6: #{tpu_custom_call.1} parent=1 // pred_check
      _
    $region7: #{tpu_custom_call.1} parent=1 // pred_check_branch
      %20 = sbr.rel (0) target = $region9
    $region8: #{tpu_custom_call.1} parent=1 // pred_region
      _
    $region9: #{tpu_custom_call.1} parent=1 // pred_fallthru
      _
    // Predicated region
    $region10: #{tpu_custom_call.1} parent=1 // pred_check
      _
    $region11: #{tpu_custom_call.1} parent=1 // pred_check_branch
      %22 = sbr.rel (0) target = $region13
    $region12: #{tpu_custom_call.1} parent=1 // pred_region
      _
    $region13: #{tpu_custom_call.1} parent=1 // pred_fallthru
      _
    // Predicated region
    $region14: #{tpu_custom_call.1} parent=1 // pred_check
      _
    $region15: #{tpu_custom_call.1} parent=1 // pred_check_branch
      %24 = sbr.rel (0) target = $region17
    $region16: #{tpu_custom_call.1} parent=1 // pred_region
      _
    $region17: #{tpu_custom_call.1} parent=1 // pred_fallthru
      _
    // Predicated region
    $region18: #{tpu_custom_call.1} parent=1 // pred_check
      _
    $region19: #{tpu_custom_call.1} parent=1 // pred_check_branch
      %26 = sbr.rel (0) target = $region21
    $region20: #{tpu_custom_call.1} parent=1 // pred_region
      _
    $region21: #{tpu_custom_call.1} parent=1 // pred_fallthru
      _
    // Predicated region
    $region22: #{tpu_custom_call.1} parent=1 // pred_check
      _
    $region23: #{tpu_custom_call.1} parent=1 // pred_check_branch
      %28 = sbr.rel (0) target = $region25
    $region24: #{tpu_custom_call.1} parent=1 // pred_region
      %s30 = ssub.s32 8192, 8192
      %31 = vsyncadd [#allocation3], %s30
      %s32 = sshll.u32 [#allocation2], 4
      %s33 = int_to_ptr.vmem [resolvable:$true] %s32
      %38 = dma.hbm_to_vmem [thread:$0]  %s5, 8192, %s33, [#allocation3], 64, 64, 4
    $region25: #{tpu_custom_call.1} parent=1 // pred_fallthru
      _
    // Predicated region
    $region26: #{tpu_custom_call.1} parent=1 // pred_check
      _
    $region27: #{tpu_custom_call.1} parent=1 // pred_check_branch
      %40 = sbr.rel (0) target = $region29
    $region28: #{tpu_custom_call.1} parent=1 // pred_region
      _
    $region29: #{tpu_custom_call.1} parent=1 // pred_fallthru
      _
    // Predicated region
    $region30: #{tpu_custom_call.1} parent=1 // pred_check
      _
    $region31: #{tpu_custom_call.1} parent=1 // pred_check_branch
      %42 = sbr.rel (0) target = $region33
    $region32: #{tpu_custom_call.1} parent=1 // pred_region
      %s44 = ssub.s32 5376, 5376
      %45 = vsyncadd [#allocation6], %s44
      %s46 = sshll.u32 [#allocation5], 4
      %s47 = int_to_ptr.vmem [resolvable:$true] %s46
      %52 = dma.hbm_to_vmem [thread:$0]  %s7, 5376, %s47, [#allocation6], 192, 192, 12
    $region33: #{tpu_custom_call.1} parent=1 // pred_fallthru
      _
    // Predicated region
    $region34: #{tpu_custom_call.1} parent=1 // pred_check
      _
    $region35: #{tpu_custom_call.1} parent=1 // pred_check_branch
      %54 = sbr.rel (0) target = $region37
    $region36: #{tpu_custom_call.1} parent=1 // pred_region
      _
    $region37: #{tpu_custom_call.1} parent=1 // pred_fallthru
      _
    // Predicated region
    $region38: #{tpu_custom_call.1} parent=1 // pred_check
      _
    $region39: #{tpu_custom_call.1} parent=1 // pred_check_branch
      %56 = sbr.rel (0) target = $region41
    $region40: #{tpu_custom_call.1} parent=1 // pred_region
      %57 = dma.done [#allocation3], 8192
    $region41: #{tpu_custom_call.1} parent=1 // pred_fallthru
      _
    // Predicated region
    $region42: #{tpu_custom_call.1} parent=1 // pred_check
      _
    $region43: #{tpu_custom_call.1} parent=1 // pred_check_branch
      %59 = sbr.rel (0) target = $region45
    $region44: #{tpu_custom_call.1} parent=1 // pred_region
      %60 = dma.done [#allocation6], 5376
    $region45: #{tpu_custom_call.1} parent=1 // pred_fallthru
      _
    %v62 = vld [vmem:[%s0] sm:$0xff]
    %v63 = vld [vmem:[%s0 + $0x8] sm:$0xff]
    %v64 = vld [vmem:[%s0 + $0x10] sm:$0xff]
    %v65 = vld [vmem:[%s0 + $0x18] sm:$0xff]
    %v66 = vld [vmem:[%s1] sm:$0xf]
    %v67 = vld [vmem:[%s2] sm:$0xff]
    %v68 = vld [vmem:[%s2 + $0x8] sm:$0xff]
    %v69 = vld [vmem:[%s8] sm:$0x1f]
    %v70 = vld [vmem:[%s8 + $0x8] sm:$0x1f]
    %v71 = vld [vmem:[%s8 + $0x10] sm:$0x1f]
    %v72 = vld [vmem:[#allocation5] sm:$0xff]
    %v73 = vld [vmem:[#allocation5 + $0x8] sm:$0xf]
    %v74 = vld [vmem:[#allocation5 + $0xc] sm:$0xff]
    %v75 = vld [vmem:[#allocation5 + $0x14] sm:$0xf]
    %v76 = vld [vmem:[#allocation5 + $0x18] sm:$0xff]
    %v77 = vld [vmem:[#allocation5 + $0x20] sm:$0xf]
    %v78 = vld [vmem:[#allocation5 + $0x24] sm:$0xff]
    %v79 = vld [vmem:[#allocation5 + $0x2c] sm:$0xf]
    %v80 = vld [vmem:[#allocation5 + $0x30] sm:$0xff]
    %v81 = vld [vmem:[#allocation5 + $0x38] sm:$0xf]
    %v82 = vld [vmem:[#allocation5 + $0x3c] sm:$0xff]
    %v83 = vld [vmem:[#allocation5 + $0x44] sm:$0xf]
    %v84 = vld [vmem:[#allocation5 + $0x48] sm:$0xff]
    %v85 = vld [vmem:[#allocation5 + $0x50] sm:$0xf]
    %v86 = vld [vmem:[#allocation5 + $0x54] sm:$0xff]
    %v87 = vld [vmem:[#allocation5 + $0x5c] sm:$0xf]
    %v88 = vld [vmem:[#allocation5 + $0x60] sm:$0xff]
    %v89 = vld [vmem:[#allocation5 + $0x68] sm:$0xf]
    %v90 = vld [vmem:[#allocation5 + $0x6c] sm:$0xff]
    %v91 = vld [vmem:[#allocation5 + $0x74] sm:$0xf]
    %v92 = vld [vmem:[#allocation5 + $0x78] sm:$0xff]
    %v93 = vld [vmem:[#allocation5 + $0x80] sm:$0xf]
    %v94 = vld [vmem:[#allocation5 + $0x84] sm:$0xff]
    %v95 = vld [vmem:[#allocation5 + $0x8c] sm:$0xf]
    %v96 = vld [vmem:[#allocation5 + $0x90] sm:$0xff]
    %v97 = vld [vmem:[#allocation5 + $0x98] sm:$0xf]
    %v98 = vld [vmem:[#allocation5 + $0x9c] sm:$0xff]
    %v99 = vld [vmem:[#allocation5 + $0xa4] sm:$0xf]
    %v100 = vld [vmem:[#allocation5 + $0xa8] sm:$0xff]
    %v101 = vld [vmem:[#allocation5 + $0xb0] sm:$0xf]
    %v102 = vld [vmem:[#allocation5 + $0xb4] sm:$0xff]
    %v103 = vld [vmem:[#allocation5 + $0xbc] sm:$0xf]
    %v104 = vld [vmem:[#allocation5 + $0xc0] sm:$0xf]
    %v105 = vld [vmem:[#allocation5 + $0xcc] sm:$0xf]
    %v106 = vld [vmem:[#allocation5 + $0xd8] sm:$0xf]
    %v107 = vld [vmem:[#allocation5 + $0xe4] sm:$0xf]
    %v108 = vld [vmem:[#allocation5 + $0xf0] sm:$0xf]
    %v109 = vld [vmem:[#allocation5 + $0xfc] sm:$0xf]
    %v110 = vld [vmem:[#allocation5 + $0x108] sm:$0xf]
    %v111 = vld [vmem:[#allocation5 + $0x114] sm:$0xf]
    %v112 = vld [vmem:[#allocation5 + $0x120] sm:$0xf]
    %v113 = vld [vmem:[#allocation5 + $0x12c] sm:$0xf]
    %v114 = vld [vmem:[#allocation5 + $0x138] sm:$0xf]
    %v115 = vld [vmem:[#allocation5 + $0x144] sm:$0xf]
    %v116 = vld [vmem:[%s3] sm:$0xff]
    %v117 = vld [vmem:[%s3 + $0x8] sm:$0xff]
    %v118 = vld [vmem:[%s3 + $0x10] sm:$0xff]
    %v119 = vld [vmem:[%s3 + $0x18] sm:$0xff]
    %v120 = vlaneseq
    %v121 = vand.u32 %v120, 127
    %122 = vset.pattern.permute.xlu0 1
    %123 = vperm.xlu0 %122, %v62
    %v124 = vpop.permute.xlu0 %123
    %125 = vset.pattern.permute.xlu0 1
    %126 = vperm.xlu0 %125, %v63
    %v127 = vpop.permute.xlu0 %126
    %128 = vset.pattern.permute.xlu0 1
    %129 = vperm.xlu0 %128, %v64
    %v130 = vpop.permute.xlu0 %129
    %131 = vset.pattern.permute.xlu0 1
    %132 = vperm.xlu0 %131, %v65
    %v133 = vpop.permute.xlu0 %132
    %vm134 = vcmp.eq.s32.totalorder %v121, %v124
    %vm135 = vcmp.eq.s32.totalorder %v121, %v127
    %vm136 = vcmp.eq.s32.totalorder %v121, %v130
    %vm137 = vcmp.eq.s32.totalorder %v121, %v133
    %v138 = vsel %vm134, 1, 0
    %v139 = vsel %vm135, 1, 0
    %v140 = vsel %vm136, 1, 0
    %v141 = vsel %vm137, 1, 0
    %v142 = vcvt.s32.f32 %v138
    %v143 = vcvt.s32.f32 %v139
    %v144 = vcvt.s32.f32 %v140
    %v145 = vcvt.s32.f32 %v141
    %v146 = vpack.c.bf16 %v143, %v142
    %v147 = vpack.c.bf16 %v145, %v144
    %v148 = vlaneseq
    %v149 = vshrl.u32 %v148, 7
    %v150 = vadd.s32 %v149, 8
    %v151 = vlaneseq
    %v152 = vshrl.u32 %v151, 7
    %v153 = vsub.s32 0, %v152
    %v154 = vrot.slane %v66, %v153
    %vm155 = vcmp.eq.s32.totalorder %v149, %v154
    %vm156 = vcmp.eq.s32.totalorder %v150, %v154
    %v157 = vsel %vm155, 1, 0
    %v158 = vsel %vm156, 1, 0
    %v159 = vcvt.s32.f32 %v157
    %v160 = vcvt.s32.f32 %v158
    %v161 = vpack.c.bf16 %v160, %v159
    %162 = vset.pattern.permute.xlu0 2
    %163 = vperm.xlu0 %162, %v62
    %v164 = vpop.permute.xlu0 %163
    %165 = vset.pattern.permute.xlu0 2
    %166 = vperm.xlu0 %165, %v63
    %v167 = vpop.permute.xlu0 %166
    %168 = vset.pattern.permute.xlu0 2
    %169 = vperm.xlu0 %168, %v64
    %v170 = vpop.permute.xlu0 %169
    %171 = vset.pattern.permute.xlu0 2
    %172 = vperm.xlu0 %171, %v65
    %v173 = vpop.permute.xlu0 %172
    %vm174 = vcmp.eq.s32.totalorder %v121, %v164
    %vm175 = vcmp.eq.s32.totalorder %v121, %v167
    %vm176 = vcmp.eq.s32.totalorder %v121, %v170
    %vm177 = vcmp.eq.s32.totalorder %v121, %v173
    %v178 = vsel %vm174, 1, 0
    %v179 = vsel %vm175, 1, 0
    %v180 = vsel %vm176, 1, 0
    %v181 = vsel %vm177, 1, 0
    %v182 = vcvt.s32.f32 %v178
    %v183 = vcvt.s32.f32 %v179
    %v184 = vcvt.s32.f32 %v180
    %v185 = vcvt.s32.f32 %v181
    %v186 = vpack.c.bf16 %v183, %v182
    %v187 = vpack.c.bf16 %v185, %v184
    %v188 = vlaneseq
    %v189 = vshrl.u32 %v188, 7
    %v190 = vsub.s32 1, %v189
    %v191 = vrot.slane %v66, %v190
    %vm192 = vcmp.eq.s32.totalorder %v149, %v191
    %vm193 = vcmp.eq.s32.totalorder %v150, %v191
    %v194 = vsel %vm192, 1, 0
    %v195 = vsel %vm193, 1, 0
    %v196 = vcvt.s32.f32 %v194
    %v197 = vcvt.s32.f32 %v195
    %v198 = vpack.c.bf16 %v197, %v196
    %199 = vset.pattern.permute.xlu0 5
    %200 = vperm.xlu0 %199, %v62
    %v201 = vpop.permute.xlu0 %200
    %vm202 = vcmp.eq.s32.totalorder %v121, %v201
    %v203 = vsel %vm202, 1, 0
    %v204 = vcvt.s32.f32 %v203
    %v205 = vpack.c.bf16 %v204, %v204
    %206 = vset.pattern.permute.xlu0 6
    %207 = vperm.xlu0 %206, %v62
    %v208 = vpop.permute.xlu0 %207
    %vm209 = vcmp.eq.s32.totalorder %v121, %v208
    %v210 = vsel %vm209, 1, 0
    %v211 = vcvt.s32.f32 %v210
    %v212 = vpack.c.bf16 %v211, %v211
    %213 = vset.pattern.permute.xlu0 3
    %214 = vperm.xlu0 %213, %v62
    %v215 = vpop.permute.xlu0 %214
    %216 = vset.pattern.permute.xlu0 3
    %217 = vperm.xlu0 %216, %v63
    %v218 = vpop.permute.xlu0 %217
    %vm219 = vcmp.eq.s32.totalorder %v121, %v215
    %vm220 = vcmp.eq.s32.totalorder %v121, %v218
    %v221 = vsel %vm219, 1, 0
    %v222 = vsel %vm220, 1, 0
    %v223 = vcvt.s32.f32 %v221
    %v224 = vcvt.s32.f32 %v222
    %v225 = vpack.c.bf16 %v224, %v223
    %226 = vset.pattern.permute.xlu0 4
    %227 = vperm.xlu0 %226, %v62
    %v228 = vpop.permute.xlu0 %227
    %229 = vset.pattern.permute.xlu0 4
    %230 = vperm.xlu0 %229, %v63
    %v231 = vpop.permute.xlu0 %230
    %vm232 = vcmp.eq.s32.totalorder %v121, %v228
    %vm233 = vcmp.eq.s32.totalorder %v121, %v231
    %v234 = vsel %vm232, 1, 0
    %v235 = vsel %vm233, 1, 0
    %v236 = vcvt.s32.f32 %v234
    %v237 = vcvt.s32.f32 %v235
    %v238 = vpack.c.bf16 %v237, %v236
    %v239 = vlaneseq
    %v240 = vshrl.u32 %v239, 7
    %v241 = vsub.s32 2, %v240
    %v242 = vrot.slane %v66, %v241
    %vm243 = vcmp.eq.s32.totalorder %v149, %v242
    %v244 = vsel %vm243, 1, 0
    %v245 = vcvt.s32.f32 %v244
    %v246 = vpack.c.bf16 %v245, %v245
    %v247 = vlaneseq
    %v248 = vshrl.u32 %v247, 7
    %v249 = vsub.s32 3, %v248
    %v250 = vrot.slane %v66, %v249
    %vm251 = vcmp.eq.s32.totalorder %v149, %v250
    %v252 = vsel %vm251, 1, 0
    %v253 = vcvt.s32.f32 %v252
    %v254 = vpack.c.bf16 %v253, %v253
    %v255 = vadd.s32 %v149, 16
    %v256 = vadd.s32 %v149, 24
    %v257 = vadd.s32 %v149, 32
    %v258 = vadd.s32 %v149, 40
    %v259 = vadd.s32 %v149, 48
    %v260 = vadd.s32 %v149, 56
    %v261 = vmul.u32 %v121, 8
    %v262 = vsub.s32 %v149, %v261
    %v263 = vsub.s32 %v150, %v261
    %v264 = vsub.s32 %v255, %v261
    %v265 = vsub.s32 %v256, %v261
    %v266 = vsub.s32 %v257, %v261
    %v267 = vsub.s32 %v258, %v261
    %v268 = vsub.s32 %v259, %v261
    %v269 = vsub.s32 %v260, %v261
    %vm270 = vcmp.ge.s32.totalorder %v262, 0
    %vm271 = vcmp.ge.s32.totalorder %v263, 0
    %vm272 = vcmp.ge.s32.totalorder %v264, 0
    %vm273 = vcmp.ge.s32.totalorder %v265, 0
    %vm274 = vcmp.ge.s32.totalorder %v266, 0
    %vm275 = vcmp.ge.s32.totalorder %v267, 0
    %vm276 = vcmp.ge.s32.totalorder %v268, 0
    %vm277 = vcmp.ge.s32.totalorder %v269, 0
    %vm278 = vcmp.lt.s32.totalorder %v262, 8
    %vm279 = vcmp.lt.s32.totalorder %v263, 8
    %vm280 = vcmp.lt.s32.totalorder %v264, 8
    %vm281 = vcmp.lt.s32.totalorder %v265, 8
    %vm282 = vcmp.lt.s32.totalorder %v266, 8
    %vm283 = vcmp.lt.s32.totalorder %v267, 8
    %vm284 = vcmp.lt.s32.totalorder %v268, 8
    %vm285 = vcmp.lt.s32.totalorder %v269, 8
    %vm286 = vmand %vm270, %vm278
    %vm287 = vmand %vm271, %vm279
    %vm288 = vmand %vm272, %vm280
    %vm289 = vmand %vm273, %vm281
    %vm290 = vmand %vm274, %vm282
    %vm291 = vmand %vm275, %vm283
    %vm292 = vmand %vm276, %vm284
    %vm293 = vmand %vm277, %vm285
    %v294 = vsel %vm286, 1, 0
    %v295 = vsel %vm287, 1, 0
    %v296 = vsel %vm288, 1, 0
    %v297 = vsel %vm289, 1, 0
    %v298 = vsel %vm290, 1, 0
    %v299 = vsel %vm291, 1, 0
    %v300 = vsel %vm292, 1, 0
    %v301 = vsel %vm293, 1, 0
    %v302 = vcvt.s32.f32 %v294
    %v303 = vcvt.s32.f32 %v295
    %v304 = vcvt.s32.f32 %v296
    %v305 = vcvt.s32.f32 %v297
    %v306 = vcvt.s32.f32 %v298
    %v307 = vcvt.s32.f32 %v299
    %v308 = vcvt.s32.f32 %v300
    %v309 = vcvt.s32.f32 %v301
    %v310 = vpack.c.bf16 %v303, %v302
    %v311 = vpack.c.bf16 %v305, %v304
    %v312 = vpack.c.bf16 %v307, %v306
    %v313 = vpack.c.bf16 %v309, %v308
    %v314 = vmul.u32 %v149, 8
    %v315 = vsub.s32 %v121, %v314
    %vm316 = vcmp.ge.s32.totalorder %v315, 0
    %vm317 = vcmp.lt.s32.totalorder %v315, 8
    %vm318 = vmand %vm316, %vm317
    %v319 = vsel %vm318, 1, 0
    %v320 = vcvt.s32.f32 %v319
    %v321 = vpack.c.bf16 %v320, %v320
    %v322 = vadd.s32 %v121, 128
    %323 = vset.pattern.permute.xlu0 0
    %324 = vperm.xlu0 %323, %v62
    %v325 = vpop.permute.xlu0 %324
    %326 = vset.pattern.permute.xlu0 0
    %327 = vperm.xlu0 %326, %v63
    %v328 = vpop.permute.xlu0 %327
    %329 = vset.pattern.permute.xlu0 0
    %330 = vperm.xlu0 %329, %v64
    %v331 = vpop.permute.xlu0 %330
    %332 = vset.pattern.permute.xlu0 0
    %333 = vperm.xlu0 %332, %v65
    %v334 = vpop.permute.xlu0 %333
    %vm335 = vcmp.eq.s32.totalorder %v121, %v325
    %vm336 = vcmp.eq.s32.totalorder %v322, %v325
    %vm337 = vcmp.eq.s32.totalorder %v121, %v328
    %vm338 = vcmp.eq.s32.totalorder %v322, %v328
    %vm339 = vcmp.eq.s32.totalorder %v121, %v331
    %vm340 = vcmp.eq.s32.totalorder %v322, %v331
    %vm341 = vcmp.eq.s32.totalorder %v121, %v334
    %vm342 = vcmp.eq.s32.totalorder %v322, %v334
    %v343 = vsel %vm335, 1, 0
    %v344 = vsel %vm336, 1, 0
    %v345 = vsel %vm337, 1, 0
    %v346 = vsel %vm338, 1, 0
    %v347 = vsel %vm339, 1, 0
    %v348 = vsel %vm340, 1, 0
    %v349 = vsel %vm341, 1, 0
    %v350 = vsel %vm342, 1, 0
    %v351 = vcvt.s32.f32 %v343
    %v352 = vcvt.s32.f32 %v344
    %v353 = vcvt.s32.f32 %v345
    %v354 = vcvt.s32.f32 %v346
    %v355 = vcvt.s32.f32 %v347
    %v356 = vcvt.s32.f32 %v348
    %v357 = vcvt.s32.f32 %v349
    %v358 = vcvt.s32.f32 %v350
    %v359 = vpack.c.bf16 %v353, %v351
    %v360 = vpack.c.bf16 %v354, %v352
    %v361 = vpack.c.bf16 %v357, %v355
    %v362 = vpack.c.bf16 %v358, %v356
    %v363 = vld [vmem:[%s4] sm:$0xf]
    %v364 = vld [vmem:[%s4 + $0x4] sm:$0xf]
    %v365 = vld [vmem:[%s4 + $0x8] sm:$0xf]
    %v366 = vld [vmem:[%s4 + $0xc] sm:$0xf]
    %v367 = vld [vmem:[%s4 + $0x10] sm:$0xf]
    %v368 = vld [vmem:[%s4 + $0x14] sm:$0xf]
    %v369 = vld [vmem:[%s4 + $0x18] sm:$0xf]
    %v370 = vld [vmem:[%s4 + $0x1c] sm:$0xf]
    %v371 = vld [vmem:[%s4 + $0x20] sm:$0xf]
    %v372 = vld [vmem:[%s4 + $0x24] sm:$0xf]
    %v373 = vld [vmem:[%s4 + $0x28] sm:$0xf]
    %v374 = vld [vmem:[%s4 + $0x2c] sm:$0xf]
    %v375 = vld [vmem:[%s4 + $0x30] sm:$0xf]
    %v376 = vld [vmem:[%s4 + $0x34] sm:$0xf]
    %v377 = vld [vmem:[%s4 + $0x38] sm:$0xf]
    %v378 = vld [vmem:[%s4 + $0x3c] sm:$0xf]
    %v379 = vld [vmem:[%s4 + $0x40] sm:$0xf]
    %v380 = vld [vmem:[%s4 + $0x44] sm:$0xf]
    %v381 = vld [vmem:[%s4 + $0x48] sm:$0xf]
    %v382 = vld [vmem:[%s4 + $0x4c] sm:$0xf]
    %v383 = vld [vmem:[%s4 + $0x50] sm:$0xf]
    %v384 = vld [vmem:[%s4 + $0x54] sm:$0xf]
    %v385 = vld [vmem:[%s4 + $0x58] sm:$0xf]
    %v386 = vld [vmem:[%s4 + $0x5c] sm:$0xf]
    %v387 = vld [vmem:[%s4 + $0x60] sm:$0xf]
    %v413 = vunpack.c.l.b16 %v363
    %v414 = vunpack.c.l.b16 %v364
    %v415 = vunpack.c.l.b16 %v365
    %v416 = vunpack.c.l.b16 %v366
    %v417 = vunpack.c.l.b16 %v367
    %v418 = vunpack.c.l.b16 %v368
    %v419 = vunpack.c.l.b16 %v369
    %v420 = vunpack.c.l.b16 %v370
    %v421 = vunpack.c.l.b16 %v371
    %v422 = vunpack.c.l.b16 %v372
    %v423 = vunpack.c.l.b16 %v373
    %v424 = vunpack.c.l.b16 %v374
    %v425 = vunpack.c.l.b16 %v375
    %v426 = vunpack.c.l.b16 %v376
    %v427 = vunpack.c.l.b16 %v377
    %v428 = vunpack.c.l.b16 %v378
    %v429 = vunpack.c.l.b16 %v379
    %v430 = vunpack.c.l.b16 %v380
    %v431 = vunpack.c.l.b16 %v381
    %v432 = vunpack.c.l.b16 %v382
    %v433 = vunpack.c.l.b16 %v383
    %v434 = vunpack.c.l.b16 %v384
    %v435 = vunpack.c.l.b16 %v385
    %v436 = vunpack.c.l.b16 %v386
    %v437 = vunpack.c.l.b16 %v387
    %v438 = vpack.c.b16 %v414, %v413
    %v439 = vpack.c.b16 %v416, %v415
    %v440 = vpack.c.b16 %v418, %v417
    %v441 = vpack.c.b16 %v420, %v419
    %v442 = vpack.c.b16 %v422, %v421
    %v443 = vpack.c.b16 %v424, %v423
    %v444 = vpack.c.b16 %v426, %v425
    %v445 = vpack.c.b16 %v428, %v427
    %v446 = vpack.c.b16 %v430, %v429
    %v447 = vpack.c.b16 %v432, %v431
    %v448 = vpack.c.b16 %v434, %v433
    %v449 = vpack.c.b16 %v436, %v435
    %v450 = vpack.c.b16 %v437, %v437
    %vm463 = vcmask 588800
    %v465 = vsel %vm463, %v360, 0
    %v468 = vsel %vm463, %v362, 0
    %vm470 = vcmask 1043456
    %v472 = vsel %vm470, %v450, 0
    %474 = vmatprep.subr.bf16.mxu0 0
    %475 = vmatpush1.bf16.msra.mxu0 %v438
    %476 = vmatprep.subr.bf16.mxu0 0
    %477 = vmatpush1.bf16.msra.mxu0 %v439
    %478 = vmatprep.subr.bf16.mxu0 0
    %479 = vmatpush1.bf16.msra.mxu0 %v440
    %480 = vmatprep.subr.bf16.mxu0 0
    %481 = vmatpush1.bf16.msra.mxu0 %v441
    %482 = vmatprep.subr.bf16.mxu0 0
    %483 = vmatpush1.bf16.msra.mxu0 %v442
    %484 = vmatprep.subr.bf16.mxu0 0
    %485 = vmatpush1.bf16.msra.mxu0 %v443
    %486 = vmatprep.subr.bf16.mxu0 0
    %487 = vmatpush1.bf16.msra.mxu0 %v444
    %488 = vmatprep.subr.bf16.mxu0 0
    %489 = vmatpush1.bf16.msra.mxu0 %v445
    %490 = vmatprep.subr.bf16.mxu0 0
    %491 = vmatpush1.bf16.msra.mxu0 %v446
    %492 = vmatprep.subr.bf16.mxu0 0
    %493 = vmatpush1.bf16.msra.mxu0 %v447
    %494 = vmatprep.subr.bf16.mxu0 0
    %495 = vmatpush1.bf16.msra.mxu0 %v448
    %496 = vmatprep.subr.bf16.mxu0 0
    %497 = vmatpush1.bf16.msra.mxu0 %v449
    %498 = vmatprep.subr.bf16.mxu0 0
    %499 = vmatpush1.bf16.msra.mxu0 %v472
    %500 = vmatprep.subr.bf16.mxu0 0
    %501 = vmatpush1.bf16.msra.mxu0 0
    %502 = vmatprep.subr.bf16.mxu0 0
    %503 = vmatpush1.bf16.msra.mxu0 0
    %504 = vmatprep.subr.bf16.mxu0 0
    %505 = vmatpush1.bf16.msra.mxu0 0
    %506 = vmatprep.mubr.bf16.mxu0 %v465
    %507 = vmatmul.mubr.bf16.gmra.mrb[0].mxu0 %v359
    %v508 = vpop.f32.mrb[0].mxu0
    %v509 = vadd.f32 0.0, %v508
    %v510 = vpop.f32.mrb[0].mxu0
    %v511 = vpop.f32.mrb[0].mxu0
    %v512 = vadd.f32 0.0, %v511
    %v513 = vpop.f32.mrb[0].mxu0
    %514 = vmatprep.mubr.bf16.mxu0 %v468
    %515 = vmatmul.mubr.bf16.gmra.mrb[0].mxu0 %v361
    %v516 = vpop.f32.mrb[0].mxu0
    %v517 = vadd.f32 0.0, %v516
    %v518 = vpop.f32.mrb[0].mxu0
    %v519 = vpop.f32.mrb[0].mxu0
    %v520 = vadd.f32 0.0, %v519
    %v521 = vpop.f32.mrb[0].mxu0
    %522 = vdwg.mxu0
    %v523 = vld [vmem:[%s6] sm:$0xf]
    %v524 = vpack.c.bf16 %v512, %v509
    %vm525 = vcmask 130048
    %v527 = vsel %vm525, %v146, 0
    %v530 = vsel %vm525, %v147, 0
    %532 = vmatprep.subr.bf16.mxu0 0
    %533 = vmatpush1.bf16.msra.mxu0 %v524
    %534 = vmatprep.subr.bf16.mxu0 0
    %535 = vmatpush1.bf16.msra.mxu0 0
    %536 = vmatprep.subr.bf16.mxu0 0
    %537 = vmatpush1.bf16.msra.mxu0 0
    %538 = vmatprep.subr.bf16.mxu0 0
    %539 = vmatpush1.bf16.msra.mxu0 0
    %540 = vmatprep.subr.bf16.mxu0 0
    %541 = vmatpush1.bf16.msra.mxu0 0
    %542 = vmatprep.subr.bf16.mxu0 0
    %543 = vmatpush1.bf16.msra.mxu0 0
    %544 = vmatprep.subr.bf16.mxu0 0
    %545 = vmatpush1.bf16.msra.mxu0 0
    %546 = vmatprep.subr.bf16.mxu0 0
    %547 = vmatpush1.bf16.msra.mxu0 0
    %548 = vmatprep.subr.bf16.mxu0 0
    %549 = vmatpush1.bf16.msra.mxu0 0
    %550 = vmatprep.subr.bf16.mxu0 0
    %551 = vmatpush1.bf16.msra.mxu0 0
    %552 = vmatprep.subr.bf16.mxu0 0
    %553 = vmatpush1.bf16.msra.mxu0 0
    %554 = vmatprep.subr.bf16.mxu0 0
    %555 = vmatpush1.bf16.msra.mxu0 0
    %556 = vmatprep.subr.bf16.mxu0 0
    %557 = vmatpush1.bf16.msra.mxu0 0
    %558 = vmatprep.subr.bf16.mxu0 0
    %559 = vmatpush1.bf16.msra.mxu0 0
    %560 = vmatprep.subr.bf16.mxu0 0
    %561 = vmatpush1.bf16.msra.mxu0 0
    %562 = vmatprep.subr.bf16.mxu0 0
    %563 = vmatpush1.bf16.msra.mxu0 0
    %564 = vmatprep.mubr.bf16.mxu0 0
    %565 = vmatmul.mubr.bf16.gmra.mrb[0].mxu0 %v527
    %v566 = vpop.f32.mrb[0].mxu0
    %v567 = vadd.f32 %v116, %v566
    %v568 = vpop.f32.mrb[0].mxu0
    %v569 = vpop.f32.mrb[0].mxu0
    %v570 = vadd.f32 %v117, %v569
    %v571 = vpop.f32.mrb[0].mxu0
    %572 = vmatprep.mubr.bf16.mxu0 0
    %573 = vmatmul.mubr.bf16.gmra.mrb[0].mxu0 %v530
    %v574 = vpop.f32.mrb[0].mxu0
    %v575 = vadd.f32 %v118, %v574
    %v576 = vpop.f32.mrb[0].mxu0
    %v577 = vpop.f32.mrb[0].mxu0
    %v578 = vadd.f32 %v119, %v577
    %v579 = vpop.f32.mrb[0].mxu0
    %580 = vdwg.mxu0
    %v581 = vmax.f32 %v567, 0.0
    %v582 = vmax.f32 %v570, 0.0
    %v583 = vmax.f32 %v575, 0.0
    %v584 = vmax.f32 %v578, 0.0
    %v585 = vpack.c.bf16 %v582, %v581
    %v586 = vpack.c.bf16 %v584, %v583
    %vm587 = vcmask 261120
    %v589 = vsel %vm587, %v161, 0
    %591 = vmatprep.subr.bf16.mxu0 0
    %592 = vmatpush1.bf16.msra.mxu0 %v585
    %593 = vmatprep.subr.bf16.mxu0 0
    %594 = vmatpush1.bf16.msra.mxu0 %v586
    %595 = vmatprep.subr.bf16.mxu0 0
    %596 = vmatpush1.bf16.msra.mxu0 0
    %597 = vmatprep.subr.bf16.mxu0 0
    %598 = vmatpush1.bf16.msra.mxu0 0
    %599 = vmatprep.subr.bf16.mxu0 0
    %600 = vmatpush1.bf16.msra.mxu0 0
    %601 = vmatprep.subr.bf16.mxu0 0
    %602 = vmatpush1.bf16.msra.mxu0 0
    %603 = vmatprep.subr.bf16.mxu0 0
    %604 = vmatpush1.bf16.msra.mxu0 0
    %605 = vmatprep.subr.bf16.mxu0 0
    %606 = vmatpush1.bf16.msra.mxu0 0
    %607 = vmatprep.subr.bf16.mxu0 0
    %608 = vmatpush1.bf16.msra.mxu0 0
    %609 = vmatprep.subr.bf16.mxu0 0
    %610 = vmatpush1.bf16.msra.mxu0 0
    %611 = vmatprep.subr.bf16.mxu0 0
    %612 = vmatpush1.bf16.msra.mxu0 0
    %613 = vmatprep.subr.bf16.mxu0 0
    %614 = vmatpush1.bf16.msra.mxu0 0
    %615 = vmatprep.subr.bf16.mxu0 0
    %616 = vmatpush1.bf16.msra.mxu0 0
    %617 = vmatprep.subr.bf16.mxu0 0
    %618 = vmatpush1.bf16.msra.mxu0 0
    %619 = vmatprep.subr.bf16.mxu0 0
    %620 = vmatpush1.bf16.msra.mxu0 0
    %621 = vmatprep.subr.bf16.mxu0 0
    %622 = vmatpush1.bf16.msra.mxu0 0
    %623 = vmatprep.mubr.bf16.mxu0 0
    %624 = vmatmul.mubr.bf16.gmra.mrb[0].mxu0 %v589
    %v625 = vpop.f32.mrb[0].mxu0
    %v626 = vadd.f32 0.0, %v625
    %v627 = vpop.f32.mrb[0].mxu0
    %v628 = vpop.f32.mrb[0].mxu0
    %v629 = vadd.f32 0.0, %v628
    %v630 = vpop.f32.mrb[0].mxu0
    %631 = vdwg.mxu0
    %v632 = vadd.f32 %v509, %v626
    %v633 = vadd.f32 %v512, %v629
    %v634 = vpack.c.bf16 %v633, %v632
    %v635 = vld [vmem:[#allocation2] sm:$0xf]
    %v636 = vld [vmem:[#allocation2 + $0x4] sm:$0xf]
    %v637 = vld [vmem:[#allocation2 + $0x8] sm:$0xf]
    %v638 = vld [vmem:[#allocation2 + $0xc] sm:$0xf]
    %v639 = vld [vmem:[#allocation2 + $0x10] sm:$0xf]
    %v640 = vld [vmem:[#allocation2 + $0x14] sm:$0xf]
    %v641 = vld [vmem:[#allocation2 + $0x18] sm:$0xf]
    %v642 = vld [vmem:[#allocation2 + $0x1c] sm:$0xf]
    %v643 = vlaneseq
    %v644 = vshrl.u32 %v643, 7
    %v645 = vsub.s32 0, %v644
    %v646 = vrot.slane %v523, %v645
    %v655 = vunpack.c.l.b16 %v635
    %v656 = vunpack.c.l.b16 %v636
    %v657 = vunpack.c.l.b16 %v637
    %v658 = vunpack.c.l.b16 %v638
    %v659 = vunpack.c.l.b16 %v639
    %v660 = vunpack.c.l.b16 %v640
    %v661 = vunpack.c.l.b16 %v641
    %v662 = vunpack.c.l.b16 %v642
    %v663 = vpack.c.b16 %v656, %v655
    %v664 = vpack.c.b16 %v658, %v657
    %v665 = vpack.c.b16 %v660, %v659
    %v666 = vpack.c.b16 %v662, %v661
    %vm671 = vcmask 523264
    %v673 = vsel %vm671, %v634, 0
    %675 = vmatprep.subr.bf16.mxu0 0
    %676 = vmatpush1.bf16.msra.mxu0 %v663
    %677 = vmatprep.subr.bf16.mxu0 0
    %678 = vmatpush1.bf16.msra.mxu0 %v664
    %679 = vmatprep.subr.bf16.mxu0 0
    %680 = vmatpush1.bf16.msra.mxu0 %v665
    %681 = vmatprep.subr.bf16.mxu0 0
    %682 = vmatpush1.bf16.msra.mxu0 %v666
    %683 = vmatprep.subr.bf16.mxu0 0
    %684 = vmatpush1.bf16.msra.mxu0 0
    %685 = vmatprep.subr.bf16.mxu0 0
    %686 = vmatpush1.bf16.msra.mxu0 0
    %687 = vmatprep.subr.bf16.mxu0 0
    %688 = vmatpush1.bf16.msra.mxu0 0
    %689 = vmatprep.subr.bf16.mxu0 0
    %690 = vmatpush1.bf16.msra.mxu0 0
    %691 = vmatprep.subr.bf16.mxu0 0
    %692 = vmatpush1.bf16.msra.mxu0 0
    %693 = vmatprep.subr.bf16.mxu0 0
    %694 = vmatpush1.bf16.msra.mxu0 0
    %695 = vmatprep.subr.bf16.mxu0 0
    %696 = vmatpush1.bf16.msra.mxu0 0
    %697 = vmatprep.subr.bf16.mxu0 0
    %698 = vmatpush1.bf16.msra.mxu0 0
    %699 = vmatprep.subr.bf16.mxu0 0
    %700 = vmatpush1.bf16.msra.mxu0 0
    %701 = vmatprep.subr.bf16.mxu0 0
    %702 = vmatpush1.bf16.msra.mxu0 0
    %703 = vmatprep.subr.bf16.mxu0 0
    %704 = vmatpush1.bf16.msra.mxu0 0
    %705 = vmatprep.subr.bf16.mxu0 0
    %706 = vmatpush1.bf16.msra.mxu0 0
    %707 = vmatprep.mubr.bf16.mxu0 0
    %708 = vmatmul.mubr.bf16.gmra.mrb[0].mxu0 %v673
    %v709 = vpop.f32.mrb[0].mxu0
    %v710 = vadd.f32 %v646, %v709
    %v711 = vpop.f32.mrb[0].mxu0
    %v712 = vpop.f32.mrb[0].mxu0
    %v713 = vadd.f32 %v646, %v712
    %v714 = vpop.f32.mrb[0].mxu0
    %715 = vdwg.mxu0
    %v716 = vmax.f32 %v710, 0.0
    %v717 = vmax.f32 %v713, 0.0
    %v718 = vpack.c.bf16 %v717, %v716
    %s719 = scalar_lea.vmem [#allocation2], 32
    %v720 = vld [vmem:[%s719] sm:$0xf]
    %v721 = vld [vmem:[%s719 + $0x4] sm:$0xf]
    %v722 = vld [vmem:[%s719 + $0x8] sm:$0xf]
    %v723 = vld [vmem:[%s719 + $0xc] sm:$0xf]
    %v724 = vld [vmem:[%s719 + $0x10] sm:$0xf]
    %v725 = vld [vmem:[%s719 + $0x14] sm:$0xf]
    %v726 = vld [vmem:[%s719 + $0x18] sm:$0xf]
    %v727 = vld [vmem:[%s719 + $0x1c] sm:$0xf]
    %v728 = vlaneseq
    %v729 = vshrl.u32 %v728, 7
    %v730 = vsub.s32 1, %v729
    %v731 = vrot.slane %v523, %v730
    %v740 = vunpack.c.l.b16 %v720
    %v741 = vunpack.c.l.b16 %v721
    %v742 = vunpack.c.l.b16 %v722
    %v743 = vunpack.c.l.b16 %v723
    %v744 = vunpack.c.l.b16 %v724
    %v745 = vunpack.c.l.b16 %v725
    %v746 = vunpack.c.l.b16 %v726
    %v747 = vunpack.c.l.b16 %v727
    %v748 = vpack.c.b16 %v741, %v740
    %v749 = vpack.c.b16 %v743, %v742
    %v750 = vpack.c.b16 %v745, %v744
    %v751 = vpack.c.b16 %v747, %v746
    %v757 = vsel %vm671, %v718, 0
    %759 = vmatprep.subr.bf16.mxu0 0
    %760 = vmatpush1.bf16.msra.mxu0 %v748
    %761 = vmatprep.subr.bf16.mxu0 0
    %762 = vmatpush1.bf16.msra.mxu0 %v749
    %763 = vmatprep.subr.bf16.mxu0 0
    %764 = vmatpush1.bf16.msra.mxu0 %v750
    %765 = vmatprep.subr.bf16.mxu0 0
    %766 = vmatpush1.bf16.msra.mxu0 %v751
    %767 = vmatprep.subr.bf16.mxu0 0
    %768 = vmatpush1.bf16.msra.mxu0 0
    %769 = vmatprep.subr.bf16.mxu0 0
    %770 = vmatpush1.bf16.msra.mxu0 0
    %771 = vmatprep.subr.bf16.mxu0 0
    %772 = vmatpush1.bf16.msra.mxu0 0
    %773 = vmatprep.subr.bf16.mxu0 0
    %774 = vmatpush1.bf16.msra.mxu0 0
    %775 = vmatprep.subr.bf16.mxu0 0
    %776 = vmatpush1.bf16.msra.mxu0 0
    %777 = vmatprep.subr.bf16.mxu0 0
    %778 = vmatpush1.bf16.msra.mxu0 0
    %779 = vmatprep.subr.bf16.mxu0 0
    %780 = vmatpush1.bf16.msra.mxu0 0
    %781 = vmatprep.subr.bf16.mxu0 0
    %782 = vmatpush1.bf16.msra.mxu0 0
    %783 = vmatprep.subr.bf16.mxu0 0
    %784 = vmatpush1.bf16.msra.mxu0 0
    %785 = vmatprep.subr.bf16.mxu0 0
    %786 = vmatpush1.bf16.msra.mxu0 0
    %787 = vmatprep.subr.bf16.mxu0 0
    %788 = vmatpush1.bf16.msra.mxu0 0
    %789 = vmatprep.subr.bf16.mxu0 0
    %790 = vmatpush1.bf16.msra.mxu0 0
    %791 = vmatprep.mubr.bf16.mxu0 0
    %792 = vmatmul.mubr.bf16.gmra.mrb[0].mxu0 %v757
    %v793 = vpop.f32.mrb[0].mxu0
    %v794 = vadd.f32 %v731, %v793
    %v795 = vpop.f32.mrb[0].mxu0
    %v796 = vpop.f32.mrb[0].mxu0
    %v797 = vadd.f32 %v731, %v796
    %v798 = vpop.f32.mrb[0].mxu0
    %799 = vdwg.mxu0
    %v800 = vmul.f32 %v794, %v794
    %v801 = vmul.f32 %v797, %v797
    %804 = vrot.lane.b32.xlu0 %v800, 64
    %v805 = vpop.permute.xlu0 %804
    %806 = vrot.lane.b32.xlu0 %v801, 64
    %v807 = vpop.permute.xlu0 %806
    %v810 = vsel %vm671, %v794, %v805
    %v811 = vsel %vm671, %v797, %v807
    %v812 = vadd.f32 %v810, %v811
    %v813 = vrot.slane %v812, 4
    %v814 = vadd.f32 %v812, %v813
    %v815 = vrot.slane %v814, 2
    %v816 = vadd.f32 %v814, %v815
    %v817 = vrot.slane %v816, 1
    %v818 = vadd.f32 %v816, %v817
    %v819 = vrcp.pop 16.0
    %v820 = vmul.f32 %v818, %v819
    %v821 = vmul.f32 %v820, %v820
    %823 = vrot.lane.b32.xlu0 %v821, 64
    %v824 = vpop.permute.xlu0 %823
    %v826 = vsub.f32 %v820, %v824
    %v827 = vmax.f32 %v826, 0.0
    %v828 = vsub.f32 %v794, %v820
    %v829 = vsub.f32 %v797, %v820
    %v830 = vadd.f32 %v827, 1e-05
    %v831 = vrsqrt.pop %v830
    %v832 = vlaneseq
    %v833 = vshrl.u32 %v832, 7
    %v834 = vsub.s32 0, %v833
    %v835 = vrot.slane %v831, %v834
    %837 = vrot.lane.b32.xlu0 %v835, 64
    %v838 = vpop.permute.xlu0 %837
    %v840 = vmul.f32 %v828, %v838
    %v841 = vmul.f32 %v829, %v838
    %v842 = vlaneseq
    %v843 = vshrl.u32 %v842, 7
    %v844 = vsub.s32 2, %v843
    %v845 = vrot.slane %v523, %v844
    %v846 = vmul.f32 %v840, %v845
    %v847 = vmul.f32 %v841, %v845
    %v848 = vlaneseq
    %v849 = vshrl.u32 %v848, 7
    %v850 = vsub.s32 3, %v849
    %v851 = vrot.slane %v523, %v850
    %v852 = vadd.f32 %v846, %v851
    %v853 = vadd.f32 %v847, %v851
    %v854 = vadd.f32 %v509, %v852
    %v855 = vadd.f32 %v512, %v853
    %s856 = scalar_lea.vmem %s6, 4
    %v857 = vld [vmem:[%s856] sm:$0xf]
    %v858 = vpack.c.bf16 %v855, %v854
    %859 = vmatprep.subr.bf16.mxu0 0
    %860 = vmatpush1.bf16.msra.mxu0 %v858
    %861 = vmatprep.subr.bf16.mxu0 0
    %862 = vmatpush1.bf16.msra.mxu0 0
    %863 = vmatprep.subr.bf16.mxu0 0
    %864 = vmatpush1.bf16.msra.mxu0 0
    %865 = vmatprep.subr.bf16.mxu0 0
    %866 = vmatpush1.bf16.msra.mxu0 0
    %867 = vmatprep.subr.bf16.mxu0 0
    %868 = vmatpush1.bf16.msra.mxu0 0
    %869 = vmatprep.subr.bf16.mxu0 0
    %870 = vmatpush1.bf16.msra.mxu0 0
    %871 = vmatprep.subr.bf16.mxu0 0
    %872 = vmatpush1.bf16.msra.mxu0 0
    %873 = vmatprep.subr.bf16.mxu0 0
    %874 = vmatpush1.bf16.msra.mxu0 0
    %875 = vmatprep.subr.bf16.mxu0 0
    %876 = vmatpush1.bf16.msra.mxu0 0
    %877 = vmatprep.subr.bf16.mxu0 0
    %878 = vmatpush1.bf16.msra.mxu0 0
    %879 = vmatprep.subr.bf16.mxu0 0
    %880 = vmatpush1.bf16.msra.mxu0 0
    %881 = vmatprep.subr.bf16.mxu0 0
    %882 = vmatpush1.bf16.msra.mxu0 0
    %883 = vmatprep.subr.bf16.mxu0 0
    %884 = vmatpush1.bf16.msra.mxu0 0
    %885 = vmatprep.subr.bf16.mxu0 0
    %886 = vmatpush1.bf16.msra.mxu0 0
    %887 = vmatprep.subr.bf16.mxu0 0
    %888 = vmatpush1.bf16.msra.mxu0 0
    %889 = vmatprep.subr.bf16.mxu0 0
    %890 = vmatpush1.bf16.msra.mxu0 0
    %891 = vmatprep.mubr.bf16.mxu0 0
    %892 = vmatmul.mubr.bf16.gmra.mrb[0].mxu0 %v527
    %v893 = vpop.f32.mrb[0].mxu0
    %v894 = vadd.f32 %v116, %v893
    %v895 = vpop.f32.mrb[0].mxu0
    %v896 = vpop.f32.mrb[0].mxu0
    %v897 = vadd.f32 %v117, %v896
    %v898 = vpop.f32.mrb[0].mxu0
    %899 = vmatprep.mubr.bf16.mxu0 0
    %900 = vmatmul.mubr.bf16.gmra.mrb[0].mxu0 %v530
    %v901 = vpop.f32.mrb[0].mxu0
    %v902 = vadd.f32 %v118, %v901
    %v903 = vpop.f32.mrb[0].mxu0
    %v904 = vpop.f32.mrb[0].mxu0
    %v905 = vadd.f32 %v119, %v904
    %v906 = vpop.f32.mrb[0].mxu0
    %907 = vdwg.mxu0
    %v908 = vmax.f32 %v894, 0.0
    %v909 = vmax.f32 %v897, 0.0
    %v910 = vmax.f32 %v902, 0.0
    %v911 = vmax.f32 %v905, 0.0
    %v912 = vpack.c.bf16 %v909, %v908
    %v913 = vpack.c.bf16 %v911, %v910
    %914 = vmatprep.subr.bf16.mxu0 0
    %915 = vmatpush1.bf16.msra.mxu0 %v912
    %916 = vmatprep.subr.bf16.mxu0 0
    %917 = vmatpush1.bf16.msra.mxu0 %v913
    %918 = vmatprep.subr.bf16.mxu0 0
    %919 = vmatpush1.bf16.msra.mxu0 0
    %920 = vmatprep.subr.bf16.mxu0 0
    %921 = vmatpush1.bf16.msra.mxu0 0
    %922 = vmatprep.subr.bf16.mxu0 0
    %923 = vmatpush1.bf16.msra.mxu0 0
    %924 = vmatprep.subr.bf16.mxu0 0
    %925 = vmatpush1.bf16.msra.mxu0 0
    %926 = vmatprep.subr.bf16.mxu0 0
    %927 = vmatpush1.bf16.msra.mxu0 0
    %928 = vmatprep.subr.bf16.mxu0 0
    %929 = vmatpush1.bf16.msra.mxu0 0
    %930 = vmatprep.subr.bf16.mxu0 0
    %931 = vmatpush1.bf16.msra.mxu0 0
    %932 = vmatprep.subr.bf16.mxu0 0
    %933 = vmatpush1.bf16.msra.mxu0 0
    %934 = vmatprep.subr.bf16.mxu0 0
    %935 = vmatpush1.bf16.msra.mxu0 0
    %936 = vmatprep.subr.bf16.mxu0 0
    %937 = vmatpush1.bf16.msra.mxu0 0
    %938 = vmatprep.subr.bf16.mxu0 0
    %939 = vmatpush1.bf16.msra.mxu0 0
    %940 = vmatprep.subr.bf16.mxu0 0
    %941 = vmatpush1.bf16.msra.mxu0 0
    %942 = vmatprep.subr.bf16.mxu0 0
    %943 = vmatpush1.bf16.msra.mxu0 0
    %944 = vmatprep.subr.bf16.mxu0 0
    %945 = vmatpush1.bf16.msra.mxu0 0
    %946 = vmatprep.mubr.bf16.mxu0 0
    %947 = vmatmul.mubr.bf16.gmra.mrb[0].mxu0 %v589
    %v948 = vpop.f32.mrb[0].mxu0
    %v949 = vadd.f32 0.0, %v948
    %v950 = vpop.f32.mrb[0].mxu0
    %v951 = vpop.f32.mrb[0].mxu0
    %v952 = vadd.f32 0.0, %v951
    %v953 = vpop.f32.mrb[0].mxu0
    %954 = vdwg.mxu0
    %v955 = vadd.f32 %v854, %v949
    %v956 = vadd.f32 %v855, %v952
    %v957 = vpack.c.bf16 %v956, %v955
    %s958 = scalar_lea.vmem [#allocation2], 64
    %v959 = vld [vmem:[%s958] sm:$0xf]
    %v960 = vld [vmem:[%s958 + $0x4] sm:$0xf]
    %v961 = vld [vmem:[%s958 + $0x8] sm:$0xf]
    %v962 = vld [vmem:[%s958 + $0xc] sm:$0xf]
    %v963 = vld [vmem:[%s958 + $0x10] sm:$0xf]
    %v964 = vld [vmem:[%s958 + $0x14] sm:$0xf]
    %v965 = vld [vmem:[%s958 + $0x18] sm:$0xf]
    %v966 = vld [vmem:[%s958 + $0x1c] sm:$0xf]
    %v967 = vlaneseq
    %v968 = vshrl.u32 %v967, 7
    %v969 = vsub.s32 0, %v968
    %v970 = vrot.slane %v857, %v969
    %v979 = vunpack.c.l.b16 %v959
    %v980 = vunpack.c.l.b16 %v960
    %v981 = vunpack.c.l.b16 %v961
    %v982 = vunpack.c.l.b16 %v962
    %v983 = vunpack.c.l.b16 %v963
    %v984 = vunpack.c.l.b16 %v964
    %v985 = vunpack.c.l.b16 %v965
    %v986 = vunpack.c.l.b16 %v966
    %v987 = vpack.c.b16 %v980, %v979
    %v988 = vpack.c.b16 %v982, %v981
    %v989 = vpack.c.b16 %v984, %v983
    %v990 = vpack.c.b16 %v986, %v985
    %v996 = vsel %vm671, %v957, 0
    %998 = vmatprep.subr.bf16.mxu0 0
    %999 = vmatpush1.bf16.msra.mxu0 %v987
    %1000 = vmatprep.subr.bf16.mxu0 0
    %1001 = vmatpush1.bf16.msra.mxu0 %v988
    %1002 = vmatprep.subr.bf16.mxu0 0
    %1003 = vmatpush1.bf16.msra.mxu0 %v989
    %1004 = vmatprep.subr.bf16.mxu0 0
    %1005 = vmatpush1.bf16.msra.mxu0 %v990
    %1006 = vmatprep.subr.bf16.mxu0 0
    %1007 = vmatpush1.bf16.msra.mxu0 0
    %1008 = vmatprep.subr.bf16.mxu0 0
    %1009 = vmatpush1.bf16.msra.mxu0 0
    %1010 = vmatprep.subr.bf16.mxu0 0
    %1011 = vmatpush1.bf16.msra.mxu0 0
    %1012 = vmatprep.subr.bf16.mxu0 0
    %1013 = vmatpush1.bf16.msra.mxu0 0
    %1014 = vmatprep.subr.bf16.mxu0 0
    %1015 = vmatpush1.bf16.msra.mxu0 0
    %1016 = vmatprep.subr.bf16.mxu0 0
    %1017 = vmatpush1.bf16.msra.mxu0 0
    %1018 = vmatprep.subr.bf16.mxu0 0
    %1019 = vmatpush1.bf16.msra.mxu0 0
    %1020 = vmatprep.subr.bf16.mxu0 0
    %1021 = vmatpush1.bf16.msra.mxu0 0
    %1022 = vmatprep.subr.bf16.mxu0 0
    %1023 = vmatpush1.bf16.msra.mxu0 0
    %1024 = vmatprep.subr.bf16.mxu0 0
    %1025 = vmatpush1.bf16.msra.mxu0 0
    %1026 = vmatprep.subr.bf16.mxu0 0
    %1027 = vmatpush1.bf16.msra.mxu0 0
    %1028 = vmatprep.subr.bf16.mxu0 0
    %1029 = vmatpush1.bf16.msra.mxu0 0
    %1030 = vmatprep.mubr.bf16.mxu0 0
    %1031 = vmatmul.mubr.bf16.gmra.mrb[0].mxu0 %v996
    %v1032 = vpop.f32.mrb[0].mxu0
    %v1033 = vadd.f32 %v970, %v1032
    %v1034 = vpop.f32.mrb[0].mxu0
    %v1035 = vpop.f32.mrb[0].mxu0
    %v1036 = vadd.f32 %v970, %v1035
    %v1037 = vpop.f32.mrb[0].mxu0
    %1038 = vdwg.mxu0
    %v1039 = vmax.f32 %v1033, 0.0
    %v1040 = vmax.f32 %v1036, 0.0
    %v1041 = vpack.c.bf16 %v1040, %v1039
    %s1042 = scalar_lea.vmem [#allocation2], 96
    %v1043 = vld [vmem:[%s1042] sm:$0xf]
    %v1044 = vld [vmem:[%s1042 + $0x4] sm:$0xf]
    %v1045 = vld [vmem:[%s1042 + $0x8] sm:$0xf]
    %v1046 = vld [vmem:[%s1042 + $0xc] sm:$0xf]
    %v1047 = vld [vmem:[%s1042 + $0x10] sm:$0xf]
    %v1048 = vld [vmem:[%s1042 + $0x14] sm:$0xf]
    %v1049 = vld [vmem:[%s1042 + $0x18] sm:$0xf]
    %v1050 = vld [vmem:[%s1042 + $0x1c] sm:$0xf]
    %v1051 = vlaneseq
    %v1052 = vshrl.u32 %v1051, 7
    %v1053 = vsub.s32 1, %v1052
    %v1054 = vrot.slane %v857, %v1053
    %v1063 = vunpack.c.l.b16 %v1043
    %v1064 = vunpack.c.l.b16 %v1044
    %v1065 = vunpack.c.l.b16 %v1045
    %v1066 = vunpack.c.l.b16 %v1046
    %v1067 = vunpack.c.l.b16 %v1047
    %v1068 = vunpack.c.l.b16 %v1048
    %v1069 = vunpack.c.l.b16 %v1049
    %v1070 = vunpack.c.l.b16 %v1050
    %v1071 = vpack.c.b16 %v1064, %v1063
    %v1072 = vpack.c.b16 %v1066, %v1065
    %v1073 = vpack.c.b16 %v1068, %v1067
    %v1074 = vpack.c.b16 %v1070, %v1069
    %v1080 = vsel %vm671, %v1041, 0
    %1082 = vmatprep.subr.bf16.mxu0 0
    %1083 = vmatpush1.bf16.msra.mxu0 %v1071
    %1084 = vmatprep.subr.bf16.mxu0 0
    %1085 = vmatpush1.bf16.msra.mxu0 %v1072
    %1086 = vmatprep.subr.bf16.mxu0 0
    %1087 = vmatpush1.bf16.msra.mxu0 %v1073
    %1088 = vmatprep.subr.bf16.mxu0 0
    %1089 = vmatpush1.bf16.msra.mxu0 %v1074
    %1090 = vmatprep.subr.bf16.mxu0 0
    %1091 = vmatpush1.bf16.msra.mxu0 0
    %1092 = vmatprep.subr.bf16.mxu0 0
    %1093 = vmatpush1.bf16.msra.mxu0 0
    %1094 = vmatprep.subr.bf16.mxu0 0
    %1095 = vmatpush1.bf16.msra.mxu0 0
    %1096 = vmatprep.subr.bf16.mxu0 0
    %1097 = vmatpush1.bf16.msra.mxu0 0
    %1098 = vmatprep.subr.bf16.mxu0 0
    %1099 = vmatpush1.bf16.msra.mxu0 0
    %1100 = vmatprep.subr.bf16.mxu0 0
    %1101 = vmatpush1.bf16.msra.mxu0 0
    %1102 = vmatprep.subr.bf16.mxu0 0
    %1103 = vmatpush1.bf16.msra.mxu0 0
    %1104 = vmatprep.subr.bf16.mxu0 0
    %1105 = vmatpush1.bf16.msra.mxu0 0
    %1106 = vmatprep.subr.bf16.mxu0 0
    %1107 = vmatpush1.bf16.msra.mxu0 0
    %1108 = vmatprep.subr.bf16.mxu0 0
    %1109 = vmatpush1.bf16.msra.mxu0 0
    %1110 = vmatprep.subr.bf16.mxu0 0
    %1111 = vmatpush1.bf16.msra.mxu0 0
    %1112 = vmatprep.subr.bf16.mxu0 0
    %1113 = vmatpush1.bf16.msra.mxu0 0
    %1114 = vmatprep.mubr.bf16.mxu0 0
    %1115 = vmatmul.mubr.bf16.gmra.mrb[0].mxu0 %v1080
    %v1116 = vpop.f32.mrb[0].mxu0
    %v1117 = vadd.f32 %v1054, %v1116
    %v1118 = vpop.f32.mrb[0].mxu0
    %v1119 = vpop.f32.mrb[0].mxu0
    %v1120 = vadd.f32 %v1054, %v1119
    %v1121 = vpop.f32.mrb[0].mxu0
    %1122 = vdwg.mxu0
    %v1123 = vmul.f32 %v1117, %v1117
    %v1124 = vmul.f32 %v1120, %v1120
    %1127 = vrot.lane.b32.xlu0 %v1123, 64
    %v1128 = vpop.permute.xlu0 %1127
    %1129 = vrot.lane.b32.xlu0 %v1124, 64
    %v1130 = vpop.permute.xlu0 %1129
    %v1133 = vsel %vm671, %v1117, %v1128
    %v1134 = vsel %vm671, %v1120, %v1130
    %v1135 = vadd.f32 %v1133, %v1134
    %v1136 = vrot.slane %v1135, 4
    %v1137 = vadd.f32 %v1135, %v1136
    %v1138 = vrot.slane %v1137, 2
    %v1139 = vadd.f32 %v1137, %v1138
    %v1140 = vrot.slane %v1139, 1
    %v1141 = vadd.f32 %v1139, %v1140
    %v1142 = vmul.f32 %v1141, %v819
    %v1143 = vmul.f32 %v1142, %v1142
    %1145 = vrot.lane.b32.xlu0 %v1143, 64
    %v1146 = vpop.permute.xlu0 %1145
    %v1148 = vsub.f32 %v1142, %v1146
    %v1149 = vmax.f32 %v1148, 0.0
    %v1150 = vsub.f32 %v1117, %v1142
    %v1151 = vsub.f32 %v1120, %v1142
    %v1152 = vadd.f32 %v1149, 1e-05
    %v1153 = vrsqrt.pop %v1152
    %v1154 = vlaneseq
    %v1155 = vshrl.u32 %v1154, 7
    %v1156 = vsub.s32 0, %v1155
    %v1157 = vrot.slane %v1153, %v1156
    %1159 = vrot.lane.b32.xlu0 %v1157, 64
    %v1160 = vpop.permute.xlu0 %1159
    %v1162 = vmul.f32 %v1150, %v1160
    %v1163 = vmul.f32 %v1151, %v1160
    %v1164 = vlaneseq
    %v1165 = vshrl.u32 %v1164, 7
    %v1166 = vsub.s32 2, %v1165
    %v1167 = vrot.slane %v857, %v1166
    %v1168 = vmul.f32 %v1162, %v1167
    %v1169 = vmul.f32 %v1163, %v1167
    %v1170 = vlaneseq
    %v1171 = vshrl.u32 %v1170, 7
    %v1172 = vsub.s32 3, %v1171
    %v1173 = vrot.slane %v857, %v1172
    %v1174 = vadd.f32 %v1168, %v1173
    %v1175 = vadd.f32 %v1169, %v1173
    %v1176 = vadd.f32 %v854, %v1174
    %v1177 = vadd.f32 %v855, %v1175
    %s1178 = scalar_lea.vmem %s6, 8
    %v1179 = vld [vmem:[%s1178] sm:$0xf]
    %v1180 = vpack.c.bf16 %v1177, %v1176
    %1181 = vmatprep.subr.bf16.mxu0 0
    %1182 = vmatpush1.bf16.msra.mxu0 %v1180
    %1183 = vmatprep.subr.bf16.mxu0 0
    %1184 = vmatpush1.bf16.msra.mxu0 0
    %1185 = vmatprep.subr.bf16.mxu0 0
    %1186 = vmatpush1.bf16.msra.mxu0 0
    %1187 = vmatprep.subr.bf16.mxu0 0
    %1188 = vmatpush1.bf16.msra.mxu0 0
    %1189 = vmatprep.subr.bf16.mxu0 0
    %1190 = vmatpush1.bf16.msra.mxu0 0
    %1191 = vmatprep.subr.bf16.mxu0 0
    %1192 = vmatpush1.bf16.msra.mxu0 0
    %1193 = vmatprep.subr.bf16.mxu0 0
    %1194 = vmatpush1.bf16.msra.mxu0 0
    %1195 = vmatprep.subr.bf16.mxu0 0
    %1196 = vmatpush1.bf16.msra.mxu0 0
    %1197 = vmatprep.subr.bf16.mxu0 0
    %1198 = vmatpush1.bf16.msra.mxu0 0
    %1199 = vmatprep.subr.bf16.mxu0 0
    %1200 = vmatpush1.bf16.msra.mxu0 0
    %1201 = vmatprep.subr.bf16.mxu0 0
    %1202 = vmatpush1.bf16.msra.mxu0 0
    %1203 = vmatprep.subr.bf16.mxu0 0
    %1204 = vmatpush1.bf16.msra.mxu0 0
    %1205 = vmatprep.subr.bf16.mxu0 0
    %1206 = vmatpush1.bf16.msra.mxu0 0
    %1207 = vmatprep.subr.bf16.mxu0 0
    %1208 = vmatpush1.bf16.msra.mxu0 0
    %1209 = vmatprep.subr.bf16.mxu0 0
    %1210 = vmatpush1.bf16.msra.mxu0 0
    %1211 = vmatprep.subr.bf16.mxu0 0
    %1212 = vmatpush1.bf16.msra.mxu0 0
    %1213 = vmatprep.mubr.bf16.mxu0 0
    %1214 = vmatmul.mubr.bf16.gmra.mrb[0].mxu0 %v527
    %v1215 = vpop.f32.mrb[0].mxu0
    %v1216 = vadd.f32 %v116, %v1215
    %v1217 = vpop.f32.mrb[0].mxu0
    %v1218 = vpop.f32.mrb[0].mxu0
    %v1219 = vadd.f32 %v117, %v1218
    %v1220 = vpop.f32.mrb[0].mxu0
    %1221 = vmatprep.mubr.bf16.mxu0 0
    %1222 = vmatmul.mubr.bf16.gmra.mrb[0].mxu0 %v530
    %v1223 = vpop.f32.mrb[0].mxu0
    %v1224 = vadd.f32 %v118, %v1223
    %v1225 = vpop.f32.mrb[0].mxu0
    %v1226 = vpop.f32.mrb[0].mxu0
    %v1227 = vadd.f32 %v119, %v1226
    %v1228 = vpop.f32.mrb[0].mxu0
    %1229 = vdwg.mxu0
    %v1230 = vmax.f32 %v1216, 0.0
    %v1231 = vmax.f32 %v1219, 0.0
    %v1232 = vmax.f32 %v1224, 0.0
    %v1233 = vmax.f32 %v1227, 0.0
    %v1234 = vpack.c.bf16 %v1231, %v1230
    %v1235 = vpack.c.bf16 %v1233, %v1232
    %1236 = vmatprep.subr.bf16.mxu0 0
    %1237 = vmatpush1.bf16.msra.mxu0 %v1234
    %1238 = vmatprep.subr.bf16.mxu0 0
    %1239 = vmatpush1.bf16.msra.mxu0 %v1235
    %1240 = vmatprep.subr.bf16.mxu0 0
    %1241 = vmatpush1.bf16.msra.mxu0 0
    %1242 = vmatprep.subr.bf16.mxu0 0
    %1243 = vmatpush1.bf16.msra.mxu0 0
    %1244 = vmatprep.subr.bf16.mxu0 0
    %1245 = vmatpush1.bf16.msra.mxu0 0
    %1246 = vmatprep.subr.bf16.mxu0 0
    %1247 = vmatpush1.bf16.msra.mxu0 0
    %1248 = vmatprep.subr.bf16.mxu0 0
    %1249 = vmatpush1.bf16.msra.mxu0 0
    %1250 = vmatprep.subr.bf16.mxu0 0
    %1251 = vmatpush1.bf16.msra.mxu0 0
    %1252 = vmatprep.subr.bf16.mxu0 0
    %1253 = vmatpush1.bf16.msra.mxu0 0
    %1254 = vmatprep.subr.bf16.mxu0 0
    %1255 = vmatpush1.bf16.msra.mxu0 0
    %1256 = vmatprep.subr.bf16.mxu0 0
    %1257 = vmatpush1.bf16.msra.mxu0 0
    %1258 = vmatprep.subr.bf16.mxu0 0
    %1259 = vmatpush1.bf16.msra.mxu0 0
    %1260 = vmatprep.subr.bf16.mxu0 0
    %1261 = vmatpush1.bf16.msra.mxu0 0
    %1262 = vmatprep.subr.bf16.mxu0 0
    %1263 = vmatpush1.bf16.msra.mxu0 0
    %1264 = vmatprep.subr.bf16.mxu0 0
    %1265 = vmatpush1.bf16.msra.mxu0 0
    %1266 = vmatprep.subr.bf16.mxu0 0
    %1267 = vmatpush1.bf16.msra.mxu0 0
    %1268 = vmatprep.mubr.bf16.mxu0 0
    %1269 = vmatmul.mubr.bf16.gmra.mrb[0].mxu0 %v589
    %v1270 = vpop.f32.mrb[0].mxu0
    %v1271 = vadd.f32 0.0, %v1270
    %v1272 = vpop.f32.mrb[0].mxu0
    %v1273 = vpop.f32.mrb[0].mxu0
    %v1274 = vadd.f32 0.0, %v1273
    %v1275 = vpop.f32.mrb[0].mxu0
    %1276 = vdwg.mxu0
    %v1277 = vadd.f32 %v1176, %v1271
    %v1278 = vadd.f32 %v1177, %v1274
    %v1279 = vpack.c.bf16 %v1278, %v1277
    %s1280 = scalar_lea.vmem [#allocation2], 128
    %v1281 = vld [vmem:[%s1280] sm:$0xf]
    %v1282 = vld [vmem:[%s1280 + $0x4] sm:$0xf]
    %v1283 = vld [vmem:[%s1280 + $0x8] sm:$0xf]
    %v1284 = vld [vmem:[%s1280 + $0xc] sm:$0xf]
    %v1285 = vld [vmem:[%s1280 + $0x10] sm:$0xf]
    %v1286 = vld [vmem:[%s1280 + $0x14] sm:$0xf]
    %v1287 = vld [vmem:[%s1280 + $0x18] sm:$0xf]
    %v1288 = vld [vmem:[%s1280 + $0x1c] sm:$0xf]
    %v1289 = vlaneseq
    %v1290 = vshrl.u32 %v1289, 7
    %v1291 = vsub.s32 0, %v1290
    %v1292 = vrot.slane %v1179, %v1291
    %v1301 = vunpack.c.l.b16 %v1281
    %v1302 = vunpack.c.l.b16 %v1282
    %v1303 = vunpack.c.l.b16 %v1283
    %v1304 = vunpack.c.l.b16 %v1284
    %v1305 = vunpack.c.l.b16 %v1285
    %v1306 = vunpack.c.l.b16 %v1286
    %v1307 = vunpack.c.l.b16 %v1287
    %v1308 = vunpack.c.l.b16 %v1288
    %v1309 = vpack.c.b16 %v1302, %v1301
    %v1310 = vpack.c.b16 %v1304, %v1303
    %v1311 = vpack.c.b16 %v1306, %v1305
    %v1312 = vpack.c.b16 %v1308, %v1307
    %v1318 = vsel %vm671, %v1279, 0
    %1320 = vmatprep.subr.bf16.mxu0 0
    %1321 = vmatpush1.bf16.msra.mxu0 %v1309
    %1322 = vmatprep.subr.bf16.mxu0 0
    %1323 = vmatpush1.bf16.msra.mxu0 %v1310
    %1324 = vmatprep.subr.bf16.mxu0 0
    %1325 = vmatpush1.bf16.msra.mxu0 %v1311
    %1326 = vmatprep.subr.bf16.mxu0 0
    %1327 = vmatpush1.bf16.msra.mxu0 %v1312
    %1328 = vmatprep.subr.bf16.mxu0 0
    %1329 = vmatpush1.bf16.msra.mxu0 0
    %1330 = vmatprep.subr.bf16.mxu0 0
    %1331 = vmatpush1.bf16.msra.mxu0 0
    %1332 = vmatprep.subr.bf16.mxu0 0
    %1333 = vmatpush1.bf16.msra.mxu0 0
    %1334 = vmatprep.subr.bf16.mxu0 0
    %1335 = vmatpush1.bf16.msra.mxu0 0
    %1336 = vmatprep.subr.bf16.mxu0 0
    %1337 = vmatpush1.bf16.msra.mxu0 0
    %1338 = vmatprep.subr.bf16.mxu0 0
    %1339 = vmatpush1.bf16.msra.mxu0 0
    %1340 = vmatprep.subr.bf16.mxu0 0
    %1341 = vmatpush1.bf16.msra.mxu0 0
    %1342 = vmatprep.subr.bf16.mxu0 0
    %1343 = vmatpush1.bf16.msra.mxu0 0
    %1344 = vmatprep.subr.bf16.mxu0 0
    %1345 = vmatpush1.bf16.msra.mxu0 0
    %1346 = vmatprep.subr.bf16.mxu0 0
    %1347 = vmatpush1.bf16.msra.mxu0 0
    %1348 = vmatprep.subr.bf16.mxu0 0
    %1349 = vmatpush1.bf16.msra.mxu0 0
    %1350 = vmatprep.subr.bf16.mxu0 0
    %1351 = vmatpush1.bf16.msra.mxu0 0
    %1352 = vmatprep.mubr.bf16.mxu0 0
    %1353 = vmatmul.mubr.bf16.gmra.mrb[0].mxu0 %v1318
    %v1354 = vpop.f32.mrb[0].mxu0
    %v1355 = vadd.f32 %v1292, %v1354
    %v1356 = vpop.f32.mrb[0].mxu0
    %v1357 = vpop.f32.mrb[0].mxu0
    %v1358 = vadd.f32 %v1292, %v1357
    %v1359 = vpop.f32.mrb[0].mxu0
    %1360 = vdwg.mxu0
    %v1361 = vmax.f32 %v1355, 0.0
    %v1362 = vmax.f32 %v1358, 0.0
    %v1363 = vpack.c.bf16 %v1362, %v1361
    %s1364 = scalar_lea.vmem [#allocation2], 160
    %v1365 = vld [vmem:[%s1364] sm:$0xf]
    %v1366 = vld [vmem:[%s1364 + $0x4] sm:$0xf]
    %v1367 = vld [vmem:[%s1364 + $0x8] sm:$0xf]
    %v1368 = vld [vmem:[%s1364 + $0xc] sm:$0xf]
    %v1369 = vld [vmem:[%s1364 + $0x10] sm:$0xf]
    %v1370 = vld [vmem:[%s1364 + $0x14] sm:$0xf]
    %v1371 = vld [vmem:[%s1364 + $0x18] sm:$0xf]
    %v1372 = vld [vmem:[%s1364 + $0x1c] sm:$0xf]
    %v1373 = vlaneseq
    %v1374 = vshrl.u32 %v1373, 7
    %v1375 = vsub.s32 1, %v1374
    %v1376 = vrot.slane %v1179, %v1375
    %v1385 = vunpack.c.l.b16 %v1365
    %v1386 = vunpack.c.l.b16 %v1366
    %v1387 = vunpack.c.l.b16 %v1367
    %v1388 = vunpack.c.l.b16 %v1368
    %v1389 = vunpack.c.l.b16 %v1369
    %v1390 = vunpack.c.l.b16 %v1370
    %v1391 = vunpack.c.l.b16 %v1371
    %v1392 = vunpack.c.l.b16 %v1372
    %v1393 = vpack.c.b16 %v1386, %v1385
    %v1394 = vpack.c.b16 %v1388, %v1387
    %v1395 = vpack.c.b16 %v1390, %v1389
    %v1396 = vpack.c.b16 %v1392, %v1391
    %v1402 = vsel %vm671, %v1363, 0
    %1404 = vmatprep.subr.bf16.mxu0 0
    %1405 = vmatpush1.bf16.msra.mxu0 %v1393
    %1406 = vmatprep.subr.bf16.mxu0 0
    %1407 = vmatpush1.bf16.msra.mxu0 %v1394
    %1408 = vmatprep.subr.bf16.mxu0 0
    %1409 = vmatpush1.bf16.msra.mxu0 %v1395
    %1410 = vmatprep.subr.bf16.mxu0 0
    %1411 = vmatpush1.bf16.msra.mxu0 %v1396
    %1412 = vmatprep.subr.bf16.mxu0 0
    %1413 = vmatpush1.bf16.msra.mxu0 0
    %1414 = vmatprep.subr.bf16.mxu0 0
    %1415 = vmatpush1.bf16.msra.mxu0 0
    %1416 = vmatprep.subr.bf16.mxu0 0
    %1417 = vmatpush1.bf16.msra.mxu0 0
    %1418 = vmatprep.subr.bf16.mxu0 0
    %1419 = vmatpush1.bf16.msra.mxu0 0
    %1420 = vmatprep.subr.bf16.mxu0 0
    %1421 = vmatpush1.bf16.msra.mxu0 0
    %1422 = vmatprep.subr.bf16.mxu0 0
    %1423 = vmatpush1.bf16.msra.mxu0 0
    %1424 = vmatprep.subr.bf16.mxu0 0
    %1425 = vmatpush1.bf16.msra.mxu0 0
    %1426 = vmatprep.subr.bf16.mxu0 0
    %1427 = vmatpush1.bf16.msra.mxu0 0
    %1428 = vmatprep.subr.bf16.mxu0 0
    %1429 = vmatpush1.bf16.msra.mxu0 0
    %1430 = vmatprep.subr.bf16.mxu0 0
    %1431 = vmatpush1.bf16.msra.mxu0 0
    %1432 = vmatprep.subr.bf16.mxu0 0
    %1433 = vmatpush1.bf16.msra.mxu0 0
    %1434 = vmatprep.subr.bf16.mxu0 0
    %1435 = vmatpush1.bf16.msra.mxu0 0
    %1436 = vmatprep.mubr.bf16.mxu0 0
    %1437 = vmatmul.mubr.bf16.gmra.mrb[0].mxu0 %v1402
    %v1438 = vpop.f32.mrb[0].mxu0
    %v1439 = vadd.f32 %v1376, %v1438
    %v1440 = vpop.f32.mrb[0].mxu0
    %v1441 = vpop.f32.mrb[0].mxu0
    %v1442 = vadd.f32 %v1376, %v1441
    %v1443 = vpop.f32.mrb[0].mxu0
    %1444 = vdwg.mxu0
    %v1445 = vmul.f32 %v1439, %v1439
    %v1446 = vmul.f32 %v1442, %v1442
    %1449 = vrot.lane.b32.xlu0 %v1445, 64
    %v1450 = vpop.permute.xlu0 %1449
    %1451 = vrot.lane.b32.xlu0 %v1446, 64
    %v1452 = vpop.permute.xlu0 %1451
    %v1455 = vsel %vm671, %v1439, %v1450
    %v1456 = vsel %vm671, %v1442, %v1452
    %v1457 = vadd.f32 %v1455, %v1456
    %v1458 = vrot.slane %v1457, 4
    %v1459 = vadd.f32 %v1457, %v1458
    %v1460 = vrot.slane %v1459, 2
    %v1461 = vadd.f32 %v1459, %v1460
    %v1462 = vrot.slane %v1461, 1
    %v1463 = vadd.f32 %v1461, %v1462
    %v1464 = vmul.f32 %v1463, %v819
    %v1465 = vmul.f32 %v1464, %v1464
    %1467 = vrot.lane.b32.xlu0 %v1465, 64
    %v1468 = vpop.permute.xlu0 %1467
    %v1470 = vsub.f32 %v1464, %v1468
    %v1471 = vmax.f32 %v1470, 0.0
    %v1472 = vsub.f32 %v1439, %v1464
    %v1473 = vsub.f32 %v1442, %v1464
    %v1474 = vadd.f32 %v1471, 1e-05
    %v1475 = vrsqrt.pop %v1474
    %v1476 = vlaneseq
    %v1477 = vshrl.u32 %v1476, 7
    %v1478 = vsub.s32 0, %v1477
    %v1479 = vrot.slane %v1475, %v1478
    %1481 = vrot.lane.b32.xlu0 %v1479, 64
    %v1482 = vpop.permute.xlu0 %1481
    %v1484 = vmul.f32 %v1472, %v1482
    %v1485 = vmul.f32 %v1473, %v1482
    %v1486 = vlaneseq
    %v1487 = vshrl.u32 %v1486, 7
    %v1488 = vsub.s32 2, %v1487
    %v1489 = vrot.slane %v1179, %v1488
    %v1490 = vmul.f32 %v1484, %v1489
    %v1491 = vmul.f32 %v1485, %v1489
    %v1492 = vlaneseq
    %v1493 = vshrl.u32 %v1492, 7
    %v1494 = vsub.s32 3, %v1493
    %v1495 = vrot.slane %v1179, %v1494
    %v1496 = vadd.f32 %v1490, %v1495
    %v1497 = vadd.f32 %v1491, %v1495
    %v1498 = vadd.f32 %v1176, %v1496
    %v1499 = vadd.f32 %v1177, %v1497
    %s1500 = scalar_lea.vmem %s6, 12
    %v1501 = vld [vmem:[%s1500] sm:$0xf]
    %v1502 = vpack.c.bf16 %v1499, %v1498
    %1503 = vmatprep.subr.bf16.mxu0 0
    %1504 = vmatpush1.bf16.msra.mxu0 %v1502
    %1505 = vmatprep.subr.bf16.mxu0 0
    %1506 = vmatpush1.bf16.msra.mxu0 0
    %1507 = vmatprep.subr.bf16.mxu0 0
    %1508 = vmatpush1.bf16.msra.mxu0 0
    %1509 = vmatprep.subr.bf16.mxu0 0
    %1510 = vmatpush1.bf16.msra.mxu0 0
    %1511 = vmatprep.subr.bf16.mxu0 0
    %1512 = vmatpush1.bf16.msra.mxu0 0
    %1513 = vmatprep.subr.bf16.mxu0 0
    %1514 = vmatpush1.bf16.msra.mxu0 0
    %1515 = vmatprep.subr.bf16.mxu0 0
    %1516 = vmatpush1.bf16.msra.mxu0 0
    %1517 = vmatprep.subr.bf16.mxu0 0
    %1518 = vmatpush1.bf16.msra.mxu0 0
    %1519 = vmatprep.subr.bf16.mxu0 0
    %1520 = vmatpush1.bf16.msra.mxu0 0
    %1521 = vmatprep.subr.bf16.mxu0 0
    %1522 = vmatpush1.bf16.msra.mxu0 0
    %1523 = vmatprep.subr.bf16.mxu0 0
    %1524 = vmatpush1.bf16.msra.mxu0 0
    %1525 = vmatprep.subr.bf16.mxu0 0
    %1526 = vmatpush1.bf16.msra.mxu0 0
    %1527 = vmatprep.subr.bf16.mxu0 0
    %1528 = vmatpush1.bf16.msra.mxu0 0
    %1529 = vmatprep.subr.bf16.mxu0 0
    %1530 = vmatpush1.bf16.msra.mxu0 0
    %1531 = vmatprep.subr.bf16.mxu0 0
    %1532 = vmatpush1.bf16.msra.mxu0 0
    %1533 = vmatprep.subr.bf16.mxu0 0
    %1534 = vmatpush1.bf16.msra.mxu0 0
    %1535 = vmatprep.mubr.bf16.mxu0 0
    %1536 = vmatmul.mubr.bf16.gmra.mrb[0].mxu0 %v527
    %v1537 = vpop.f32.mrb[0].mxu0
    %v1538 = vadd.f32 %v116, %v1537
    %v1539 = vpop.f32.mrb[0].mxu0
    %v1540 = vpop.f32.mrb[0].mxu0
    %v1541 = vadd.f32 %v117, %v1540
    %v1542 = vpop.f32.mrb[0].mxu0
    %1543 = vmatprep.mubr.bf16.mxu0 0
    %1544 = vmatmul.mubr.bf16.gmra.mrb[0].mxu0 %v530
    %v1545 = vpop.f32.mrb[0].mxu0
    %v1546 = vadd.f32 %v118, %v1545
    %v1547 = vpop.f32.mrb[0].mxu0
    %v1548 = vpop.f32.mrb[0].mxu0
    %v1549 = vadd.f32 %v119, %v1548
    %v1550 = vpop.f32.mrb[0].mxu0
    %1551 = vdwg.mxu0
    %v1552 = vmax.f32 %v1538, 0.0
    %v1553 = vmax.f32 %v1541, 0.0
    %v1554 = vmax.f32 %v1546, 0.0
    %v1555 = vmax.f32 %v1549, 0.0
    %v1556 = vpack.c.bf16 %v1553, %v1552
    %v1557 = vpack.c.bf16 %v1555, %v1554
    %1558 = vmatprep.subr.bf16.mxu0 0
    %1559 = vmatpush1.bf16.msra.mxu0 %v1556
    %1560 = vmatprep.subr.bf16.mxu0 0
    %1561 = vmatpush1.bf16.msra.mxu0 %v1557
    %1562 = vmatprep.subr.bf16.mxu0 0
    %1563 = vmatpush1.bf16.msra.mxu0 0
    %1564 = vmatprep.subr.bf16.mxu0 0
    %1565 = vmatpush1.bf16.msra.mxu0 0
    %1566 = vmatprep.subr.bf16.mxu0 0
    %1567 = vmatpush1.bf16.msra.mxu0 0
    %1568 = vmatprep.subr.bf16.mxu0 0
    %1569 = vmatpush1.bf16.msra.mxu0 0
    %1570 = vmatprep.subr.bf16.mxu0 0
    %1571 = vmatpush1.bf16.msra.mxu0 0
    %1572 = vmatprep.subr.bf16.mxu0 0
    %1573 = vmatpush1.bf16.msra.mxu0 0
    %1574 = vmatprep.subr.bf16.mxu0 0
    %1575 = vmatpush1.bf16.msra.mxu0 0
    %1576 = vmatprep.subr.bf16.mxu0 0
    %1577 = vmatpush1.bf16.msra.mxu0 0
    %1578 = vmatprep.subr.bf16.mxu0 0
    %1579 = vmatpush1.bf16.msra.mxu0 0
    %1580 = vmatprep.subr.bf16.mxu0 0
    %1581 = vmatpush1.bf16.msra.mxu0 0
    %1582 = vmatprep.subr.bf16.mxu0 0
    %1583 = vmatpush1.bf16.msra.mxu0 0
    %1584 = vmatprep.subr.bf16.mxu0 0
    %1585 = vmatpush1.bf16.msra.mxu0 0
    %1586 = vmatprep.subr.bf16.mxu0 0
    %1587 = vmatpush1.bf16.msra.mxu0 0
    %1588 = vmatprep.subr.bf16.mxu0 0
    %1589 = vmatpush1.bf16.msra.mxu0 0
    %1590 = vmatprep.mubr.bf16.mxu0 0
    %1591 = vmatmul.mubr.bf16.gmra.mrb[0].mxu0 %v589
    %v1592 = vpop.f32.mrb[0].mxu0
    %v1593 = vadd.f32 0.0, %v1592
    %v1594 = vpop.f32.mrb[0].mxu0
    %v1595 = vpop.f32.mrb[0].mxu0
    %v1596 = vadd.f32 0.0, %v1595
    %v1597 = vpop.f32.mrb[0].mxu0
    %1598 = vdwg.mxu0
    %v1599 = vadd.f32 %v1498, %v1593
    %v1600 = vadd.f32 %v1499, %v1596
    %v1601 = vpack.c.bf16 %v1600, %v1599
    %s1602 = scalar_lea.vmem [#allocation2], 192
    %v1603 = vld [vmem:[%s1602] sm:$0xf]
    %v1604 = vld [vmem:[%s1602 + $0x4] sm:$0xf]
    %v1605 = vld [vmem:[%s1602 + $0x8] sm:$0xf]
    %v1606 = vld [vmem:[%s1602 + $0xc] sm:$0xf]
    %v1607 = vld [vmem:[%s1602 + $0x10] sm:$0xf]
    %v1608 = vld [vmem:[%s1602 + $0x14] sm:$0xf]
    %v1609 = vld [vmem:[%s1602 + $0x18] sm:$0xf]
    %v1610 = vld [vmem:[%s1602 + $0x1c] sm:$0xf]
    %v1611 = vlaneseq
    %v1612 = vshrl.u32 %v1611, 7
    %v1613 = vsub.s32 0, %v1612
    %v1614 = vrot.slane %v1501, %v1613
    %v1623 = vunpack.c.l.b16 %v1603
    %v1624 = vunpack.c.l.b16 %v1604
    %v1625 = vunpack.c.l.b16 %v1605
    %v1626 = vunpack.c.l.b16 %v1606
    %v1627 = vunpack.c.l.b16 %v1607
    %v1628 = vunpack.c.l.b16 %v1608
    %v1629 = vunpack.c.l.b16 %v1609
    %v1630 = vunpack.c.l.b16 %v1610
    %v1631 = vpack.c.b16 %v1624, %v1623
    %v1632 = vpack.c.b16 %v1626, %v1625
    %v1633 = vpack.c.b16 %v1628, %v1627
    %v1634 = vpack.c.b16 %v1630, %v1629
    %v1640 = vsel %vm671, %v1601, 0
    %1642 = vmatprep.subr.bf16.mxu0 0
    %1643 = vmatpush1.bf16.msra.mxu0 %v1631
    %1644 = vmatprep.subr.bf16.mxu0 0
    %1645 = vmatpush1.bf16.msra.mxu0 %v1632
    %1646 = vmatprep.subr.bf16.mxu0 0
    %1647 = vmatpush1.bf16.msra.mxu0 %v1633
    %1648 = vmatprep.subr.bf16.mxu0 0
    %1649 = vmatpush1.bf16.msra.mxu0 %v1634
    %1650 = vmatprep.subr.bf16.mxu0 0
    %1651 = vmatpush1.bf16.msra.mxu0 0
    %1652 = vmatprep.subr.bf16.mxu0 0
    %1653 = vmatpush1.bf16.msra.mxu0 0
    %1654 = vmatprep.subr.bf16.mxu0 0
    %1655 = vmatpush1.bf16.msra.mxu0 0
    %1656 = vmatprep.subr.bf16.mxu0 0
    %1657 = vmatpush1.bf16.msra.mxu0 0
    %1658 = vmatprep.subr.bf16.mxu0 0
    %1659 = vmatpush1.bf16.msra.mxu0 0
    %1660 = vmatprep.subr.bf16.mxu0 0
    %1661 = vmatpush1.bf16.msra.mxu0 0
    %1662 = vmatprep.subr.bf16.mxu0 0
    %1663 = vmatpush1.bf16.msra.mxu0 0
    %1664 = vmatprep.subr.bf16.mxu0 0
    %1665 = vmatpush1.bf16.msra.mxu0 0
    %1666 = vmatprep.subr.bf16.mxu0 0
    %1667 = vmatpush1.bf16.msra.mxu0 0
    %1668 = vmatprep.subr.bf16.mxu0 0
    %1669 = vmatpush1.bf16.msra.mxu0 0
    %1670 = vmatprep.subr.bf16.mxu0 0
    %1671 = vmatpush1.bf16.msra.mxu0 0
    %1672 = vmatprep.subr.bf16.mxu0 0
    %1673 = vmatpush1.bf16.msra.mxu0 0
    %1674 = vmatprep.mubr.bf16.mxu0 0
    %1675 = vmatmul.mubr.bf16.gmra.mrb[0].mxu0 %v1640
    %v1676 = vpop.f32.mrb[0].mxu0
    %v1677 = vadd.f32 %v1614, %v1676
    %v1678 = vpop.f32.mrb[0].mxu0
    %v1679 = vpop.f32.mrb[0].mxu0
    %v1680 = vadd.f32 %v1614, %v1679
    %v1681 = vpop.f32.mrb[0].mxu0
    %1682 = vdwg.mxu0
    %v1683 = vmax.f32 %v1677, 0.0
    %v1684 = vmax.f32 %v1680, 0.0
    %v1685 = vpack.c.bf16 %v1684, %v1683
    %s1686 = scalar_lea.vmem [#allocation2], 224
    %v1687 = vld [vmem:[%s1686] sm:$0xf]
    %v1688 = vld [vmem:[%s1686 + $0x4] sm:$0xf]
    %v1689 = vld [vmem:[%s1686 + $0x8] sm:$0xf]
    %v1690 = vld [vmem:[%s1686 + $0xc] sm:$0xf]
    %v1691 = vld [vmem:[%s1686 + $0x10] sm:$0xf]
    %v1692 = vld [vmem:[%s1686 + $0x14] sm:$0xf]
    %v1693 = vld [vmem:[%s1686 + $0x18] sm:$0xf]
    %v1694 = vld [vmem:[%s1686 + $0x1c] sm:$0xf]
    %v1695 = vlaneseq
    %v1696 = vshrl.u32 %v1695, 7
    %v1697 = vsub.s32 1, %v1696
    %v1698 = vrot.slane %v1501, %v1697
    %v1707 = vunpack.c.l.b16 %v1687
    %v1708 = vunpack.c.l.b16 %v1688
    %v1709 = vunpack.c.l.b16 %v1689
    %v1710 = vunpack.c.l.b16 %v1690
    %v1711 = vunpack.c.l.b16 %v1691
    %v1712 = vunpack.c.l.b16 %v1692
    %v1713 = vunpack.c.l.b16 %v1693
    %v1714 = vunpack.c.l.b16 %v1694
    %v1715 = vpack.c.b16 %v1708, %v1707
    %v1716 = vpack.c.b16 %v1710, %v1709
    %v1717 = vpack.c.b16 %v1712, %v1711
    %v1718 = vpack.c.b16 %v1714, %v1713
    %v1724 = vsel %vm671, %v1685, 0
    %1726 = vmatprep.subr.bf16.mxu0 0
    %1727 = vmatpush1.bf16.msra.mxu0 %v1715
    %1728 = vmatprep.subr.bf16.mxu0 0
    %1729 = vmatpush1.bf16.msra.mxu0 %v1716
    %1730 = vmatprep.subr.bf16.mxu0 0
    %1731 = vmatpush1.bf16.msra.mxu0 %v1717
    %1732 = vmatprep.subr.bf16.mxu0 0
    %1733 = vmatpush1.bf16.msra.mxu0 %v1718
    %1734 = vmatprep.subr.bf16.mxu0 0
    %1735 = vmatpush1.bf16.msra.mxu0 0
    %1736 = vmatprep.subr.bf16.mxu0 0
    %1737 = vmatpush1.bf16.msra.mxu0 0
    %1738 = vmatprep.subr.bf16.mxu0 0
    %1739 = vmatpush1.bf16.msra.mxu0 0
    %1740 = vmatprep.subr.bf16.mxu0 0
    %1741 = vmatpush1.bf16.msra.mxu0 0
    %1742 = vmatprep.subr.bf16.mxu0 0
    %1743 = vmatpush1.bf16.msra.mxu0 0
    %1744 = vmatprep.subr.bf16.mxu0 0
    %1745 = vmatpush1.bf16.msra.mxu0 0
    %1746 = vmatprep.subr.bf16.mxu0 0
    %1747 = vmatpush1.bf16.msra.mxu0 0
    %1748 = vmatprep.subr.bf16.mxu0 0
    %1749 = vmatpush1.bf16.msra.mxu0 0
    %1750 = vmatprep.subr.bf16.mxu0 0
    %1751 = vmatpush1.bf16.msra.mxu0 0
    %1752 = vmatprep.subr.bf16.mxu0 0
    %1753 = vmatpush1.bf16.msra.mxu0 0
    %1754 = vmatprep.subr.bf16.mxu0 0
    %1755 = vmatpush1.bf16.msra.mxu0 0
    %1756 = vmatprep.subr.bf16.mxu0 0
    %1757 = vmatpush1.bf16.msra.mxu0 0
    %1758 = vmatprep.mubr.bf16.mxu0 0
    %1759 = vmatmul.mubr.bf16.gmra.mrb[0].mxu0 %v1724
    %v1760 = vpop.f32.mrb[0].mxu0
    %v1761 = vadd.f32 %v1698, %v1760
    %v1762 = vpop.f32.mrb[0].mxu0
    %v1763 = vpop.f32.mrb[0].mxu0
    %v1764 = vadd.f32 %v1698, %v1763
    %v1765 = vpop.f32.mrb[0].mxu0
    %1766 = vdwg.mxu0
    %v1767 = vmul.f32 %v1761, %v1761
    %v1768 = vmul.f32 %v1764, %v1764
    %1771 = vrot.lane.b32.xlu0 %v1767, 64
    %v1772 = vpop.permute.xlu0 %1771
    %1773 = vrot.lane.b32.xlu0 %v1768, 64
    %v1774 = vpop.permute.xlu0 %1773
    %v1777 = vsel %vm671, %v1761, %v1772
    %v1778 = vsel %vm671, %v1764, %v1774
    %v1779 = vadd.f32 %v1777, %v1778
    %v1780 = vrot.slane %v1779, 4
    %v1781 = vadd.f32 %v1779, %v1780
    %v1782 = vrot.slane %v1781, 2
    %v1783 = vadd.f32 %v1781, %v1782
    %v1784 = vrot.slane %v1783, 1
    %v1785 = vadd.f32 %v1783, %v1784
    %v1786 = vmul.f32 %v1785, %v819
    %v1787 = vmul.f32 %v1786, %v1786
    %1789 = vrot.lane.b32.xlu0 %v1787, 64
    %v1790 = vpop.permute.xlu0 %1789
    %v1792 = vsub.f32 %v1786, %v1790
    %v1793 = vmax.f32 %v1792, 0.0
    %v1794 = vsub.f32 %v1761, %v1786
    %v1795 = vsub.f32 %v1764, %v1786
    %v1796 = vadd.f32 %v1793, 1e-05
    %v1797 = vrsqrt.pop %v1796
    %v1798 = vlaneseq
    %v1799 = vshrl.u32 %v1798, 7
    %v1800 = vsub.s32 0, %v1799
    %v1801 = vrot.slane %v1797, %v1800
    %1803 = vrot.lane.b32.xlu0 %v1801, 64
    %v1804 = vpop.permute.xlu0 %1803
    %v1806 = vmul.f32 %v1794, %v1804
    %v1807 = vmul.f32 %v1795, %v1804
    %v1808 = vlaneseq
    %v1809 = vshrl.u32 %v1808, 7
    %v1810 = vsub.s32 2, %v1809
    %v1811 = vrot.slane %v1501, %v1810
    %v1812 = vmul.f32 %v1806, %v1811
    %v1813 = vmul.f32 %v1807, %v1811
    %v1814 = vlaneseq
    %v1815 = vshrl.u32 %v1814, 7
    %v1816 = vsub.s32 3, %v1815
    %v1817 = vrot.slane %v1501, %v1816
    %v1818 = vadd.f32 %v1812, %v1817
    %v1819 = vadd.f32 %v1813, %v1817
    %v1820 = vadd.f32 %v1498, %v1818
    %v1821 = vadd.f32 %v1499, %v1819
    %v1823 = vsel %vm587, %v198, 0
    %1825 = vmatprep.subr.bf16.mxu0 0
    %1826 = vmatpush1.bf16.msra.mxu0 %v186
    %1827 = vmatprep.subr.bf16.mxu0 0
    %1828 = vmatpush1.bf16.msra.mxu0 %v187
    %1829 = vmatprep.subr.bf16.mxu0 0
    %1830 = vmatpush1.bf16.msra.mxu0 0
    %1831 = vmatprep.subr.bf16.mxu0 0
    %1832 = vmatpush1.bf16.msra.mxu0 0
    %1833 = vmatprep.subr.bf16.mxu0 0
    %1834 = vmatpush1.bf16.msra.mxu0 0
    %1835 = vmatprep.subr.bf16.mxu0 0
    %1836 = vmatpush1.bf16.msra.mxu0 0
    %1837 = vmatprep.subr.bf16.mxu0 0
    %1838 = vmatpush1.bf16.msra.mxu0 0
    %1839 = vmatprep.subr.bf16.mxu0 0
    %1840 = vmatpush1.bf16.msra.mxu0 0
    %1841 = vmatprep.subr.bf16.mxu0 0
    %1842 = vmatpush1.bf16.msra.mxu0 0
    %1843 = vmatprep.subr.bf16.mxu0 0
    %1844 = vmatpush1.bf16.msra.mxu0 0
    %1845 = vmatprep.subr.bf16.mxu0 0
    %1846 = vmatpush1.bf16.msra.mxu0 0
    %1847 = vmatprep.subr.bf16.mxu0 0
    %1848 = vmatpush1.bf16.msra.mxu0 0
    %1849 = vmatprep.subr.bf16.mxu0 0
    %1850 = vmatpush1.bf16.msra.mxu0 0
    %1851 = vmatprep.subr.bf16.mxu0 0
    %1852 = vmatpush1.bf16.msra.mxu0 0
    %1853 = vmatprep.subr.bf16.mxu0 0
    %1854 = vmatpush1.bf16.msra.mxu0 0
    %1855 = vmatprep.subr.bf16.mxu0 0
    %1856 = vmatpush1.bf16.msra.mxu0 0
    %1857 = vmatprep.mubr.bf16.mxu0 0
    %1858 = vmatmul.mubr.bf16.gmra.mrb[0].mxu0 %v1823
    %v1859 = vpop.f32.mrb[0].mxu0
    %v1860 = vadd.f32 0.0, %v1859
    %v1861 = vpop.f32.mrb[0].mxu0
    %v1862 = vpop.f32.mrb[0].mxu0
    %v1863 = vadd.f32 0.0, %v1862
    %v1864 = vpop.f32.mrb[0].mxu0
    %1865 = vdwg.mxu0
    %v1866 = vpack.c.bf16 %v1863, %v1860
    %s1867 = scalar_lea.vmem %s6, 16
    %v1868 = vld [vmem:[%s1867] sm:$0xf]
    %v1869 = vpack.c.bf16 %v520, %v517
    %v1871 = vsel %vm525, %v1866, 0
    %1873 = vmatprep.subr.bf16.mxu0 0
    %1874 = vmatpush1.bf16.msra.mxu0 %v1869
    %1875 = vmatprep.subr.bf16.mxu0 0
    %1876 = vmatpush1.bf16.msra.mxu0 0
    %1877 = vmatprep.subr.bf16.mxu0 0
    %1878 = vmatpush1.bf16.msra.mxu0 0
    %1879 = vmatprep.subr.bf16.mxu0 0
    %1880 = vmatpush1.bf16.msra.mxu0 0
    %1881 = vmatprep.subr.bf16.mxu0 0
    %1882 = vmatpush1.bf16.msra.mxu0 0
    %1883 = vmatprep.subr.bf16.mxu0 0
    %1884 = vmatpush1.bf16.msra.mxu0 0
    %1885 = vmatprep.subr.bf16.mxu0 0
    %1886 = vmatpush1.bf16.msra.mxu0 0
    %1887 = vmatprep.subr.bf16.mxu0 0
    %1888 = vmatpush1.bf16.msra.mxu0 0
    %1889 = vmatprep.subr.bf16.mxu0 0
    %1890 = vmatpush1.bf16.msra.mxu0 0
    %1891 = vmatprep.subr.bf16.mxu0 0
    %1892 = vmatpush1.bf16.msra.mxu0 0
    %1893 = vmatprep.subr.bf16.mxu0 0
    %1894 = vmatpush1.bf16.msra.mxu0 0
    %1895 = vmatprep.subr.bf16.mxu0 0
    %1896 = vmatpush1.bf16.msra.mxu0 0
    %1897 = vmatprep.subr.bf16.mxu0 0
    %1898 = vmatpush1.bf16.msra.mxu0 0
    %1899 = vmatprep.subr.bf16.mxu0 0
    %1900 = vmatpush1.bf16.msra.mxu0 0
    %1901 = vmatprep.subr.bf16.mxu0 0
    %1902 = vmatpush1.bf16.msra.mxu0 0
    %1903 = vmatprep.subr.bf16.mxu0 0
    %1904 = vmatpush1.bf16.msra.mxu0 0
    %1905 = vmatprep.mubr.bf16.mxu0 0
    %1906 = vmatmul.mubr.bf16.gmra.mrb[0].mxu0 %v1871
    %v1907 = vpop.f32.mrb[0].mxu0
    %v1908 = vadd.f32 0.0, %v1907
    %v1909 = vpop.f32.mrb[0].mxu0
    %v1910 = vpop.f32.mrb[0].mxu0
    %v1911 = vadd.f32 0.0, %v1910
    %v1912 = vpop.f32.mrb[0].mxu0
    %1913 = vdwg.mxu0
    %v1914 = vadd.f32 %v517, %v1908
    %v1915 = vadd.f32 %v520, %v1911
    %v1916 = vpack.c.bf16 %v1915, %v1914
    %s1917 = scalar_lea.vmem [#allocation2], 256
    %v1918 = vld [vmem:[%s1917] sm:$0xf]
    %v1919 = vld [vmem:[%s1917 + $0x4] sm:$0xf]
    %v1920 = vld [vmem:[%s1917 + $0x8] sm:$0xf]
    %v1921 = vld [vmem:[%s1917 + $0xc] sm:$0xf]
    %v1922 = vld [vmem:[%s1917 + $0x10] sm:$0xf]
    %v1923 = vld [vmem:[%s1917 + $0x14] sm:$0xf]
    %v1924 = vld [vmem:[%s1917 + $0x18] sm:$0xf]
    %v1925 = vld [vmem:[%s1917 + $0x1c] sm:$0xf]
    %v1926 = vlaneseq
    %v1927 = vshrl.u32 %v1926, 7
    %v1928 = vsub.s32 0, %v1927
    %v1929 = vrot.slane %v1868, %v1928
    %v1938 = vunpack.c.l.b16 %v1918
    %v1939 = vunpack.c.l.b16 %v1919
    %v1940 = vunpack.c.l.b16 %v1920
    %v1941 = vunpack.c.l.b16 %v1921
    %v1942 = vunpack.c.l.b16 %v1922
    %v1943 = vunpack.c.l.b16 %v1923
    %v1944 = vunpack.c.l.b16 %v1924
    %v1945 = vunpack.c.l.b16 %v1925
    %v1946 = vpack.c.b16 %v1939, %v1938
    %v1947 = vpack.c.b16 %v1941, %v1940
    %v1948 = vpack.c.b16 %v1943, %v1942
    %v1949 = vpack.c.b16 %v1945, %v1944
    %v1955 = vsel %vm671, %v1916, 0
    %1957 = vmatprep.subr.bf16.mxu0 0
    %1958 = vmatpush1.bf16.msra.mxu0 %v1946
    %1959 = vmatprep.subr.bf16.mxu0 0
    %1960 = vmatpush1.bf16.msra.mxu0 %v1947
    %1961 = vmatprep.subr.bf16.mxu0 0
    %1962 = vmatpush1.bf16.msra.mxu0 %v1948
    %1963 = vmatprep.subr.bf16.mxu0 0
    %1964 = vmatpush1.bf16.msra.mxu0 %v1949
    %1965 = vmatprep.subr.bf16.mxu0 0
    %1966 = vmatpush1.bf16.msra.mxu0 0
    %1967 = vmatprep.subr.bf16.mxu0 0
    %1968 = vmatpush1.bf16.msra.mxu0 0
    %1969 = vmatprep.subr.bf16.mxu0 0
    %1970 = vmatpush1.bf16.msra.mxu0 0
    %1971 = vmatprep.subr.bf16.mxu0 0
    %1972 = vmatpush1.bf16.msra.mxu0 0
    %1973 = vmatprep.subr.bf16.mxu0 0
    %1974 = vmatpush1.bf16.msra.mxu0 0
    %1975 = vmatprep.subr.bf16.mxu0 0
    %1976 = vmatpush1.bf16.msra.mxu0 0
    %1977 = vmatprep.subr.bf16.mxu0 0
    %1978 = vmatpush1.bf16.msra.mxu0 0
    %1979 = vmatprep.subr.bf16.mxu0 0
    %1980 = vmatpush1.bf16.msra.mxu0 0
    %1981 = vmatprep.subr.bf16.mxu0 0
    %1982 = vmatpush1.bf16.msra.mxu0 0
    %1983 = vmatprep.subr.bf16.mxu0 0
    %1984 = vmatpush1.bf16.msra.mxu0 0
    %1985 = vmatprep.subr.bf16.mxu0 0
    %1986 = vmatpush1.bf16.msra.mxu0 0
    %1987 = vmatprep.subr.bf16.mxu0 0
    %1988 = vmatpush1.bf16.msra.mxu0 0
    %1989 = vmatprep.mubr.bf16.mxu0 0
    %1990 = vmatmul.mubr.bf16.gmra.mrb[0].mxu0 %v1955
    %v1991 = vpop.f32.mrb[0].mxu0
    %v1992 = vadd.f32 %v1929, %v1991
    %v1993 = vpop.f32.mrb[0].mxu0
    %v1994 = vpop.f32.mrb[0].mxu0
    %v1995 = vadd.f32 %v1929, %v1994
    %v1996 = vpop.f32.mrb[0].mxu0
    %1997 = vdwg.mxu0
    %v1998 = vmax.f32 %v1992, 0.0
    %v1999 = vmax.f32 %v1995, 0.0
    %v2000 = vpack.c.bf16 %v1999, %v1998
    %s2001 = scalar_lea.vmem [#allocation2], 288
    %v2002 = vld [vmem:[%s2001] sm:$0xf]
    %v2003 = vld [vmem:[%s2001 + $0x4] sm:$0xf]
    %v2004 = vld [vmem:[%s2001 + $0x8] sm:$0xf]
    %v2005 = vld [vmem:[%s2001 + $0xc] sm:$0xf]
    %v2006 = vld [vmem:[%s2001 + $0x10] sm:$0xf]
    %v2007 = vld [vmem:[%s2001 + $0x14] sm:$0xf]
    %v2008 = vld [vmem:[%s2001 + $0x18] sm:$0xf]
    %v2009 = vld [vmem:[%s2001 + $0x1c] sm:$0xf]
    %v2010 = vlaneseq
    %v2011 = vshrl.u32 %v2010, 7
    %v2012 = vsub.s32 1, %v2011
    %v2013 = vrot.slane %v1868, %v2012
    %v2022 = vunpack.c.l.b16 %v2002
    %v2023 = vunpack.c.l.b16 %v2003
    %v2024 = vunpack.c.l.b16 %v2004
    %v2025 = vunpack.c.l.b16 %v2005
    %v2026 = vunpack.c.l.b16 %v2006
    %v2027 = vunpack.c.l.b16 %v2007
    %v2028 = vunpack.c.l.b16 %v2008
    %v2029 = vunpack.c.l.b16 %v2009
    %v2030 = vpack.c.b16 %v2023, %v2022
    %v2031 = vpack.c.b16 %v2025, %v2024
    %v2032 = vpack.c.b16 %v2027, %v2026
    %v2033 = vpack.c.b16 %v2029, %v2028
    %v2039 = vsel %vm671, %v2000, 0
    %2041 = vmatprep.subr.bf16.mxu0 0
    %2042 = vmatpush1.bf16.msra.mxu0 %v2030
    %2043 = vmatprep.subr.bf16.mxu0 0
    %2044 = vmatpush1.bf16.msra.mxu0 %v2031
    %2045 = vmatprep.subr.bf16.mxu0 0
    %2046 = vmatpush1.bf16.msra.mxu0 %v2032
    %2047 = vmatprep.subr.bf16.mxu0 0
    %2048 = vmatpush1.bf16.msra.mxu0 %v2033
    %2049 = vmatprep.subr.bf16.mxu0 0
    %2050 = vmatpush1.bf16.msra.mxu0 0
    %2051 = vmatprep.subr.bf16.mxu0 0
    %2052 = vmatpush1.bf16.msra.mxu0 0
    %2053 = vmatprep.subr.bf16.mxu0 0
    %2054 = vmatpush1.bf16.msra.mxu0 0
    %2055 = vmatprep.subr.bf16.mxu0 0
    %2056 = vmatpush1.bf16.msra.mxu0 0
    %2057 = vmatprep.subr.bf16.mxu0 0
    %2058 = vmatpush1.bf16.msra.mxu0 0
    %2059 = vmatprep.subr.bf16.mxu0 0
    %2060 = vmatpush1.bf16.msra.mxu0 0
    %2061 = vmatprep.subr.bf16.mxu0 0
    %2062 = vmatpush1.bf16.msra.mxu0 0
    %2063 = vmatprep.subr.bf16.mxu0 0
    %2064 = vmatpush1.bf16.msra.mxu0 0
    %2065 = vmatprep.subr.bf16.mxu0 0
    %2066 = vmatpush1.bf16.msra.mxu0 0
    %2067 = vmatprep.subr.bf16.mxu0 0
    %2068 = vmatpush1.bf16.msra.mxu0 0
    %2069 = vmatprep.subr.bf16.mxu0 0
    %2070 = vmatpush1.bf16.msra.mxu0 0
    %2071 = vmatprep.subr.bf16.mxu0 0
    %2072 = vmatpush1.bf16.msra.mxu0 0
    %2073 = vmatprep.mubr.bf16.mxu0 0
    %2074 = vmatmul.mubr.bf16.gmra.mrb[0].mxu0 %v2039
    %v2075 = vpop.f32.mrb[0].mxu0
    %v2076 = vadd.f32 %v2013, %v2075
    %v2077 = vpop.f32.mrb[0].mxu0
    %v2078 = vpop.f32.mrb[0].mxu0
    %v2079 = vadd.f32 %v2013, %v2078
    %v2080 = vpop.f32.mrb[0].mxu0
    %2081 = vdwg.mxu0
    %v2082 = vmul.f32 %v2076, %v2076
    %v2083 = vmul.f32 %v2079, %v2079
    %2086 = vrot.lane.b32.xlu0 %v2082, 64
    %v2087 = vpop.permute.xlu0 %2086
    %2088 = vrot.lane.b32.xlu0 %v2083, 64
    %v2089 = vpop.permute.xlu0 %2088
    %v2092 = vsel %vm671, %v2076, %v2087
    %v2093 = vsel %vm671, %v2079, %v2089
    %v2094 = vadd.f32 %v2092, %v2093
    %v2095 = vrot.slane %v2094, 4
    %v2096 = vadd.f32 %v2094, %v2095
    %v2097 = vrot.slane %v2096, 2
    %v2098 = vadd.f32 %v2096, %v2097
    %v2099 = vrot.slane %v2098, 1
    %v2100 = vadd.f32 %v2098, %v2099
    %v2101 = vmul.f32 %v2100, %v819
    %v2102 = vmul.f32 %v2101, %v2101
    %2104 = vrot.lane.b32.xlu0 %v2102, 64
    %v2105 = vpop.permute.xlu0 %2104
    %v2107 = vsub.f32 %v2101, %v2105
    %v2108 = vmax.f32 %v2107, 0.0
    %v2109 = vsub.f32 %v2076, %v2101
    %v2110 = vsub.f32 %v2079, %v2101
    %v2111 = vadd.f32 %v2108, 1e-05
    %v2112 = vrsqrt.pop %v2111
    %v2113 = vlaneseq
    %v2114 = vshrl.u32 %v2113, 7
    %v2115 = vsub.s32 0, %v2114
    %v2116 = vrot.slane %v2112, %v2115
    %2118 = vrot.lane.b32.xlu0 %v2116, 64
    %v2119 = vpop.permute.xlu0 %2118
    %v2121 = vmul.f32 %v2109, %v2119
    %v2122 = vmul.f32 %v2110, %v2119
    %v2123 = vlaneseq
    %v2124 = vshrl.u32 %v2123, 7
    %v2125 = vsub.s32 2, %v2124
    %v2126 = vrot.slane %v1868, %v2125
    %v2127 = vmul.f32 %v2121, %v2126
    %v2128 = vmul.f32 %v2122, %v2126
    %v2129 = vlaneseq
    %v2130 = vshrl.u32 %v2129, 7
    %v2131 = vsub.s32 3, %v2130
    %v2132 = vrot.slane %v1868, %v2131
    %v2133 = vadd.f32 %v2127, %v2132
    %v2134 = vadd.f32 %v2128, %v2132
    %v2135 = vadd.f32 %v517, %v2133
    %v2136 = vadd.f32 %v520, %v2134
    %s2137 = scalar_lea.vmem %s6, 20
    %v2138 = vld [vmem:[%s2137] sm:$0xf]
    %v2139 = vpack.c.bf16 %v2136, %v2135
    %2140 = vmatprep.subr.bf16.mxu0 0
    %2141 = vmatpush1.bf16.msra.mxu0 %v2139
    %2142 = vmatprep.subr.bf16.mxu0 0
    %2143 = vmatpush1.bf16.msra.mxu0 0
    %2144 = vmatprep.subr.bf16.mxu0 0
    %2145 = vmatpush1.bf16.msra.mxu0 0
    %2146 = vmatprep.subr.bf16.mxu0 0
    %2147 = vmatpush1.bf16.msra.mxu0 0
    %2148 = vmatprep.subr.bf16.mxu0 0
    %2149 = vmatpush1.bf16.msra.mxu0 0
    %2150 = vmatprep.subr.bf16.mxu0 0
    %2151 = vmatpush1.bf16.msra.mxu0 0
    %2152 = vmatprep.subr.bf16.mxu0 0
    %2153 = vmatpush1.bf16.msra.mxu0 0
    %2154 = vmatprep.subr.bf16.mxu0 0
    %2155 = vmatpush1.bf16.msra.mxu0 0
    %2156 = vmatprep.subr.bf16.mxu0 0
    %2157 = vmatpush1.bf16.msra.mxu0 0
    %2158 = vmatprep.subr.bf16.mxu0 0
    %2159 = vmatpush1.bf16.msra.mxu0 0
    %2160 = vmatprep.subr.bf16.mxu0 0
    %2161 = vmatpush1.bf16.msra.mxu0 0
    %2162 = vmatprep.subr.bf16.mxu0 0
    %2163 = vmatpush1.bf16.msra.mxu0 0
    %2164 = vmatprep.subr.bf16.mxu0 0
    %2165 = vmatpush1.bf16.msra.mxu0 0
    %2166 = vmatprep.subr.bf16.mxu0 0
    %2167 = vmatpush1.bf16.msra.mxu0 0
    %2168 = vmatprep.subr.bf16.mxu0 0
    %2169 = vmatpush1.bf16.msra.mxu0 0
    %2170 = vmatprep.subr.bf16.mxu0 0
    %2171 = vmatpush1.bf16.msra.mxu0 0
    %2172 = vmatprep.mubr.bf16.mxu0 0
    %2173 = vmatmul.mubr.bf16.gmra.mrb[0].mxu0 %v1871
    %v2174 = vpop.f32.mrb[0].mxu0
    %v2175 = vadd.f32 0.0, %v2174
    %v2176 = vpop.f32.mrb[0].mxu0
    %v2177 = vpop.f32.mrb[0].mxu0
    %v2178 = vadd.f32 0.0, %v2177
    %v2179 = vpop.f32.mrb[0].mxu0
    %2180 = vdwg.mxu0
    %v2181 = vadd.f32 %v2135, %v2175
    %v2182 = vadd.f32 %v2136, %v2178
    %v2183 = vpack.c.bf16 %v2182, %v2181
    %s2184 = scalar_lea.vmem [#allocation2], 320
    %v2185 = vld [vmem:[%s2184] sm:$0xf]
    %v2186 = vld [vmem:[%s2184 + $0x4] sm:$0xf]
    %v2187 = vld [vmem:[%s2184 + $0x8] sm:$0xf]
    %v2188 = vld [vmem:[%s2184 + $0xc] sm:$0xf]
    %v2189 = vld [vmem:[%s2184 + $0x10] sm:$0xf]
    %v2190 = vld [vmem:[%s2184 + $0x14] sm:$0xf]
    %v2191 = vld [vmem:[%s2184 + $0x18] sm:$0xf]
    %v2192 = vld [vmem:[%s2184 + $0x1c] sm:$0xf]
    %v2193 = vlaneseq
    %v2194 = vshrl.u32 %v2193, 7
    %v2195 = vsub.s32 0, %v2194
    %v2196 = vrot.slane %v2138, %v2195
    %v2205 = vunpack.c.l.b16 %v2185
    %v2206 = vunpack.c.l.b16 %v2186
    %v2207 = vunpack.c.l.b16 %v2187
    %v2208 = vunpack.c.l.b16 %v2188
    %v2209 = vunpack.c.l.b16 %v2189
    %v2210 = vunpack.c.l.b16 %v2190
    %v2211 = vunpack.c.l.b16 %v2191
    %v2212 = vunpack.c.l.b16 %v2192
    %v2213 = vpack.c.b16 %v2206, %v2205
    %v2214 = vpack.c.b16 %v2208, %v2207
    %v2215 = vpack.c.b16 %v2210, %v2209
    %v2216 = vpack.c.b16 %v2212, %v2211
    %v2222 = vsel %vm671, %v2183, 0
    %2224 = vmatprep.subr.bf16.mxu0 0
    %2225 = vmatpush1.bf16.msra.mxu0 %v2213
    %2226 = vmatprep.subr.bf16.mxu0 0
    %2227 = vmatpush1.bf16.msra.mxu0 %v2214
    %2228 = vmatprep.subr.bf16.mxu0 0
    %2229 = vmatpush1.bf16.msra.mxu0 %v2215
    %2230 = vmatprep.subr.bf16.mxu0 0
    %2231 = vmatpush1.bf16.msra.mxu0 %v2216
    %2232 = vmatprep.subr.bf16.mxu0 0
    %2233 = vmatpush1.bf16.msra.mxu0 0
    %2234 = vmatprep.subr.bf16.mxu0 0
    %2235 = vmatpush1.bf16.msra.mxu0 0
    %2236 = vmatprep.subr.bf16.mxu0 0
    %2237 = vmatpush1.bf16.msra.mxu0 0
    %2238 = vmatprep.subr.bf16.mxu0 0
    %2239 = vmatpush1.bf16.msra.mxu0 0
    %2240 = vmatprep.subr.bf16.mxu0 0
    %2241 = vmatpush1.bf16.msra.mxu0 0
    %2242 = vmatprep.subr.bf16.mxu0 0
    %2243 = vmatpush1.bf16.msra.mxu0 0
    %2244 = vmatprep.subr.bf16.mxu0 0
    %2245 = vmatpush1.bf16.msra.mxu0 0
    %2246 = vmatprep.subr.bf16.mxu0 0
    %2247 = vmatpush1.bf16.msra.mxu0 0
    %2248 = vmatprep.subr.bf16.mxu0 0
    %2249 = vmatpush1.bf16.msra.mxu0 0
    %2250 = vmatprep.subr.bf16.mxu0 0
    %2251 = vmatpush1.bf16.msra.mxu0 0
    %2252 = vmatprep.subr.bf16.mxu0 0
    %2253 = vmatpush1.bf16.msra.mxu0 0
    %2254 = vmatprep.subr.bf16.mxu0 0
    %2255 = vmatpush1.bf16.msra.mxu0 0
    %2256 = vmatprep.mubr.bf16.mxu0 0
    %2257 = vmatmul.mubr.bf16.gmra.mrb[0].mxu0 %v2222
    %v2258 = vpop.f32.mrb[0].mxu0
    %v2259 = vadd.f32 %v2196, %v2258
    %v2260 = vpop.f32.mrb[0].mxu0
    %v2261 = vpop.f32.mrb[0].mxu0
    %v2262 = vadd.f32 %v2196, %v2261
    %v2263 = vpop.f32.mrb[0].mxu0
    %2264 = vdwg.mxu0
    %v2265 = vmax.f32 %v2259, 0.0
    %v2266 = vmax.f32 %v2262, 0.0
    %v2267 = vpack.c.bf16 %v2266, %v2265
    %s2268 = scalar_lea.vmem [#allocation2], 352
    %v2269 = vld [vmem:[%s2268] sm:$0xf]
    %v2270 = vld [vmem:[%s2268 + $0x4] sm:$0xf]
    %v2271 = vld [vmem:[%s2268 + $0x8] sm:$0xf]
    %v2272 = vld [vmem:[%s2268 + $0xc] sm:$0xf]
    %v2273 = vld [vmem:[%s2268 + $0x10] sm:$0xf]
    %v2274 = vld [vmem:[%s2268 + $0x14] sm:$0xf]
    %v2275 = vld [vmem:[%s2268 + $0x18] sm:$0xf]
    %v2276 = vld [vmem:[%s2268 + $0x1c] sm:$0xf]
    %v2277 = vlaneseq
    %v2278 = vshrl.u32 %v2277, 7
    %v2279 = vsub.s32 1, %v2278
    %v2280 = vrot.slane %v2138, %v2279
    %v2289 = vunpack.c.l.b16 %v2269
    %v2290 = vunpack.c.l.b16 %v2270
    %v2291 = vunpack.c.l.b16 %v2271
    %v2292 = vunpack.c.l.b16 %v2272
    %v2293 = vunpack.c.l.b16 %v2273
    %v2294 = vunpack.c.l.b16 %v2274
    %v2295 = vunpack.c.l.b16 %v2275
    %v2296 = vunpack.c.l.b16 %v2276
    %v2297 = vpack.c.b16 %v2290, %v2289
    %v2298 = vpack.c.b16 %v2292, %v2291
    %v2299 = vpack.c.b16 %v2294, %v2293
    %v2300 = vpack.c.b16 %v2296, %v2295
    %v2306 = vsel %vm671, %v2267, 0
    %2308 = vmatprep.subr.bf16.mxu0 0
    %2309 = vmatpush1.bf16.msra.mxu0 %v2297
    %2310 = vmatprep.subr.bf16.mxu0 0
    %2311 = vmatpush1.bf16.msra.mxu0 %v2298
    %2312 = vmatprep.subr.bf16.mxu0 0
    %2313 = vmatpush1.bf16.msra.mxu0 %v2299
    %2314 = vmatprep.subr.bf16.mxu0 0
    %2315 = vmatpush1.bf16.msra.mxu0 %v2300
    %2316 = vmatprep.subr.bf16.mxu0 0
    %2317 = vmatpush1.bf16.msra.mxu0 0
    %2318 = vmatprep.subr.bf16.mxu0 0
    %2319 = vmatpush1.bf16.msra.mxu0 0
    %2320 = vmatprep.subr.bf16.mxu0 0
    %2321 = vmatpush1.bf16.msra.mxu0 0
    %2322 = vmatprep.subr.bf16.mxu0 0
    %2323 = vmatpush1.bf16.msra.mxu0 0
    %2324 = vmatprep.subr.bf16.mxu0 0
    %2325 = vmatpush1.bf16.msra.mxu0 0
    %2326 = vmatprep.subr.bf16.mxu0 0
    %2327 = vmatpush1.bf16.msra.mxu0 0
    %2328 = vmatprep.subr.bf16.mxu0 0
    %2329 = vmatpush1.bf16.msra.mxu0 0
    %2330 = vmatprep.subr.bf16.mxu0 0
    %2331 = vmatpush1.bf16.msra.mxu0 0
    %2332 = vmatprep.subr.bf16.mxu0 0
    %2333 = vmatpush1.bf16.msra.mxu0 0
    %2334 = vmatprep.subr.bf16.mxu0 0
    %2335 = vmatpush1.bf16.msra.mxu0 0
    %2336 = vmatprep.subr.bf16.mxu0 0
    %2337 = vmatpush1.bf16.msra.mxu0 0
    %2338 = vmatprep.subr.bf16.mxu0 0
    %2339 = vmatpush1.bf16.msra.mxu0 0
    %2340 = vmatprep.mubr.bf16.mxu0 0
    %2341 = vmatmul.mubr.bf16.gmra.mrb[0].mxu0 %v2306
    %v2342 = vpop.f32.mrb[0].mxu0
    %v2343 = vadd.f32 %v2280, %v2342
    %v2344 = vpop.f32.mrb[0].mxu0
    %v2345 = vpop.f32.mrb[0].mxu0
    %v2346 = vadd.f32 %v2280, %v2345
    %v2347 = vpop.f32.mrb[0].mxu0
    %2348 = vdwg.mxu0
    %v2349 = vmul.f32 %v2343, %v2343
    %v2350 = vmul.f32 %v2346, %v2346
    %2353 = vrot.lane.b32.xlu0 %v2349, 64
    %v2354 = vpop.permute.xlu0 %2353
    %2355 = vrot.lane.b32.xlu0 %v2350, 64
    %v2356 = vpop.permute.xlu0 %2355
    %v2359 = vsel %vm671, %v2343, %v2354
    %v2360 = vsel %vm671, %v2346, %v2356
    %v2361 = vadd.f32 %v2359, %v2360
    %v2362 = vrot.slane %v2361, 4
    %v2363 = vadd.f32 %v2361, %v2362
    %v2364 = vrot.slane %v2363, 2
    %v2365 = vadd.f32 %v2363, %v2364
    %v2366 = vrot.slane %v2365, 1
    %v2367 = vadd.f32 %v2365, %v2366
    %v2368 = vmul.f32 %v2367, %v819
    %v2369 = vmul.f32 %v2368, %v2368
    %2371 = vrot.lane.b32.xlu0 %v2369, 64
    %v2372 = vpop.permute.xlu0 %2371
    %v2374 = vsub.f32 %v2368, %v2372
    %v2375 = vmax.f32 %v2374, 0.0
    %v2376 = vsub.f32 %v2343, %v2368
    %v2377 = vsub.f32 %v2346, %v2368
    %v2378 = vadd.f32 %v2375, 1e-05
    %v2379 = vrsqrt.pop %v2378
    %v2380 = vlaneseq
    %v2381 = vshrl.u32 %v2380, 7
    %v2382 = vsub.s32 0, %v2381
    %v2383 = vrot.slane %v2379, %v2382
    %2385 = vrot.lane.b32.xlu0 %v2383, 64
    %v2386 = vpop.permute.xlu0 %2385
    %v2388 = vmul.f32 %v2376, %v2386
    %v2389 = vmul.f32 %v2377, %v2386
    %v2390 = vlaneseq
    %v2391 = vshrl.u32 %v2390, 7
    %v2392 = vsub.s32 2, %v2391
    %v2393 = vrot.slane %v2138, %v2392
    %v2394 = vmul.f32 %v2388, %v2393
    %v2395 = vmul.f32 %v2389, %v2393
    %v2396 = vlaneseq
    %v2397 = vshrl.u32 %v2396, 7
    %v2398 = vsub.s32 3, %v2397
    %v2399 = vrot.slane %v2138, %v2398
    %v2400 = vadd.f32 %v2394, %v2399
    %v2401 = vadd.f32 %v2395, %v2399
    %v2402 = vadd.f32 %v2135, %v2400
    %v2403 = vadd.f32 %v2136, %v2401
    %s2404 = scalar_lea.vmem %s6, 24
    %v2405 = vld [vmem:[%s2404] sm:$0xf]
    %v2406 = vpack.c.bf16 %v2403, %v2402
    %2407 = vmatprep.subr.bf16.mxu0 0
    %2408 = vmatpush1.bf16.msra.mxu0 %v2406
    %2409 = vmatprep.subr.bf16.mxu0 0
    %2410 = vmatpush1.bf16.msra.mxu0 0
    %2411 = vmatprep.subr.bf16.mxu0 0
    %2412 = vmatpush1.bf16.msra.mxu0 0
    %2413 = vmatprep.subr.bf16.mxu0 0
    %2414 = vmatpush1.bf16.msra.mxu0 0
    %2415 = vmatprep.subr.bf16.mxu0 0
    %2416 = vmatpush1.bf16.msra.mxu0 0
    %2417 = vmatprep.subr.bf16.mxu0 0
    %2418 = vmatpush1.bf16.msra.mxu0 0
    %2419 = vmatprep.subr.bf16.mxu0 0
    %2420 = vmatpush1.bf16.msra.mxu0 0
    %2421 = vmatprep.subr.bf16.mxu0 0
    %2422 = vmatpush1.bf16.msra.mxu0 0
    %2423 = vmatprep.subr.bf16.mxu0 0
    %2424 = vmatpush1.bf16.msra.mxu0 0
    %2425 = vmatprep.subr.bf16.mxu0 0
    %2426 = vmatpush1.bf16.msra.mxu0 0
    %2427 = vmatprep.subr.bf16.mxu0 0
    %2428 = vmatpush1.bf16.msra.mxu0 0
    %2429 = vmatprep.subr.bf16.mxu0 0
    %2430 = vmatpush1.bf16.msra.mxu0 0
    %2431 = vmatprep.subr.bf16.mxu0 0
    %2432 = vmatpush1.bf16.msra.mxu0 0
    %2433 = vmatprep.subr.bf16.mxu0 0
    %2434 = vmatpush1.bf16.msra.mxu0 0
    %2435 = vmatprep.subr.bf16.mxu0 0
    %2436 = vmatpush1.bf16.msra.mxu0 0
    %2437 = vmatprep.subr.bf16.mxu0 0
    %2438 = vmatpush1.bf16.msra.mxu0 0
    %2439 = vmatprep.mubr.bf16.mxu0 0
    %2440 = vmatmul.mubr.bf16.gmra.mrb[0].mxu0 %v1871
    %v2441 = vpop.f32.mrb[0].mxu0
    %v2442 = vadd.f32 0.0, %v2441
    %v2443 = vpop.f32.mrb[0].mxu0
    %v2444 = vpop.f32.mrb[0].mxu0
    %v2445 = vadd.f32 0.0, %v2444
    %v2446 = vpop.f32.mrb[0].mxu0
    %2447 = vdwg.mxu0
    %v2448 = vadd.f32 %v2402, %v2442
    %v2449 = vadd.f32 %v2403, %v2445
    %v2450 = vpack.c.bf16 %v2449, %v2448
    %s2451 = scalar_lea.vmem [#allocation2], 384
    %v2452 = vld [vmem:[%s2451] sm:$0xf]
    %v2453 = vld [vmem:[%s2451 + $0x4] sm:$0xf]
    %v2454 = vld [vmem:[%s2451 + $0x8] sm:$0xf]
    %v2455 = vld [vmem:[%s2451 + $0xc] sm:$0xf]
    %v2456 = vld [vmem:[%s2451 + $0x10] sm:$0xf]
    %v2457 = vld [vmem:[%s2451 + $0x14] sm:$0xf]
    %v2458 = vld [vmem:[%s2451 + $0x18] sm:$0xf]
    %v2459 = vld [vmem:[%s2451 + $0x1c] sm:$0xf]
    %v2460 = vlaneseq
    %v2461 = vshrl.u32 %v2460, 7
    %v2462 = vsub.s32 0, %v2461
    %v2463 = vrot.slane %v2405, %v2462
    %v2472 = vunpack.c.l.b16 %v2452
    %v2473 = vunpack.c.l.b16 %v2453
    %v2474 = vunpack.c.l.b16 %v2454
    %v2475 = vunpack.c.l.b16 %v2455
    %v2476 = vunpack.c.l.b16 %v2456
    %v2477 = vunpack.c.l.b16 %v2457
    %v2478 = vunpack.c.l.b16 %v2458
    %v2479 = vunpack.c.l.b16 %v2459
    %v2480 = vpack.c.b16 %v2473, %v2472
    %v2481 = vpack.c.b16 %v2475, %v2474
    %v2482 = vpack.c.b16 %v2477, %v2476
    %v2483 = vpack.c.b16 %v2479, %v2478
    %v2489 = vsel %vm671, %v2450, 0
    %2491 = vmatprep.subr.bf16.mxu0 0
    %2492 = vmatpush1.bf16.msra.mxu0 %v2480
    %2493 = vmatprep.subr.bf16.mxu0 0
    %2494 = vmatpush1.bf16.msra.mxu0 %v2481
    %2495 = vmatprep.subr.bf16.mxu0 0
    %2496 = vmatpush1.bf16.msra.mxu0 %v2482
    %2497 = vmatprep.subr.bf16.mxu0 0
    %2498 = vmatpush1.bf16.msra.mxu0 %v2483
    %2499 = vmatprep.subr.bf16.mxu0 0
    %2500 = vmatpush1.bf16.msra.mxu0 0
    %2501 = vmatprep.subr.bf16.mxu0 0
    %2502 = vmatpush1.bf16.msra.mxu0 0
    %2503 = vmatprep.subr.bf16.mxu0 0
    %2504 = vmatpush1.bf16.msra.mxu0 0
    %2505 = vmatprep.subr.bf16.mxu0 0
    %2506 = vmatpush1.bf16.msra.mxu0 0
    %2507 = vmatprep.subr.bf16.mxu0 0
    %2508 = vmatpush1.bf16.msra.mxu0 0
    %2509 = vmatprep.subr.bf16.mxu0 0
    %2510 = vmatpush1.bf16.msra.mxu0 0
    %2511 = vmatprep.subr.bf16.mxu0 0
    %2512 = vmatpush1.bf16.msra.mxu0 0
    %2513 = vmatprep.subr.bf16.mxu0 0
    %2514 = vmatpush1.bf16.msra.mxu0 0
    %2515 = vmatprep.subr.bf16.mxu0 0
    %2516 = vmatpush1.bf16.msra.mxu0 0
    %2517 = vmatprep.subr.bf16.mxu0 0
    %2518 = vmatpush1.bf16.msra.mxu0 0
    %2519 = vmatprep.subr.bf16.mxu0 0
    %2520 = vmatpush1.bf16.msra.mxu0 0
    %2521 = vmatprep.subr.bf16.mxu0 0
    %2522 = vmatpush1.bf16.msra.mxu0 0
    %2523 = vmatprep.mubr.bf16.mxu0 0
    %2524 = vmatmul.mubr.bf16.gmra.mrb[0].mxu0 %v2489
    %v2525 = vpop.f32.mrb[0].mxu0
    %v2526 = vadd.f32 %v2463, %v2525
    %v2527 = vpop.f32.mrb[0].mxu0
    %v2528 = vpop.f32.mrb[0].mxu0
    %v2529 = vadd.f32 %v2463, %v2528
    %v2530 = vpop.f32.mrb[0].mxu0
    %2531 = vdwg.mxu0
    %v2532 = vmax.f32 %v2526, 0.0
    %v2533 = vmax.f32 %v2529, 0.0
    %v2534 = vpack.c.bf16 %v2533, %v2532
    %s2535 = scalar_lea.vmem [#allocation2], 416
    %v2536 = vld [vmem:[%s2535] sm:$0xf]
    %v2537 = vld [vmem:[%s2535 + $0x4] sm:$0xf]
    %v2538 = vld [vmem:[%s2535 + $0x8] sm:$0xf]
    %v2539 = vld [vmem:[%s2535 + $0xc] sm:$0xf]
    %v2540 = vld [vmem:[%s2535 + $0x10] sm:$0xf]
    %v2541 = vld [vmem:[%s2535 + $0x14] sm:$0xf]
    %v2542 = vld [vmem:[%s2535 + $0x18] sm:$0xf]
    %v2543 = vld [vmem:[%s2535 + $0x1c] sm:$0xf]
    %v2544 = vlaneseq
    %v2545 = vshrl.u32 %v2544, 7
    %v2546 = vsub.s32 1, %v2545
    %v2547 = vrot.slane %v2405, %v2546
    %v2556 = vunpack.c.l.b16 %v2536
    %v2557 = vunpack.c.l.b16 %v2537
    %v2558 = vunpack.c.l.b16 %v2538
    %v2559 = vunpack.c.l.b16 %v2539
    %v2560 = vunpack.c.l.b16 %v2540
    %v2561 = vunpack.c.l.b16 %v2541
    %v2562 = vunpack.c.l.b16 %v2542
    %v2563 = vunpack.c.l.b16 %v2543
    %v2564 = vpack.c.b16 %v2557, %v2556
    %v2565 = vpack.c.b16 %v2559, %v2558
    %v2566 = vpack.c.b16 %v2561, %v2560
    %v2567 = vpack.c.b16 %v2563, %v2562
    %v2573 = vsel %vm671, %v2534, 0
    %2575 = vmatprep.subr.bf16.mxu0 0
    %2576 = vmatpush1.bf16.msra.mxu0 %v2564
    %2577 = vmatprep.subr.bf16.mxu0 0
    %2578 = vmatpush1.bf16.msra.mxu0 %v2565
    %2579 = vmatprep.subr.bf16.mxu0 0
    %2580 = vmatpush1.bf16.msra.mxu0 %v2566
    %2581 = vmatprep.subr.bf16.mxu0 0
    %2582 = vmatpush1.bf16.msra.mxu0 %v2567
    %2583 = vmatprep.subr.bf16.mxu0 0
    %2584 = vmatpush1.bf16.msra.mxu0 0
    %2585 = vmatprep.subr.bf16.mxu0 0
    %2586 = vmatpush1.bf16.msra.mxu0 0
    %2587 = vmatprep.subr.bf16.mxu0 0
    %2588 = vmatpush1.bf16.msra.mxu0 0
    %2589 = vmatprep.subr.bf16.mxu0 0
    %2590 = vmatpush1.bf16.msra.mxu0 0
    %2591 = vmatprep.subr.bf16.mxu0 0
    %2592 = vmatpush1.bf16.msra.mxu0 0
    %2593 = vmatprep.subr.bf16.mxu0 0
    %2594 = vmatpush1.bf16.msra.mxu0 0
    %2595 = vmatprep.subr.bf16.mxu0 0
    %2596 = vmatpush1.bf16.msra.mxu0 0
    %2597 = vmatprep.subr.bf16.mxu0 0
    %2598 = vmatpush1.bf16.msra.mxu0 0
    %2599 = vmatprep.subr.bf16.mxu0 0
    %2600 = vmatpush1.bf16.msra.mxu0 0
    %2601 = vmatprep.subr.bf16.mxu0 0
    %2602 = vmatpush1.bf16.msra.mxu0 0
    %2603 = vmatprep.subr.bf16.mxu0 0
    %2604 = vmatpush1.bf16.msra.mxu0 0
    %2605 = vmatprep.subr.bf16.mxu0 0
    %2606 = vmatpush1.bf16.msra.mxu0 0
    %2607 = vmatprep.mubr.bf16.mxu0 0
    %2608 = vmatmul.mubr.bf16.gmra.mrb[0].mxu0 %v2573
    %v2609 = vpop.f32.mrb[0].mxu0
    %v2610 = vadd.f32 %v2547, %v2609
    %v2611 = vpop.f32.mrb[0].mxu0
    %v2612 = vpop.f32.mrb[0].mxu0
    %v2613 = vadd.f32 %v2547, %v2612
    %v2614 = vpop.f32.mrb[0].mxu0
    %2615 = vdwg.mxu0
    %v2616 = vmul.f32 %v2610, %v2610
    %v2617 = vmul.f32 %v2613, %v2613
    %2620 = vrot.lane.b32.xlu0 %v2616, 64
    %v2621 = vpop.permute.xlu0 %2620
    %2622 = vrot.lane.b32.xlu0 %v2617, 64
    %v2623 = vpop.permute.xlu0 %2622
    %v2626 = vsel %vm671, %v2610, %v2621
    %v2627 = vsel %vm671, %v2613, %v2623
    %v2628 = vadd.f32 %v2626, %v2627
    %v2629 = vrot.slane %v2628, 4
    %v2630 = vadd.f32 %v2628, %v2629
    %v2631 = vrot.slane %v2630, 2
    %v2632 = vadd.f32 %v2630, %v2631
    %v2633 = vrot.slane %v2632, 1
    %v2634 = vadd.f32 %v2632, %v2633
    %v2635 = vmul.f32 %v2634, %v819
    %v2636 = vmul.f32 %v2635, %v2635
    %2638 = vrot.lane.b32.xlu0 %v2636, 64
    %v2639 = vpop.permute.xlu0 %2638
    %v2641 = vsub.f32 %v2635, %v2639
    %v2642 = vmax.f32 %v2641, 0.0
    %v2643 = vsub.f32 %v2610, %v2635
    %v2644 = vsub.f32 %v2613, %v2635
    %v2645 = vadd.f32 %v2642, 1e-05
    %v2646 = vrsqrt.pop %v2645
    %v2647 = vlaneseq
    %v2648 = vshrl.u32 %v2647, 7
    %v2649 = vsub.s32 0, %v2648
    %v2650 = vrot.slane %v2646, %v2649
    %2652 = vrot.lane.b32.xlu0 %v2650, 64
    %v2653 = vpop.permute.xlu0 %2652
    %v2655 = vmul.f32 %v2643, %v2653
    %v2656 = vmul.f32 %v2644, %v2653
    %v2657 = vlaneseq
    %v2658 = vshrl.u32 %v2657, 7
    %v2659 = vsub.s32 2, %v2658
    %v2660 = vrot.slane %v2405, %v2659
    %v2661 = vmul.f32 %v2655, %v2660
    %v2662 = vmul.f32 %v2656, %v2660
    %v2663 = vlaneseq
    %v2664 = vshrl.u32 %v2663, 7
    %v2665 = vsub.s32 3, %v2664
    %v2666 = vrot.slane %v2405, %v2665
    %v2667 = vadd.f32 %v2661, %v2666
    %v2668 = vadd.f32 %v2662, %v2666
    %v2669 = vadd.f32 %v2402, %v2667
    %v2670 = vadd.f32 %v2403, %v2668
    %s2671 = scalar_lea.vmem %s6, 28
    %v2672 = vld [vmem:[%s2671] sm:$0xf]
    %v2673 = vpack.c.bf16 %v2670, %v2669
    %2674 = vmatprep.subr.bf16.mxu0 0
    %2675 = vmatpush1.bf16.msra.mxu0 %v2673
    %2676 = vmatprep.subr.bf16.mxu0 0
    %2677 = vmatpush1.bf16.msra.mxu0 0
    %2678 = vmatprep.subr.bf16.mxu0 0
    %2679 = vmatpush1.bf16.msra.mxu0 0
    %2680 = vmatprep.subr.bf16.mxu0 0
    %2681 = vmatpush1.bf16.msra.mxu0 0
    %2682 = vmatprep.subr.bf16.mxu0 0
    %2683 = vmatpush1.bf16.msra.mxu0 0
    %2684 = vmatprep.subr.bf16.mxu0 0
    %2685 = vmatpush1.bf16.msra.mxu0 0
    %2686 = vmatprep.subr.bf16.mxu0 0
    %2687 = vmatpush1.bf16.msra.mxu0 0
    %2688 = vmatprep.subr.bf16.mxu0 0
    %2689 = vmatpush1.bf16.msra.mxu0 0
    %2690 = vmatprep.subr.bf16.mxu0 0
    %2691 = vmatpush1.bf16.msra.mxu0 0
    %2692 = vmatprep.subr.bf16.mxu0 0
    %2693 = vmatpush1.bf16.msra.mxu0 0
    %2694 = vmatprep.subr.bf16.mxu0 0
    %2695 = vmatpush1.bf16.msra.mxu0 0
    %2696 = vmatprep.subr.bf16.mxu0 0
    %2697 = vmatpush1.bf16.msra.mxu0 0
    %2698 = vmatprep.subr.bf16.mxu0 0
    %2699 = vmatpush1.bf16.msra.mxu0 0
    %2700 = vmatprep.subr.bf16.mxu0 0
    %2701 = vmatpush1.bf16.msra.mxu0 0
    %2702 = vmatprep.subr.bf16.mxu0 0
    %2703 = vmatpush1.bf16.msra.mxu0 0
    %2704 = vmatprep.subr.bf16.mxu0 0
    %2705 = vmatpush1.bf16.msra.mxu0 0
    %2706 = vmatprep.mubr.bf16.mxu0 0
    %2707 = vmatmul.mubr.bf16.gmra.mrb[0].mxu0 %v1871
    %v2708 = vpop.f32.mrb[0].mxu0
    %v2709 = vadd.f32 0.0, %v2708
    %v2710 = vpop.f32.mrb[0].mxu0
    %v2711 = vpop.f32.mrb[0].mxu0
    %v2712 = vadd.f32 0.0, %v2711
    %v2713 = vpop.f32.mrb[0].mxu0
    %2714 = vdwg.mxu0
    %v2715 = vadd.f32 %v2669, %v2709
    %v2716 = vadd.f32 %v2670, %v2712
    %v2717 = vpack.c.bf16 %v2716, %v2715
    %s2718 = scalar_lea.vmem [#allocation2], 448
    %v2719 = vld [vmem:[%s2718] sm:$0xf]
    %v2720 = vld [vmem:[%s2718 + $0x4] sm:$0xf]
    %v2721 = vld [vmem:[%s2718 + $0x8] sm:$0xf]
    %v2722 = vld [vmem:[%s2718 + $0xc] sm:$0xf]
    %v2723 = vld [vmem:[%s2718 + $0x10] sm:$0xf]
    %v2724 = vld [vmem:[%s2718 + $0x14] sm:$0xf]
    %v2725 = vld [vmem:[%s2718 + $0x18] sm:$0xf]
    %v2726 = vld [vmem:[%s2718 + $0x1c] sm:$0xf]
    %v2727 = vlaneseq
    %v2728 = vshrl.u32 %v2727, 7
    %v2729 = vsub.s32 0, %v2728
    %v2730 = vrot.slane %v2672, %v2729
    %v2739 = vunpack.c.l.b16 %v2719
    %v2740 = vunpack.c.l.b16 %v2720
    %v2741 = vunpack.c.l.b16 %v2721
    %v2742 = vunpack.c.l.b16 %v2722
    %v2743 = vunpack.c.l.b16 %v2723
    %v2744 = vunpack.c.l.b16 %v2724
    %v2745 = vunpack.c.l.b16 %v2725
    %v2746 = vunpack.c.l.b16 %v2726
    %v2747 = vpack.c.b16 %v2740, %v2739
    %v2748 = vpack.c.b16 %v2742, %v2741
    %v2749 = vpack.c.b16 %v2744, %v2743
    %v2750 = vpack.c.b16 %v2746, %v2745
    %v2756 = vsel %vm671, %v2717, 0
    %2758 = vmatprep.subr.bf16.mxu0 0
    %2759 = vmatpush1.bf16.msra.mxu0 %v2747
    %2760 = vmatprep.subr.bf16.mxu0 0
    %2761 = vmatpush1.bf16.msra.mxu0 %v2748
    %2762 = vmatprep.subr.bf16.mxu0 0
    %2763 = vmatpush1.bf16.msra.mxu0 %v2749
    %2764 = vmatprep.subr.bf16.mxu0 0
    %2765 = vmatpush1.bf16.msra.mxu0 %v2750
    %2766 = vmatprep.subr.bf16.mxu0 0
    %2767 = vmatpush1.bf16.msra.mxu0 0
    %2768 = vmatprep.subr.bf16.mxu0 0
    %2769 = vmatpush1.bf16.msra.mxu0 0
    %2770 = vmatprep.subr.bf16.mxu0 0
    %2771 = vmatpush1.bf16.msra.mxu0 0
    %2772 = vmatprep.subr.bf16.mxu0 0
    %2773 = vmatpush1.bf16.msra.mxu0 0
    %2774 = vmatprep.subr.bf16.mxu0 0
    %2775 = vmatpush1.bf16.msra.mxu0 0
    %2776 = vmatprep.subr.bf16.mxu0 0
    %2777 = vmatpush1.bf16.msra.mxu0 0
    %2778 = vmatprep.subr.bf16.mxu0 0
    %2779 = vmatpush1.bf16.msra.mxu0 0
    %2780 = vmatprep.subr.bf16.mxu0 0
    %2781 = vmatpush1.bf16.msra.mxu0 0
    %2782 = vmatprep.subr.bf16.mxu0 0
    %2783 = vmatpush1.bf16.msra.mxu0 0
    %2784 = vmatprep.subr.bf16.mxu0 0
    %2785 = vmatpush1.bf16.msra.mxu0 0
    %2786 = vmatprep.subr.bf16.mxu0 0
    %2787 = vmatpush1.bf16.msra.mxu0 0
    %2788 = vmatprep.subr.bf16.mxu0 0
    %2789 = vmatpush1.bf16.msra.mxu0 0
    %2790 = vmatprep.mubr.bf16.mxu0 0
    %2791 = vmatmul.mubr.bf16.gmra.mrb[0].mxu0 %v2756
    %v2792 = vpop.f32.mrb[0].mxu0
    %v2793 = vadd.f32 %v2730, %v2792
    %v2794 = vpop.f32.mrb[0].mxu0
    %v2795 = vpop.f32.mrb[0].mxu0
    %v2796 = vadd.f32 %v2730, %v2795
    %v2797 = vpop.f32.mrb[0].mxu0
    %2798 = vdwg.mxu0
    %v2799 = vmax.f32 %v2793, 0.0
    %v2800 = vmax.f32 %v2796, 0.0
    %v2801 = vpack.c.bf16 %v2800, %v2799
    %s2802 = scalar_lea.vmem [#allocation2], 480
    %v2803 = vld [vmem:[%s2802] sm:$0xf]
    %v2804 = vld [vmem:[%s2802 + $0x4] sm:$0xf]
    %v2805 = vld [vmem:[%s2802 + $0x8] sm:$0xf]
    %v2806 = vld [vmem:[%s2802 + $0xc] sm:$0xf]
    %v2807 = vld [vmem:[%s2802 + $0x10] sm:$0xf]
    %v2808 = vld [vmem:[%s2802 + $0x14] sm:$0xf]
    %v2809 = vld [vmem:[%s2802 + $0x18] sm:$0xf]
    %v2810 = vld [vmem:[%s2802 + $0x1c] sm:$0xf]
    %v2811 = vlaneseq
    %v2812 = vshrl.u32 %v2811, 7
    %v2813 = vsub.s32 1, %v2812
    %v2814 = vrot.slane %v2672, %v2813
    %v2823 = vunpack.c.l.b16 %v2803
    %v2824 = vunpack.c.l.b16 %v2804
    %v2825 = vunpack.c.l.b16 %v2805
    %v2826 = vunpack.c.l.b16 %v2806
    %v2827 = vunpack.c.l.b16 %v2807
    %v2828 = vunpack.c.l.b16 %v2808
    %v2829 = vunpack.c.l.b16 %v2809
    %v2830 = vunpack.c.l.b16 %v2810
    %v2831 = vpack.c.b16 %v2824, %v2823
    %v2832 = vpack.c.b16 %v2826, %v2825
    %v2833 = vpack.c.b16 %v2828, %v2827
    %v2834 = vpack.c.b16 %v2830, %v2829
    %v2840 = vsel %vm671, %v2801, 0
    %2842 = vmatprep.subr.bf16.mxu0 0
    %2843 = vmatpush1.bf16.msra.mxu0 %v2831
    %2844 = vmatprep.subr.bf16.mxu0 0
    %2845 = vmatpush1.bf16.msra.mxu0 %v2832
    %2846 = vmatprep.subr.bf16.mxu0 0
    %2847 = vmatpush1.bf16.msra.mxu0 %v2833
    %2848 = vmatprep.subr.bf16.mxu0 0
    %2849 = vmatpush1.bf16.msra.mxu0 %v2834
    %2850 = vmatprep.subr.bf16.mxu0 0
    %2851 = vmatpush1.bf16.msra.mxu0 0
    %2852 = vmatprep.subr.bf16.mxu0 0
    %2853 = vmatpush1.bf16.msra.mxu0 0
    %2854 = vmatprep.subr.bf16.mxu0 0
    %2855 = vmatpush1.bf16.msra.mxu0 0
    %2856 = vmatprep.subr.bf16.mxu0 0
    %2857 = vmatpush1.bf16.msra.mxu0 0
    %2858 = vmatprep.subr.bf16.mxu0 0
    %2859 = vmatpush1.bf16.msra.mxu0 0
    %2860 = vmatprep.subr.bf16.mxu0 0
    %2861 = vmatpush1.bf16.msra.mxu0 0
    %2862 = vmatprep.subr.bf16.mxu0 0
    %2863 = vmatpush1.bf16.msra.mxu0 0
    %2864 = vmatprep.subr.bf16.mxu0 0
    %2865 = vmatpush1.bf16.msra.mxu0 0
    %2866 = vmatprep.subr.bf16.mxu0 0
    %2867 = vmatpush1.bf16.msra.mxu0 0
    %2868 = vmatprep.subr.bf16.mxu0 0
    %2869 = vmatpush1.bf16.msra.mxu0 0
    %2870 = vmatprep.subr.bf16.mxu0 0
    %2871 = vmatpush1.bf16.msra.mxu0 0
    %2872 = vmatprep.subr.bf16.mxu0 0
    %2873 = vmatpush1.bf16.msra.mxu0 0
    %2874 = vmatprep.mubr.bf16.mxu0 0
    %2875 = vmatmul.mubr.bf16.gmra.mrb[0].mxu0 %v2840
    %v2876 = vpop.f32.mrb[0].mxu0
    %v2877 = vadd.f32 %v2814, %v2876
    %v2878 = vpop.f32.mrb[0].mxu0
    %v2879 = vpop.f32.mrb[0].mxu0
    %v2880 = vadd.f32 %v2814, %v2879
    %v2881 = vpop.f32.mrb[0].mxu0
    %2882 = vdwg.mxu0
    %v2883 = vmul.f32 %v2877, %v2877
    %v2884 = vmul.f32 %v2880, %v2880
    %2887 = vrot.lane.b32.xlu0 %v2883, 64
    %v2888 = vpop.permute.xlu0 %2887
    %2889 = vrot.lane.b32.xlu0 %v2884, 64
    %v2890 = vpop.permute.xlu0 %2889
    %v2893 = vsel %vm671, %v2877, %v2888
    %v2894 = vsel %vm671, %v2880, %v2890
    %v2895 = vadd.f32 %v2893, %v2894
    %v2896 = vrot.slane %v2895, 4
    %v2897 = vadd.f32 %v2895, %v2896
    %v2898 = vrot.slane %v2897, 2
    %v2899 = vadd.f32 %v2897, %v2898
    %v2900 = vrot.slane %v2899, 1
    %v2901 = vadd.f32 %v2899, %v2900
    %v2902 = vmul.f32 %v2901, %v819
    %v2903 = vmul.f32 %v2902, %v2902
    %2905 = vrot.lane.b32.xlu0 %v2903, 64
    %v2906 = vpop.permute.xlu0 %2905
    %v2908 = vsub.f32 %v2902, %v2906
    %v2909 = vmax.f32 %v2908, 0.0
    %v2910 = vsub.f32 %v2877, %v2902
    %v2911 = vsub.f32 %v2880, %v2902
    %v2912 = vadd.f32 %v2909, 1e-05
    %v2913 = vrsqrt.pop %v2912
    %v2914 = vlaneseq
    %v2915 = vshrl.u32 %v2914, 7
    %v2916 = vsub.s32 0, %v2915
    %v2917 = vrot.slane %v2913, %v2916
    %2919 = vrot.lane.b32.xlu0 %v2917, 64
    %v2920 = vpop.permute.xlu0 %2919
    %v2922 = vmul.f32 %v2910, %v2920
    %v2923 = vmul.f32 %v2911, %v2920
    %v2924 = vlaneseq
    %v2925 = vshrl.u32 %v2924, 7
    %v2926 = vsub.s32 2, %v2925
    %v2927 = vrot.slane %v2672, %v2926
    %v2928 = vmul.f32 %v2922, %v2927
    %v2929 = vmul.f32 %v2923, %v2927
    %v2930 = vlaneseq
    %v2931 = vshrl.u32 %v2930, 7
    %v2932 = vsub.s32 3, %v2931
    %v2933 = vrot.slane %v2672, %v2932
    %v2934 = vadd.f32 %v2928, %v2933
    %v2935 = vadd.f32 %v2929, %v2933
    %v2936 = vadd.f32 %v2669, %v2934
    %v2937 = vadd.f32 %v2670, %v2935
    %v2938 = vpack.c.bf16 %v1821, %v1820
    %2940 = vset.pattern.permute.xlu0 0
    %2941 = vperm.xlu0 %2940, %v67
    %v2942 = vpop.permute.xlu0 %2941
    %2945 = vset.pattern.permute.xlu0 0
    %2946 = vperm.xlu0 %2945, %v68
    %v2947 = vpop.permute.xlu0 %2946
    %v2949 = vlaneseq
    %v2950 = vshrl.u32 %v2949, 7
    %v2951 = vsub.s32 0, %v2950
    %v2952 = vrot.slane %v69, %v2951
    %v2953 = vlaneseq
    %v2954 = vshrl.u32 %v2953, 7
    %v2955 = vsub.s32 0, %v2954
    %v2956 = vrot.slane %v70, %v2955
    %v2957 = vlaneseq
    %v2958 = vshrl.u32 %v2957, 7
    %v2959 = vsub.s32 0, %v2958
    %v2960 = vrot.slane %v71, %v2959
    %v2961 = vmul.f32 %v2942, %v2952
    %v2962 = vmul.f32 %v2942, %v2956
    %v2963 = vmul.f32 %v2942, %v2960
    %v2964 = vmul.f32 %v2947, %v2952
    %v2965 = vmul.f32 %v2947, %v2956
    %v2966 = vmul.f32 %v2947, %v2960
    %v2983 = vunpack.c.l.b16 %v72
    %v2984 = vunpack.c.h.b16 %v72
    %v2985 = vunpack.c.l.b16 %v73
    %v2986 = vunpack.c.l.b16 %v74
    %v2987 = vunpack.c.h.b16 %v74
    %v2988 = vunpack.c.l.b16 %v75
    %v2989 = vunpack.c.l.b16 %v76
    %v2990 = vunpack.c.h.b16 %v76
    %v2991 = vunpack.c.l.b16 %v77
    %v2992 = vunpack.c.l.b16 %v78
    %v2993 = vunpack.c.h.b16 %v78
    %v2994 = vunpack.c.l.b16 %v79
    %v2995 = vunpack.c.l.b16 %v80
    %v2996 = vunpack.c.h.b16 %v80
    %v2997 = vunpack.c.l.b16 %v81
    %v2998 = vunpack.c.l.b16 %v82
    %v2999 = vunpack.c.h.b16 %v82
    %v3000 = vunpack.c.l.b16 %v83
    %v3001 = vunpack.c.l.b16 %v84
    %v3002 = vunpack.c.h.b16 %v84
    %v3003 = vunpack.c.l.b16 %v85
    %v3004 = vunpack.c.l.b16 %v86
    %v3005 = vunpack.c.h.b16 %v86
    %v3006 = vunpack.c.l.b16 %v87
    %v3007 = vpack.c.b16 %v2986, %v2983
    %v3008 = vpack.c.b16 %v2987, %v2984
    %v3009 = vpack.c.b16 %v2988, %v2985
    %v3010 = vpack.c.b16 %v2992, %v2989
    %v3011 = vpack.c.b16 %v2993, %v2990
    %v3012 = vpack.c.b16 %v2994, %v2991
    %v3013 = vpack.c.b16 %v2998, %v2995
    %v3014 = vpack.c.b16 %v2999, %v2996
    %v3015 = vpack.c.b16 %v3000, %v2997
    %v3016 = vpack.c.b16 %v3004, %v3001
    %v3017 = vpack.c.b16 %v3005, %v3002
    %v3018 = vpack.c.b16 %v3006, %v3003
    %v3032 = vsel %vm671, %v2938, 0
    %3034 = vmatprep.subr.bf16.mxu0 %v3008
    %3035 = vmatpush1.bf16.msra.mxu0 %v3007
    %3036 = vmatprep.subr.bf16.mxu0 %v3011
    %3037 = vmatpush1.bf16.msra.mxu0 %v3010
    %3038 = vmatprep.subr.bf16.mxu0 %v3014
    %3039 = vmatpush1.bf16.msra.mxu0 %v3013
    %3040 = vmatprep.subr.bf16.mxu0 %v3017
    %3041 = vmatpush1.bf16.msra.mxu0 %v3016
    %3042 = vmatprep.subr.bf16.mxu0 0
    %3043 = vmatpush1.bf16.msra.mxu0 0
    %3044 = vmatprep.subr.bf16.mxu0 0
    %3045 = vmatpush1.bf16.msra.mxu0 0
    %3046 = vmatprep.subr.bf16.mxu0 0
    %3047 = vmatpush1.bf16.msra.mxu0 0
    %3048 = vmatprep.subr.bf16.mxu0 0
    %3049 = vmatpush1.bf16.msra.mxu0 0
    %3050 = vmatprep.subr.bf16.mxu0 0
    %3051 = vmatpush1.bf16.msra.mxu0 0
    %3052 = vmatprep.subr.bf16.mxu0 0
    %3053 = vmatpush1.bf16.msra.mxu0 0
    %3054 = vmatprep.subr.bf16.mxu0 0
    %3055 = vmatpush1.bf16.msra.mxu0 0
    %3056 = vmatprep.subr.bf16.mxu0 0
    %3057 = vmatpush1.bf16.msra.mxu0 0
    %3058 = vmatprep.subr.bf16.mxu0 0
    %3059 = vmatpush1.bf16.msra.mxu0 0
    %3060 = vmatprep.subr.bf16.mxu0 0
    %3061 = vmatpush1.bf16.msra.mxu0 0
    %3062 = vmatprep.subr.bf16.mxu0 0
    %3063 = vmatpush1.bf16.msra.mxu0 0
    %3064 = vmatprep.subr.bf16.mxu0 0
    %3065 = vmatpush1.bf16.msra.mxu0 0
    %3066 = vmatprep.mubr.bf16.mxu0 0
    %3067 = vmatmul.mubr.bf16.gmra.mrb[0].mxu0 %v3032
    %v3068 = vpop.f32.mrb[0].mxu0
    %v3069 = vadd.f32 %v2961, %v3068
    %v3070 = vpop.f32.mrb[0].mxu0
    %v3071 = vadd.f32 %v2962, %v3070
    %v3072 = vpop.f32.mrb[0].mxu0
    %v3073 = vadd.f32 %v2964, %v3072
    %v3074 = vpop.f32.mrb[0].mxu0
    %v3075 = vadd.f32 %v2965, %v3074
    %3076 = vdwg.mxu0
    %3077 = vmatprep.subr.bf16.mxu0 0
    %3078 = vmatpush1.bf16.msra.mxu0 %v3009
    %3079 = vmatprep.subr.bf16.mxu0 0
    %3080 = vmatpush1.bf16.msra.mxu0 %v3012
    %3081 = vmatprep.subr.bf16.mxu0 0
    %3082 = vmatpush1.bf16.msra.mxu0 %v3015
    %3083 = vmatprep.subr.bf16.mxu0 0
    %3084 = vmatpush1.bf16.msra.mxu0 %v3018
    %3085 = vmatprep.subr.bf16.mxu0 0
    %3086 = vmatpush1.bf16.msra.mxu0 0
    %3087 = vmatprep.subr.bf16.mxu0 0
    %3088 = vmatpush1.bf16.msra.mxu0 0
    %3089 = vmatprep.subr.bf16.mxu0 0
    %3090 = vmatpush1.bf16.msra.mxu0 0
    %3091 = vmatprep.subr.bf16.mxu0 0
    %3092 = vmatpush1.bf16.msra.mxu0 0
    %3093 = vmatprep.subr.bf16.mxu0 0
    %3094 = vmatpush1.bf16.msra.mxu0 0
    %3095 = vmatprep.subr.bf16.mxu0 0
    %3096 = vmatpush1.bf16.msra.mxu0 0
    %3097 = vmatprep.subr.bf16.mxu0 0
    %3098 = vmatpush1.bf16.msra.mxu0 0
    %3099 = vmatprep.subr.bf16.mxu0 0
    %3100 = vmatpush1.bf16.msra.mxu0 0
    %3101 = vmatprep.subr.bf16.mxu0 0
    %3102 = vmatpush1.bf16.msra.mxu0 0
    %3103 = vmatprep.subr.bf16.mxu0 0
    %3104 = vmatpush1.bf16.msra.mxu0 0
    %3105 = vmatprep.subr.bf16.mxu0 0
    %3106 = vmatpush1.bf16.msra.mxu0 0
    %3107 = vmatprep.subr.bf16.mxu0 0
    %3108 = vmatpush1.bf16.msra.mxu0 0
    %3109 = vmatprep.mubr.bf16.mxu0 0
    %3110 = vmatmul.mubr.bf16.gmra.mrb[0].mxu0 %v3032
    %v3111 = vpop.f32.mrb[0].mxu0
    %v3112 = vadd.f32 %v2963, %v3111
    %v3113 = vpop.f32.mrb[0].mxu0
    %v3114 = vpop.f32.mrb[0].mxu0
    %v3115 = vadd.f32 %v2966, %v3114
    %v3116 = vpop.f32.mrb[0].mxu0
    %3117 = vdwg.mxu0
    %v3118 = vpack.c.bf16 %v3075, %v3071
    %v3120 = vsel %vm525, %v205, 0
    %3122 = vmatprep.subr.bf16.mxu0 0
    %3123 = vmatpush1.bf16.msra.mxu0 %v3118
    %3124 = vmatprep.subr.bf16.mxu0 0
    %3125 = vmatpush1.bf16.msra.mxu0 0
    %3126 = vmatprep.subr.bf16.mxu0 0
    %3127 = vmatpush1.bf16.msra.mxu0 0
    %3128 = vmatprep.subr.bf16.mxu0 0
    %3129 = vmatpush1.bf16.msra.mxu0 0
    %3130 = vmatprep.subr.bf16.mxu0 0
    %3131 = vmatpush1.bf16.msra.mxu0 0
    %3132 = vmatprep.subr.bf16.mxu0 0
    %3133 = vmatpush1.bf16.msra.mxu0 0
    %3134 = vmatprep.subr.bf16.mxu0 0
    %3135 = vmatpush1.bf16.msra.mxu0 0
    %3136 = vmatprep.subr.bf16.mxu0 0
    %3137 = vmatpush1.bf16.msra.mxu0 0
    %3138 = vmatprep.subr.bf16.mxu0 0
    %3139 = vmatpush1.bf16.msra.mxu0 0
    %3140 = vmatprep.subr.bf16.mxu0 0
    %3141 = vmatpush1.bf16.msra.mxu0 0
    %3142 = vmatprep.subr.bf16.mxu0 0
    %3143 = vmatpush1.bf16.msra.mxu0 0
    %3144 = vmatprep.subr.bf16.mxu0 0
    %3145 = vmatpush1.bf16.msra.mxu0 0
    %3146 = vmatprep.subr.bf16.mxu0 0
    %3147 = vmatpush1.bf16.msra.mxu0 0
    %3148 = vmatprep.subr.bf16.mxu0 0
    %3149 = vmatpush1.bf16.msra.mxu0 0
    %3150 = vmatprep.subr.bf16.mxu0 0
    %3151 = vmatpush1.bf16.msra.mxu0 0
    %3152 = vmatprep.subr.bf16.mxu0 0
    %3153 = vmatpush1.bf16.msra.mxu0 0
    %3154 = vmatprep.mubr.bf16.mxu0 0
    %3155 = vmatmul.mubr.bf16.gmra.mrb[0].mxu0 %v3120
    %v3156 = vpop.f32.mrb[0].mxu0
    %v3157 = vadd.f32 0.0, %v3156
    %v3158 = vpop.f32.mrb[0].mxu0
    %v3159 = vpop.f32.mrb[0].mxu0
    %v3160 = vpop.f32.mrb[0].mxu0
    %3161 = vdwg.mxu0
    %v3163 = vsel %vm525, %v212, 0
    %3165 = vmatprep.subr.bf16.mxu0 0
    %3166 = vmatpush1.bf16.msra.mxu0 %v3118
    %3167 = vmatprep.subr.bf16.mxu0 0
    %3168 = vmatpush1.bf16.msra.mxu0 0
    %3169 = vmatprep.subr.bf16.mxu0 0
    %3170 = vmatpush1.bf16.msra.mxu0 0
    %3171 = vmatprep.subr.bf16.mxu0 0
    %3172 = vmatpush1.bf16.msra.mxu0 0
    %3173 = vmatprep.subr.bf16.mxu0 0
    %3174 = vmatpush1.bf16.msra.mxu0 0
    %3175 = vmatprep.subr.bf16.mxu0 0
    %3176 = vmatpush1.bf16.msra.mxu0 0
    %3177 = vmatprep.subr.bf16.mxu0 0
    %3178 = vmatpush1.bf16.msra.mxu0 0
    %3179 = vmatprep.subr.bf16.mxu0 0
    %3180 = vmatpush1.bf16.msra.mxu0 0
    %3181 = vmatprep.subr.bf16.mxu0 0
    %3182 = vmatpush1.bf16.msra.mxu0 0
    %3183 = vmatprep.subr.bf16.mxu0 0
    %3184 = vmatpush1.bf16.msra.mxu0 0
    %3185 = vmatprep.subr.bf16.mxu0 0
    %3186 = vmatpush1.bf16.msra.mxu0 0
    %3187 = vmatprep.subr.bf16.mxu0 0
    %3188 = vmatpush1.bf16.msra.mxu0 0
    %3189 = vmatprep.subr.bf16.mxu0 0
    %3190 = vmatpush1.bf16.msra.mxu0 0
    %3191 = vmatprep.subr.bf16.mxu0 0
    %3192 = vmatpush1.bf16.msra.mxu0 0
    %3193 = vmatprep.subr.bf16.mxu0 0
    %3194 = vmatpush1.bf16.msra.mxu0 0
    %3195 = vmatprep.subr.bf16.mxu0 0
    %3196 = vmatpush1.bf16.msra.mxu0 0
    %3197 = vmatprep.mubr.bf16.mxu0 0
    %3198 = vmatmul.mubr.bf16.gmra.mrb[0].mxu0 %v3163
    %v3199 = vpop.f32.mrb[0].mxu0
    %v3200 = vadd.f32 0.0, %v3199
    %v3201 = vpop.f32.mrb[0].mxu0
    %v3202 = vpop.f32.mrb[0].mxu0
    %v3203 = vpop.f32.mrb[0].mxu0
    %3204 = vdwg.mxu0
    %v3205 = vpack.c.bf16 %v3157, %v3157
    %vm3206 = vcmask 15360
    %v3208 = vsel %vm3206, %v225, 0
    %vm3210 = vcmask 1040384
    %v3212 = vsel %vm3210, %v3205, 0
    %3214 = vmatprep.subr.bf16.mxu0 0
    %3215 = vmatpush1.bf16.msra.mxu0 %v3212
    %3216 = vmatprep.subr.bf16.mxu0 0
    %3217 = vmatpush1.bf16.msra.mxu0 0
    %3218 = vmatprep.subr.bf16.mxu0 0
    %3219 = vmatpush1.bf16.msra.mxu0 0
    %3220 = vmatprep.subr.bf16.mxu0 0
    %3221 = vmatpush1.bf16.msra.mxu0 0
    %3222 = vmatprep.subr.bf16.mxu0 0
    %3223 = vmatpush1.bf16.msra.mxu0 0
    %3224 = vmatprep.subr.bf16.mxu0 0
    %3225 = vmatpush1.bf16.msra.mxu0 0
    %3226 = vmatprep.subr.bf16.mxu0 0
    %3227 = vmatpush1.bf16.msra.mxu0 0
    %3228 = vmatprep.subr.bf16.mxu0 0
    %3229 = vmatpush1.bf16.msra.mxu0 0
    %3230 = vmatprep.subr.bf16.mxu0 0
    %3231 = vmatpush1.bf16.msra.mxu0 0
    %3232 = vmatprep.subr.bf16.mxu0 0
    %3233 = vmatpush1.bf16.msra.mxu0 0
    %3234 = vmatprep.subr.bf16.mxu0 0
    %3235 = vmatpush1.bf16.msra.mxu0 0
    %3236 = vmatprep.subr.bf16.mxu0 0
    %3237 = vmatpush1.bf16.msra.mxu0 0
    %3238 = vmatprep.subr.bf16.mxu0 0
    %3239 = vmatpush1.bf16.msra.mxu0 0
    %3240 = vmatprep.subr.bf16.mxu0 0
    %3241 = vmatpush1.bf16.msra.mxu0 0
    %3242 = vmatprep.subr.bf16.mxu0 0
    %3243 = vmatpush1.bf16.msra.mxu0 0
    %3244 = vmatprep.subr.bf16.mxu0 0
    %3245 = vmatpush1.bf16.msra.mxu0 0
    %3246 = vmatprep.mubr.bf16.mxu0 0
    %3247 = vmatmul.mubr.bf16.gmra.mrb[0].mxu0 %v3208
    %v3248 = vpop.f32.mrb[0].mxu0
    %v3249 = vadd.f32 0.0, %v3248
    %v3250 = vpop.f32.mrb[0].mxu0
    %v3251 = vpop.f32.mrb[0].mxu0
    %v3252 = vadd.f32 0.0, %v3251
    %v3253 = vpop.f32.mrb[0].mxu0
    %3254 = vdwg.mxu0
    %v3255 = vpack.c.bf16 %v3200, %v3200
    %v3257 = vsel %vm3210, %v3255, 0
    %3259 = vmatprep.subr.bf16.mxu0 0
    %3260 = vmatpush1.bf16.msra.mxu0 %v3257
    %3261 = vmatprep.subr.bf16.mxu0 0
    %3262 = vmatpush1.bf16.msra.mxu0 0
    %3263 = vmatprep.subr.bf16.mxu0 0
    %3264 = vmatpush1.bf16.msra.mxu0 0
    %3265 = vmatprep.subr.bf16.mxu0 0
    %3266 = vmatpush1.bf16.msra.mxu0 0
    %3267 = vmatprep.subr.bf16.mxu0 0
    %3268 = vmatpush1.bf16.msra.mxu0 0
    %3269 = vmatprep.subr.bf16.mxu0 0
    %3270 = vmatpush1.bf16.msra.mxu0 0
    %3271 = vmatprep.subr.bf16.mxu0 0
    %3272 = vmatpush1.bf16.msra.mxu0 0
    %3273 = vmatprep.subr.bf16.mxu0 0
    %3274 = vmatpush1.bf16.msra.mxu0 0
    %3275 = vmatprep.subr.bf16.mxu0 0
    %3276 = vmatpush1.bf16.msra.mxu0 0
    %3277 = vmatprep.subr.bf16.mxu0 0
    %3278 = vmatpush1.bf16.msra.mxu0 0
    %3279 = vmatprep.subr.bf16.mxu0 0
    %3280 = vmatpush1.bf16.msra.mxu0 0
    %3281 = vmatprep.subr.bf16.mxu0 0
    %3282 = vmatpush1.bf16.msra.mxu0 0
    %3283 = vmatprep.subr.bf16.mxu0 0
    %3284 = vmatpush1.bf16.msra.mxu0 0
    %3285 = vmatprep.subr.bf16.mxu0 0
    %3286 = vmatpush1.bf16.msra.mxu0 0
    %3287 = vmatprep.subr.bf16.mxu0 0
    %3288 = vmatpush1.bf16.msra.mxu0 0
    %3289 = vmatprep.subr.bf16.mxu0 0
    %3290 = vmatpush1.bf16.msra.mxu0 0
    %3291 = vmatprep.mubr.bf16.mxu0 0
    %3292 = vmatmul.mubr.bf16.gmra.mrb[0].mxu0 %v3208
    %v3293 = vpop.f32.mrb[0].mxu0
    %v3294 = vadd.f32 0.0, %v3293
    %v3295 = vpop.f32.mrb[0].mxu0
    %v3296 = vpop.f32.mrb[0].mxu0
    %v3297 = vadd.f32 0.0, %v3296
    %v3298 = vpop.f32.mrb[0].mxu0
    %3299 = vdwg.mxu0
    %v3300 = vmul.f32 %v3069, %v3249
    %v3301 = vmul.f32 %v3073, %v3252
    %v3302 = vmul.f32 %v3069, %v3294
    %v3303 = vmul.f32 %v3073, %v3297
    %v3304 = vpack.c.bf16 %v3301, %v3300
    %v3305 = vpack.c.bf16 %v3303, %v3302
    %v3307 = vsel %vm671, %v3304, 0
    %v3310 = vsel %vm671, %v3305, 0
    %3312 = vmatprep.subr.bf16.mxu0 0
    %3313 = vmatpush1.bf16.msra.mxu0 %v310
    %3314 = vmatprep.subr.bf16.mxu0 0
    %3315 = vmatpush1.bf16.msra.mxu0 %v311
    %3316 = vmatprep.subr.bf16.mxu0 0
    %3317 = vmatpush1.bf16.msra.mxu0 %v312
    %3318 = vmatprep.subr.bf16.mxu0 0
    %3319 = vmatpush1.bf16.msra.mxu0 %v313
    %3320 = vmatprep.subr.bf16.mxu0 0
    %3321 = vmatpush1.bf16.msra.mxu0 0
    %3322 = vmatprep.subr.bf16.mxu0 0
    %3323 = vmatpush1.bf16.msra.mxu0 0
    %3324 = vmatprep.subr.bf16.mxu0 0
    %3325 = vmatpush1.bf16.msra.mxu0 0
    %3326 = vmatprep.subr.bf16.mxu0 0
    %3327 = vmatpush1.bf16.msra.mxu0 0
    %3328 = vmatprep.subr.bf16.mxu0 0
    %3329 = vmatpush1.bf16.msra.mxu0 0
    %3330 = vmatprep.subr.bf16.mxu0 0
    %3331 = vmatpush1.bf16.msra.mxu0 0
    %3332 = vmatprep.subr.bf16.mxu0 0
    %3333 = vmatpush1.bf16.msra.mxu0 0
    %3334 = vmatprep.subr.bf16.mxu0 0
    %3335 = vmatpush1.bf16.msra.mxu0 0
    %3336 = vmatprep.subr.bf16.mxu0 0
    %3337 = vmatpush1.bf16.msra.mxu0 0
    %3338 = vmatprep.subr.bf16.mxu0 0
    %3339 = vmatpush1.bf16.msra.mxu0 0
    %3340 = vmatprep.subr.bf16.mxu0 0
    %3341 = vmatpush1.bf16.msra.mxu0 0
    %3342 = vmatprep.subr.bf16.mxu0 0
    %3343 = vmatpush1.bf16.msra.mxu0 0
    %3344 = vmatprep.mubr.bf16.mxu0 0
    %3345 = vmatmul.mubr.bf16.gmra.mrb[0].mxu0 %v3307
    %v3346 = vpop.f32.mrb[0].mxu0
    %v3347 = vadd.f32 0.0, %v3346
    %v3348 = vpop.f32.mrb[0].mxu0
    %v3349 = vpop.f32.mrb[0].mxu0
    %v3350 = vadd.f32 0.0, %v3349
    %v3351 = vpop.f32.mrb[0].mxu0
    %3352 = vmatprep.mubr.bf16.mxu0 0
    %3353 = vmatmul.mubr.bf16.gmra.mrb[0].mxu0 %v3310
    %v3354 = vpop.f32.mrb[0].mxu0
    %v3355 = vadd.f32 0.0, %v3354
    %v3356 = vpop.f32.mrb[0].mxu0
    %v3357 = vpop.f32.mrb[0].mxu0
    %v3358 = vadd.f32 0.0, %v3357
    %v3359 = vpop.f32.mrb[0].mxu0
    %3360 = vdwg.mxu0
    %vm3361 = vcmask 64512
    %v3362 = vsel %vm3361, %v3347, -inf
    %v3363 = vsel %vm3361, %v3350, -inf
    %v3364 = vsel %vm3361, %v3355, -inf
    %v3365 = vsel %vm3361, %v3358, -inf
    %v3366 = vmax.f32 %v3362, %v3363
    %v3367 = vmax.f32 %v3364, %v3365
    %v3368 = vmax.f32 %v3366, %v3367
    %v3369 = vrot.slane %v3368, 4
    %v3370 = vmax.f32 %v3368, %v3369
    %v3371 = vrot.slane %v3370, 2
    %v3372 = vmax.f32 %v3370, %v3371
    %v3373 = vrot.slane %v3372, 1
    %v3374 = vmax.f32 %v3372, %v3373
    %v3375 = vsub.f32 %v3347, %v3374
    %v3376 = vsub.f32 %v3350, %v3374
    %v3377 = vsub.f32 %v3355, %v3374
    %v3378 = vsub.f32 %v3358, %v3374
    %v3379 = vmul.f32 %v3375, 1.442695
    %v3380 = vpow.pop %v3379
    %v3381 = vmul.f32 %v3376, 1.442695
    %v3382 = vpow.pop %v3381
    %v3383 = vmul.f32 %v3377, 1.442695
    %v3384 = vpow.pop %v3383
    %v3385 = vmul.f32 %v3378, 1.442695
    %v3386 = vpow.pop %v3385
    %3389 = vrot.lane.b32.xlu0 %v3384, 8
    %v3390 = vpop.permute.xlu0 %3389
    %3391 = vrot.lane.b32.xlu0 %v3386, 8
    %v3392 = vpop.permute.xlu0 %3391
    %v3395 = vsel %vm3361, %v3380, %v3390
    %v3396 = vsel %vm3361, %v3382, %v3392
    %v3397 = vpack.c.bf16 %v3396, %v3395
    %v3399 = vsel %vm525, %v246, 0
    %3401 = vmatprep.subr.bf16.mxu0 0
    %3402 = vmatpush1.bf16.msra.mxu0 %v3397
    %3403 = vmatprep.subr.bf16.mxu0 0
    %3404 = vmatpush1.bf16.msra.mxu0 0
    %3405 = vmatprep.subr.bf16.mxu0 0
    %3406 = vmatpush1.bf16.msra.mxu0 0
    %3407 = vmatprep.subr.bf16.mxu0 0
    %3408 = vmatpush1.bf16.msra.mxu0 0
    %3409 = vmatprep.subr.bf16.mxu0 0
    %3410 = vmatpush1.bf16.msra.mxu0 0
    %3411 = vmatprep.subr.bf16.mxu0 0
    %3412 = vmatpush1.bf16.msra.mxu0 0
    %3413 = vmatprep.subr.bf16.mxu0 0
    %3414 = vmatpush1.bf16.msra.mxu0 0
    %3415 = vmatprep.subr.bf16.mxu0 0
    %3416 = vmatpush1.bf16.msra.mxu0 0
    %3417 = vmatprep.subr.bf16.mxu0 0
    %3418 = vmatpush1.bf16.msra.mxu0 0
    %3419 = vmatprep.subr.bf16.mxu0 0
    %3420 = vmatpush1.bf16.msra.mxu0 0
    %3421 = vmatprep.subr.bf16.mxu0 0
    %3422 = vmatpush1.bf16.msra.mxu0 0
    %3423 = vmatprep.subr.bf16.mxu0 0
    %3424 = vmatpush1.bf16.msra.mxu0 0
    %3425 = vmatprep.subr.bf16.mxu0 0
    %3426 = vmatpush1.bf16.msra.mxu0 0
    %3427 = vmatprep.subr.bf16.mxu0 0
    %3428 = vmatpush1.bf16.msra.mxu0 0
    %3429 = vmatprep.subr.bf16.mxu0 0
    %3430 = vmatpush1.bf16.msra.mxu0 0
    %3431 = vmatprep.subr.bf16.mxu0 0
    %3432 = vmatpush1.bf16.msra.mxu0 0
    %3433 = vmatprep.mubr.bf16.mxu0 0
    %3434 = vmatmul.mubr.bf16.gmra.mrb[0].mxu0 %v3399
    %v3435 = vpop.f32.mrb[0].mxu0
    %v3436 = vadd.f32 0.0, %v3435
    %v3437 = vpop.f32.mrb[0].mxu0
    %v3438 = vpop.f32.mrb[0].mxu0
    %v3439 = vpop.f32.mrb[0].mxu0
    %3440 = vdwg.mxu0
    %v3441 = vpack.c.bf16 %v3436, %v3436
    %v3443 = vsel %vm3210, %v3441, 0
    %3445 = vmatprep.subr.bf16.mxu0 0
    %3446 = vmatpush1.bf16.msra.mxu0 %v3443
    %3447 = vmatprep.subr.bf16.mxu0 0
    %3448 = vmatpush1.bf16.msra.mxu0 0
    %3449 = vmatprep.subr.bf16.mxu0 0
    %3450 = vmatpush1.bf16.msra.mxu0 0
    %3451 = vmatprep.subr.bf16.mxu0 0
    %3452 = vmatpush1.bf16.msra.mxu0 0
    %3453 = vmatprep.subr.bf16.mxu0 0
    %3454 = vmatpush1.bf16.msra.mxu0 0
    %3455 = vmatprep.subr.bf16.mxu0 0
    %3456 = vmatpush1.bf16.msra.mxu0 0
    %3457 = vmatprep.subr.bf16.mxu0 0
    %3458 = vmatpush1.bf16.msra.mxu0 0
    %3459 = vmatprep.subr.bf16.mxu0 0
    %3460 = vmatpush1.bf16.msra.mxu0 0
    %3461 = vmatprep.subr.bf16.mxu0 0
    %3462 = vmatpush1.bf16.msra.mxu0 0
    %3463 = vmatprep.subr.bf16.mxu0 0
    %3464 = vmatpush1.bf16.msra.mxu0 0
    %3465 = vmatprep.subr.bf16.mxu0 0
    %3466 = vmatpush1.bf16.msra.mxu0 0
    %3467 = vmatprep.subr.bf16.mxu0 0
    %3468 = vmatpush1.bf16.msra.mxu0 0
    %3469 = vmatprep.subr.bf16.mxu0 0
    %3470 = vmatpush1.bf16.msra.mxu0 0
    %3471 = vmatprep.subr.bf16.mxu0 0
    %3472 = vmatpush1.bf16.msra.mxu0 0
    %3473 = vmatprep.subr.bf16.mxu0 0
    %3474 = vmatpush1.bf16.msra.mxu0 0
    %3475 = vmatprep.subr.bf16.mxu0 0
    %3476 = vmatpush1.bf16.msra.mxu0 0
    %3477 = vmatprep.mubr.bf16.mxu0 0
    %3478 = vmatmul.mubr.bf16.gmra.mrb[0].mxu0 %v3208
    %v3479 = vpop.f32.mrb[0].mxu0
    %v3480 = vadd.f32 0.0, %v3479
    %v3481 = vpop.f32.mrb[0].mxu0
    %v3482 = vpop.f32.mrb[0].mxu0
    %v3483 = vadd.f32 0.0, %v3482
    %v3484 = vpop.f32.mrb[0].mxu0
    %3485 = vdwg.mxu0
    %v3486 = vmax.f32 %v3480, 1e-30
    %v3487 = vmax.f32 %v3483, 1e-30
    %v3488 = vrcp.pop %v3486
    %v3489 = vmul.f32 %v3395, %v3488
    %v3490 = vrcp.pop %v3487
    %v3491 = vmul.f32 %v3396, %v3490
    %3494 = vrot.lane.b32.xlu0 %v3489, 120
    %v3495 = vpop.permute.xlu0 %3494
    %3496 = vrot.lane.b32.xlu0 %v3491, 120
    %v3497 = vpop.permute.xlu0 %3496
    %v3500 = vadd.f32 %v3489, %v3495
    %v3501 = vadd.f32 %v3491, %v3497
    %v3502 = vpack.c.bf16 %v3501, %v3500
    %v3504 = vsel %vm3361, %v3502, 0
    %v3507 = vsel %vm470, %v321, 0
    %3509 = vmatprep.subr.bf16.mxu0 0
    %3510 = vmatpush1.bf16.msra.mxu0 %v3507
    %3511 = vmatprep.subr.bf16.mxu0 0
    %3512 = vmatpush1.bf16.msra.mxu0 0
    %3513 = vmatprep.subr.bf16.mxu0 0
    %3514 = vmatpush1.bf16.msra.mxu0 0
    %3515 = vmatprep.subr.bf16.mxu0 0
    %3516 = vmatpush1.bf16.msra.mxu0 0
    %3517 = vmatprep.subr.bf16.mxu0 0
    %3518 = vmatpush1.bf16.msra.mxu0 0
    %3519 = vmatprep.subr.bf16.mxu0 0
    %3520 = vmatpush1.bf16.msra.mxu0 0
    %3521 = vmatprep.subr.bf16.mxu0 0
    %3522 = vmatpush1.bf16.msra.mxu0 0
    %3523 = vmatprep.subr.bf16.mxu0 0
    %3524 = vmatpush1.bf16.msra.mxu0 0
    %3525 = vmatprep.subr.bf16.mxu0 0
    %3526 = vmatpush1.bf16.msra.mxu0 0
    %3527 = vmatprep.subr.bf16.mxu0 0
    %3528 = vmatpush1.bf16.msra.mxu0 0
    %3529 = vmatprep.subr.bf16.mxu0 0
    %3530 = vmatpush1.bf16.msra.mxu0 0
    %3531 = vmatprep.subr.bf16.mxu0 0
    %3532 = vmatpush1.bf16.msra.mxu0 0
    %3533 = vmatprep.subr.bf16.mxu0 0
    %3534 = vmatpush1.bf16.msra.mxu0 0
    %3535 = vmatprep.subr.bf16.mxu0 0
    %3536 = vmatpush1.bf16.msra.mxu0 0
    %3537 = vmatprep.subr.bf16.mxu0 0
    %3538 = vmatpush1.bf16.msra.mxu0 0
    %3539 = vmatprep.subr.bf16.mxu0 0
    %3540 = vmatpush1.bf16.msra.mxu0 0
    %3541 = vmatprep.mubr.bf16.mxu0 0
    %3542 = vmatmul.mubr.bf16.gmra.mrb[0].mxu0 %v3504
    %v3543 = vpop.f32.mrb[0].mxu0
    %v3544 = vadd.f32 0.0, %v3543
    %v3545 = vpop.f32.mrb[0].mxu0
    %v3546 = vpop.f32.mrb[0].mxu0
    %v3547 = vadd.f32 0.0, %v3546
    %v3548 = vpop.f32.mrb[0].mxu0
    %3549 = vdwg.mxu0
    %v3550 = vmul.f32 %v3544, %v3112
    %v3551 = vmul.f32 %v3547, %v3115
    %v3552 = vpack.c.bf16 %v3551, %v3550
    %v3553 = vpack.c.bf16 %v2937, %v2936
    %v3554 = vlaneseq
    %v3555 = vshrl.u32 %v3554, 7
    %v3556 = vsub.s32 1, %v3555
    %v3557 = vrot.slane %v69, %v3556
    %v3558 = vlaneseq
    %v3559 = vshrl.u32 %v3558, 7
    %v3560 = vsub.s32 1, %v3559
    %v3561 = vrot.slane %v70, %v3560
    %v3562 = vlaneseq
    %v3563 = vshrl.u32 %v3562, 7
    %v3564 = vsub.s32 1, %v3563
    %v3565 = vrot.slane %v71, %v3564
    %v3566 = vmul.f32 %v2942, %v3557
    %v3567 = vmul.f32 %v2942, %v3561
    %v3568 = vmul.f32 %v2942, %v3565
    %v3569 = vmul.f32 %v2947, %v3557
    %v3570 = vmul.f32 %v2947, %v3561
    %v3571 = vmul.f32 %v2947, %v3565
    %v3588 = vunpack.c.l.b16 %v88
    %v3589 = vunpack.c.h.b16 %v88
    %v3590 = vunpack.c.l.b16 %v89
    %v3591 = vunpack.c.l.b16 %v90
    %v3592 = vunpack.c.h.b16 %v90
    %v3593 = vunpack.c.l.b16 %v91
    %v3594 = vunpack.c.l.b16 %v92
    %v3595 = vunpack.c.h.b16 %v92
    %v3596 = vunpack.c.l.b16 %v93
    %v3597 = vunpack.c.l.b16 %v94
    %v3598 = vunpack.c.h.b16 %v94
    %v3599 = vunpack.c.l.b16 %v95
    %v3600 = vunpack.c.l.b16 %v96
    %v3601 = vunpack.c.h.b16 %v96
    %v3602 = vunpack.c.l.b16 %v97
    %v3603 = vunpack.c.l.b16 %v98
    %v3604 = vunpack.c.h.b16 %v98
    %v3605 = vunpack.c.l.b16 %v99
    %v3606 = vunpack.c.l.b16 %v100
    %v3607 = vunpack.c.h.b16 %v100
    %v3608 = vunpack.c.l.b16 %v101
    %v3609 = vunpack.c.l.b16 %v102
    %v3610 = vunpack.c.h.b16 %v102
    %v3611 = vunpack.c.l.b16 %v103
    %v3612 = vpack.c.b16 %v3591, %v3588
    %v3613 = vpack.c.b16 %v3592, %v3589
    %v3614 = vpack.c.b16 %v3593, %v3590
    %v3615 = vpack.c.b16 %v3597, %v3594
    %v3616 = vpack.c.b16 %v3598, %v3595
    %v3617 = vpack.c.b16 %v3599, %v3596
    %v3618 = vpack.c.b16 %v3603, %v3600
    %v3619 = vpack.c.b16 %v3604, %v3601
    %v3620 = vpack.c.b16 %v3605, %v3602
    %v3621 = vpack.c.b16 %v3609, %v3606
    %v3622 = vpack.c.b16 %v3610, %v3607
    %v3623 = vpack.c.b16 %v3611, %v3608
    %v3637 = vsel %vm671, %v3553, 0
    %3639 = vmatprep.subr.bf16.mxu0 %v3613
    %3640 = vmatpush1.bf16.msra.mxu0 %v3612
    %3641 = vmatprep.subr.bf16.mxu0 %v3616
    %3642 = vmatpush1.bf16.msra.mxu0 %v3615
    %3643 = vmatprep.subr.bf16.mxu0 %v3619
    %3644 = vmatpush1.bf16.msra.mxu0 %v3618
    %3645 = vmatprep.subr.bf16.mxu0 %v3622
    %3646 = vmatpush1.bf16.msra.mxu0 %v3621
    %3647 = vmatprep.subr.bf16.mxu0 0
    %3648 = vmatpush1.bf16.msra.mxu0 0
    %3649 = vmatprep.subr.bf16.mxu0 0
    %3650 = vmatpush1.bf16.msra.mxu0 0
    %3651 = vmatprep.subr.bf16.mxu0 0
    %3652 = vmatpush1.bf16.msra.mxu0 0
    %3653 = vmatprep.subr.bf16.mxu0 0
    %3654 = vmatpush1.bf16.msra.mxu0 0
    %3655 = vmatprep.subr.bf16.mxu0 0
    %3656 = vmatpush1.bf16.msra.mxu0 0
    %3657 = vmatprep.subr.bf16.mxu0 0
    %3658 = vmatpush1.bf16.msra.mxu0 0
    %3659 = vmatprep.subr.bf16.mxu0 0
    %3660 = vmatpush1.bf16.msra.mxu0 0
    %3661 = vmatprep.subr.bf16.mxu0 0
    %3662 = vmatpush1.bf16.msra.mxu0 0
    %3663 = vmatprep.subr.bf16.mxu0 0
    %3664 = vmatpush1.bf16.msra.mxu0 0
    %3665 = vmatprep.subr.bf16.mxu0 0
    %3666 = vmatpush1.bf16.msra.mxu0 0
    %3667 = vmatprep.subr.bf16.mxu0 0
    %3668 = vmatpush1.bf16.msra.mxu0 0
    %3669 = vmatprep.subr.bf16.mxu0 0
    %3670 = vmatpush1.bf16.msra.mxu0 0
    %3671 = vmatprep.mubr.bf16.mxu0 0
    %3672 = vmatmul.mubr.bf16.gmra.mrb[0].mxu0 %v3637
    %v3673 = vpop.f32.mrb[0].mxu0
    %v3674 = vadd.f32 %v3566, %v3673
    %v3675 = vpop.f32.mrb[0].mxu0
    %v3676 = vadd.f32 %v3567, %v3675
    %v3677 = vpop.f32.mrb[0].mxu0
    %v3678 = vadd.f32 %v3569, %v3677
    %v3679 = vpop.f32.mrb[0].mxu0
    %v3680 = vadd.f32 %v3570, %v3679
    %3681 = vdwg.mxu0
    %3682 = vmatprep.subr.bf16.mxu0 0
    %3683 = vmatpush1.bf16.msra.mxu0 %v3614
    %3684 = vmatprep.subr.bf16.mxu0 0
    %3685 = vmatpush1.bf16.msra.mxu0 %v3617
    %3686 = vmatprep.subr.bf16.mxu0 0
    %3687 = vmatpush1.bf16.msra.mxu0 %v3620
    %3688 = vmatprep.subr.bf16.mxu0 0
    %3689 = vmatpush1.bf16.msra.mxu0 %v3623
    %3690 = vmatprep.subr.bf16.mxu0 0
    %3691 = vmatpush1.bf16.msra.mxu0 0
    %3692 = vmatprep.subr.bf16.mxu0 0
    %3693 = vmatpush1.bf16.msra.mxu0 0
    %3694 = vmatprep.subr.bf16.mxu0 0
    %3695 = vmatpush1.bf16.msra.mxu0 0
    %3696 = vmatprep.subr.bf16.mxu0 0
    %3697 = vmatpush1.bf16.msra.mxu0 0
    %3698 = vmatprep.subr.bf16.mxu0 0
    %3699 = vmatpush1.bf16.msra.mxu0 0
    %3700 = vmatprep.subr.bf16.mxu0 0
    %3701 = vmatpush1.bf16.msra.mxu0 0
    %3702 = vmatprep.subr.bf16.mxu0 0
    %3703 = vmatpush1.bf16.msra.mxu0 0
    %3704 = vmatprep.subr.bf16.mxu0 0
    %3705 = vmatpush1.bf16.msra.mxu0 0
    %3706 = vmatprep.subr.bf16.mxu0 0
    %3707 = vmatpush1.bf16.msra.mxu0 0
    %3708 = vmatprep.subr.bf16.mxu0 0
    %3709 = vmatpush1.bf16.msra.mxu0 0
    %3710 = vmatprep.subr.bf16.mxu0 0
    %3711 = vmatpush1.bf16.msra.mxu0 0
    %3712 = vmatprep.subr.bf16.mxu0 0
    %3713 = vmatpush1.bf16.msra.mxu0 0
    %3714 = vmatprep.mubr.bf16.mxu0 0
    %3715 = vmatmul.mubr.bf16.gmra.mrb[0].mxu0 %v3637
    %v3716 = vpop.f32.mrb[0].mxu0
    %v3717 = vadd.f32 %v3568, %v3716
    %v3718 = vpop.f32.mrb[0].mxu0
    %v3719 = vpop.f32.mrb[0].mxu0
    %v3720 = vadd.f32 %v3571, %v3719
    %v3721 = vpop.f32.mrb[0].mxu0
    %3722 = vdwg.mxu0
    %v3723 = vpack.c.bf16 %v3680, %v3676
    %3724 = vmatprep.subr.bf16.mxu0 0
    %3725 = vmatpush1.bf16.msra.mxu0 %v3723
    %3726 = vmatprep.subr.bf16.mxu0 0
    %3727 = vmatpush1.bf16.msra.mxu0 0
    %3728 = vmatprep.subr.bf16.mxu0 0
    %3729 = vmatpush1.bf16.msra.mxu0 0
    %3730 = vmatprep.subr.bf16.mxu0 0
    %3731 = vmatpush1.bf16.msra.mxu0 0
    %3732 = vmatprep.subr.bf16.mxu0 0
    %3733 = vmatpush1.bf16.msra.mxu0 0
    %3734 = vmatprep.subr.bf16.mxu0 0
    %3735 = vmatpush1.bf16.msra.mxu0 0
    %3736 = vmatprep.subr.bf16.mxu0 0
    %3737 = vmatpush1.bf16.msra.mxu0 0
    %3738 = vmatprep.subr.bf16.mxu0 0
    %3739 = vmatpush1.bf16.msra.mxu0 0
    %3740 = vmatprep.subr.bf16.mxu0 0
    %3741 = vmatpush1.bf16.msra.mxu0 0
    %3742 = vmatprep.subr.bf16.mxu0 0
    %3743 = vmatpush1.bf16.msra.mxu0 0
    %3744 = vmatprep.subr.bf16.mxu0 0
    %3745 = vmatpush1.bf16.msra.mxu0 0
    %3746 = vmatprep.subr.bf16.mxu0 0
    %3747 = vmatpush1.bf16.msra.mxu0 0
    %3748 = vmatprep.subr.bf16.mxu0 0
    %3749 = vmatpush1.bf16.msra.mxu0 0
    %3750 = vmatprep.subr.bf16.mxu0 0
    %3751 = vmatpush1.bf16.msra.mxu0 0
    %3752 = vmatprep.subr.bf16.mxu0 0
    %3753 = vmatpush1.bf16.msra.mxu0 0
    %3754 = vmatprep.subr.bf16.mxu0 0
    %3755 = vmatpush1.bf16.msra.mxu0 0
    %3756 = vmatprep.mubr.bf16.mxu0 0
    %3757 = vmatmul.mubr.bf16.gmra.mrb[0].mxu0 %v3120
    %v3758 = vpop.f32.mrb[0].mxu0
    %v3759 = vadd.f32 0.0, %v3758
    %v3760 = vpop.f32.mrb[0].mxu0
    %v3761 = vpop.f32.mrb[0].mxu0
    %v3762 = vpop.f32.mrb[0].mxu0
    %3763 = vdwg.mxu0
    %3764 = vmatprep.subr.bf16.mxu0 0
    %3765 = vmatpush1.bf16.msra.mxu0 %v3723
    %3766 = vmatprep.subr.bf16.mxu0 0
    %3767 = vmatpush1.bf16.msra.mxu0 0
    %3768 = vmatprep.subr.bf16.mxu0 0
    %3769 = vmatpush1.bf16.msra.mxu0 0
    %3770 = vmatprep.subr.bf16.mxu0 0
    %3771 = vmatpush1.bf16.msra.mxu0 0
    %3772 = vmatprep.subr.bf16.mxu0 0
    %3773 = vmatpush1.bf16.msra.mxu0 0
    %3774 = vmatprep.subr.bf16.mxu0 0
    %3775 = vmatpush1.bf16.msra.mxu0 0
    %3776 = vmatprep.subr.bf16.mxu0 0
    %3777 = vmatpush1.bf16.msra.mxu0 0
    %3778 = vmatprep.subr.bf16.mxu0 0
    %3779 = vmatpush1.bf16.msra.mxu0 0
    %3780 = vmatprep.subr.bf16.mxu0 0
    %3781 = vmatpush1.bf16.msra.mxu0 0
    %3782 = vmatprep.subr.bf16.mxu0 0
    %3783 = vmatpush1.bf16.msra.mxu0 0
    %3784 = vmatprep.subr.bf16.mxu0 0
    %3785 = vmatpush1.bf16.msra.mxu0 0
    %3786 = vmatprep.subr.bf16.mxu0 0
    %3787 = vmatpush1.bf16.msra.mxu0 0
    %3788 = vmatprep.subr.bf16.mxu0 0
    %3789 = vmatpush1.bf16.msra.mxu0 0
    %3790 = vmatprep.subr.bf16.mxu0 0
    %3791 = vmatpush1.bf16.msra.mxu0 0
    %3792 = vmatprep.subr.bf16.mxu0 0
    %3793 = vmatpush1.bf16.msra.mxu0 0
    %3794 = vmatprep.subr.bf16.mxu0 0
    %3795 = vmatpush1.bf16.msra.mxu0 0
    %3796 = vmatprep.mubr.bf16.mxu0 0
    %3797 = vmatmul.mubr.bf16.gmra.mrb[0].mxu0 %v3163
    %v3798 = vpop.f32.mrb[0].mxu0
    %v3799 = vadd.f32 0.0, %v3798
    %v3800 = vpop.f32.mrb[0].mxu0
    %v3801 = vpop.f32.mrb[0].mxu0
    %v3802 = vpop.f32.mrb[0].mxu0
    %3803 = vdwg.mxu0
    %v3804 = vpack.c.bf16 %v3759, %v3759
    %v3806 = vsel %vm3210, %v3804, 0
    %3808 = vmatprep.subr.bf16.mxu0 0
    %3809 = vmatpush1.bf16.msra.mxu0 %v3806
    %3810 = vmatprep.subr.bf16.mxu0 0
    %3811 = vmatpush1.bf16.msra.mxu0 0
    %3812 = vmatprep.subr.bf16.mxu0 0
    %3813 = vmatpush1.bf16.msra.mxu0 0
    %3814 = vmatprep.subr.bf16.mxu0 0
    %3815 = vmatpush1.bf16.msra.mxu0 0
    %3816 = vmatprep.subr.bf16.mxu0 0
    %3817 = vmatpush1.bf16.msra.mxu0 0
    %3818 = vmatprep.subr.bf16.mxu0 0
    %3819 = vmatpush1.bf16.msra.mxu0 0
    %3820 = vmatprep.subr.bf16.mxu0 0
    %3821 = vmatpush1.bf16.msra.mxu0 0
    %3822 = vmatprep.subr.bf16.mxu0 0
    %3823 = vmatpush1.bf16.msra.mxu0 0
    %3824 = vmatprep.subr.bf16.mxu0 0
    %3825 = vmatpush1.bf16.msra.mxu0 0
    %3826 = vmatprep.subr.bf16.mxu0 0
    %3827 = vmatpush1.bf16.msra.mxu0 0
    %3828 = vmatprep.subr.bf16.mxu0 0
    %3829 = vmatpush1.bf16.msra.mxu0 0
    %3830 = vmatprep.subr.bf16.mxu0 0
    %3831 = vmatpush1.bf16.msra.mxu0 0
    %3832 = vmatprep.subr.bf16.mxu0 0
    %3833 = vmatpush1.bf16.msra.mxu0 0
    %3834 = vmatprep.subr.bf16.mxu0 0
    %3835 = vmatpush1.bf16.msra.mxu0 0
    %3836 = vmatprep.subr.bf16.mxu0 0
    %3837 = vmatpush1.bf16.msra.mxu0 0
    %3838 = vmatprep.subr.bf16.mxu0 0
    %3839 = vmatpush1.bf16.msra.mxu0 0
    %3840 = vmatprep.mubr.bf16.mxu0 0
    %3841 = vmatmul.mubr.bf16.gmra.mrb[0].mxu0 %v3208
    %v3842 = vpop.f32.mrb[0].mxu0
    %v3843 = vadd.f32 0.0, %v3842
    %v3844 = vpop.f32.mrb[0].mxu0
    %v3845 = vpop.f32.mrb[0].mxu0
    %v3846 = vadd.f32 0.0, %v3845
    %v3847 = vpop.f32.mrb[0].mxu0
    %3848 = vdwg.mxu0
    %v3849 = vpack.c.bf16 %v3799, %v3799
    %v3851 = vsel %vm3206, %v238, 0
    %v3854 = vsel %vm3210, %v3849, 0
    %3856 = vmatprep.subr.bf16.mxu0 0
    %3857 = vmatpush1.bf16.msra.mxu0 %v3854
    %3858 = vmatprep.subr.bf16.mxu0 0
    %3859 = vmatpush1.bf16.msra.mxu0 0
    %3860 = vmatprep.subr.bf16.mxu0 0
    %3861 = vmatpush1.bf16.msra.mxu0 0
    %3862 = vmatprep.subr.bf16.mxu0 0
    %3863 = vmatpush1.bf16.msra.mxu0 0
    %3864 = vmatprep.subr.bf16.mxu0 0
    %3865 = vmatpush1.bf16.msra.mxu0 0
    %3866 = vmatprep.subr.bf16.mxu0 0
    %3867 = vmatpush1.bf16.msra.mxu0 0
    %3868 = vmatprep.subr.bf16.mxu0 0
    %3869 = vmatpush1.bf16.msra.mxu0 0
    %3870 = vmatprep.subr.bf16.mxu0 0
    %3871 = vmatpush1.bf16.msra.mxu0 0
    %3872 = vmatprep.subr.bf16.mxu0 0
    %3873 = vmatpush1.bf16.msra.mxu0 0
    %3874 = vmatprep.subr.bf16.mxu0 0
    %3875 = vmatpush1.bf16.msra.mxu0 0
    %3876 = vmatprep.subr.bf16.mxu0 0
    %3877 = vmatpush1.bf16.msra.mxu0 0
    %3878 = vmatprep.subr.bf16.mxu0 0
    %3879 = vmatpush1.bf16.msra.mxu0 0
    %3880 = vmatprep.subr.bf16.mxu0 0
    %3881 = vmatpush1.bf16.msra.mxu0 0
    %3882 = vmatprep.subr.bf16.mxu0 0
    %3883 = vmatpush1.bf16.msra.mxu0 0
    %3884 = vmatprep.subr.bf16.mxu0 0
    %3885 = vmatpush1.bf16.msra.mxu0 0
    %3886 = vmatprep.subr.bf16.mxu0 0
    %3887 = vmatpush1.bf16.msra.mxu0 0
    %3888 = vmatprep.mubr.bf16.mxu0 0
    %3889 = vmatmul.mubr.bf16.gmra.mrb[0].mxu0 %v3851
    %v3890 = vpop.f32.mrb[0].mxu0
    %v3891 = vadd.f32 0.0, %v3890
    %v3892 = vpop.f32.mrb[0].mxu0
    %v3893 = vpop.f32.mrb[0].mxu0
    %v3894 = vadd.f32 0.0, %v3893
    %v3895 = vpop.f32.mrb[0].mxu0
    %3896 = vdwg.mxu0
    %v3897 = vmul.f32 %v3674, %v3843
    %v3898 = vmul.f32 %v3678, %v3846
    %v3899 = vmul.f32 %v3674, %v3891
    %v3900 = vmul.f32 %v3678, %v3894
    %v3901 = vpack.c.bf16 %v3898, %v3897
    %v3902 = vpack.c.bf16 %v3900, %v3899
    %v3904 = vsel %vm671, %v3901, 0
    %v3907 = vsel %vm671, %v3902, 0
    %3909 = vmatprep.subr.bf16.mxu0 0
    %3910 = vmatpush1.bf16.msra.mxu0 %v310
    %3911 = vmatprep.subr.bf16.mxu0 0
    %3912 = vmatpush1.bf16.msra.mxu0 %v311
    %3913 = vmatprep.subr.bf16.mxu0 0
    %3914 = vmatpush1.bf16.msra.mxu0 %v312
    %3915 = vmatprep.subr.bf16.mxu0 0
    %3916 = vmatpush1.bf16.msra.mxu0 %v313
    %3917 = vmatprep.subr.bf16.mxu0 0
    %3918 = vmatpush1.bf16.msra.mxu0 0
    %3919 = vmatprep.subr.bf16.mxu0 0
    %3920 = vmatpush1.bf16.msra.mxu0 0
    %3921 = vmatprep.subr.bf16.mxu0 0
    %3922 = vmatpush1.bf16.msra.mxu0 0
    %3923 = vmatprep.subr.bf16.mxu0 0
    %3924 = vmatpush1.bf16.msra.mxu0 0
    %3925 = vmatprep.subr.bf16.mxu0 0
    %3926 = vmatpush1.bf16.msra.mxu0 0
    %3927 = vmatprep.subr.bf16.mxu0 0
    %3928 = vmatpush1.bf16.msra.mxu0 0
    %3929 = vmatprep.subr.bf16.mxu0 0
    %3930 = vmatpush1.bf16.msra.mxu0 0
    %3931 = vmatprep.subr.bf16.mxu0 0
    %3932 = vmatpush1.bf16.msra.mxu0 0
    %3933 = vmatprep.subr.bf16.mxu0 0
    %3934 = vmatpush1.bf16.msra.mxu0 0
    %3935 = vmatprep.subr.bf16.mxu0 0
    %3936 = vmatpush1.bf16.msra.mxu0 0
    %3937 = vmatprep.subr.bf16.mxu0 0
    %3938 = vmatpush1.bf16.msra.mxu0 0
    %3939 = vmatprep.subr.bf16.mxu0 0
    %3940 = vmatpush1.bf16.msra.mxu0 0
    %3941 = vmatprep.mubr.bf16.mxu0 0
    %3942 = vmatmul.mubr.bf16.gmra.mrb[0].mxu0 %v3904
    %v3943 = vpop.f32.mrb[0].mxu0
    %v3944 = vadd.f32 0.0, %v3943
    %v3945 = vpop.f32.mrb[0].mxu0
    %v3946 = vpop.f32.mrb[0].mxu0
    %v3947 = vadd.f32 0.0, %v3946
    %v3948 = vpop.f32.mrb[0].mxu0
    %3949 = vmatprep.mubr.bf16.mxu0 0
    %3950 = vmatmul.mubr.bf16.gmra.mrb[0].mxu0 %v3907
    %v3951 = vpop.f32.mrb[0].mxu0
    %v3952 = vadd.f32 0.0, %v3951
    %v3953 = vpop.f32.mrb[0].mxu0
    %v3954 = vpop.f32.mrb[0].mxu0
    %v3955 = vadd.f32 0.0, %v3954
    %v3956 = vpop.f32.mrb[0].mxu0
    %3957 = vdwg.mxu0
    %v3958 = vsel %vm3361, %v3944, -inf
    %v3959 = vsel %vm3361, %v3947, -inf
    %v3960 = vsel %vm3361, %v3952, -inf
    %v3961 = vsel %vm3361, %v3955, -inf
    %v3962 = vmax.f32 %v3958, %v3959
    %v3963 = vmax.f32 %v3960, %v3961
    %v3964 = vmax.f32 %v3962, %v3963
    %v3965 = vrot.slane %v3964, 4
    %v3966 = vmax.f32 %v3964, %v3965
    %v3967 = vrot.slane %v3966, 2
    %v3968 = vmax.f32 %v3966, %v3967
    %v3969 = vrot.slane %v3968, 1
    %v3970 = vmax.f32 %v3968, %v3969
    %v3971 = vsub.f32 %v3944, %v3970
    %v3972 = vsub.f32 %v3947, %v3970
    %v3973 = vsub.f32 %v3952, %v3970
    %v3974 = vsub.f32 %v3955, %v3970
    %v3975 = vmul.f32 %v3971, 1.442695
    %v3976 = vpow.pop %v3975
    %v3977 = vmul.f32 %v3972, 1.442695
    %v3978 = vpow.pop %v3977
    %v3979 = vmul.f32 %v3973, 1.442695
    %v3980 = vpow.pop %v3979
    %v3981 = vmul.f32 %v3974, 1.442695
    %v3982 = vpow.pop %v3981
    %3985 = vrot.lane.b32.xlu0 %v3980, 8
    %v3986 = vpop.permute.xlu0 %3985
    %3987 = vrot.lane.b32.xlu0 %v3982, 8
    %v3988 = vpop.permute.xlu0 %3987
    %v3991 = vsel %vm3361, %v3976, %v3986
    %v3992 = vsel %vm3361, %v3978, %v3988
    %v3993 = vpack.c.bf16 %v3992, %v3991
    %v3995 = vsel %vm525, %v254, 0
    %3997 = vmatprep.subr.bf16.mxu0 0
    %3998 = vmatpush1.bf16.msra.mxu0 %v3993
    %3999 = vmatprep.subr.bf16.mxu0 0
    %4000 = vmatpush1.bf16.msra.mxu0 0
    %4001 = vmatprep.subr.bf16.mxu0 0
    %4002 = vmatpush1.bf16.msra.mxu0 0
    %4003 = vmatprep.subr.bf16.mxu0 0
    %4004 = vmatpush1.bf16.msra.mxu0 0
    %4005 = vmatprep.subr.bf16.mxu0 0
    %4006 = vmatpush1.bf16.msra.mxu0 0
    %4007 = vmatprep.subr.bf16.mxu0 0
    %4008 = vmatpush1.bf16.msra.mxu0 0
    %4009 = vmatprep.subr.bf16.mxu0 0
    %4010 = vmatpush1.bf16.msra.mxu0 0
    %4011 = vmatprep.subr.bf16.mxu0 0
    %4012 = vmatpush1.bf16.msra.mxu0 0
    %4013 = vmatprep.subr.bf16.mxu0 0
    %4014 = vmatpush1.bf16.msra.mxu0 0
    %4015 = vmatprep.subr.bf16.mxu0 0
    %4016 = vmatpush1.bf16.msra.mxu0 0
    %4017 = vmatprep.subr.bf16.mxu0 0
    %4018 = vmatpush1.bf16.msra.mxu0 0
    %4019 = vmatprep.subr.bf16.mxu0 0
    %4020 = vmatpush1.bf16.msra.mxu0 0
    %4021 = vmatprep.subr.bf16.mxu0 0
    %4022 = vmatpush1.bf16.msra.mxu0 0
    %4023 = vmatprep.subr.bf16.mxu0 0
    %4024 = vmatpush1.bf16.msra.mxu0 0
    %4025 = vmatprep.subr.bf16.mxu0 0
    %4026 = vmatpush1.bf16.msra.mxu0 0
    %4027 = vmatprep.subr.bf16.mxu0 0
    %4028 = vmatpush1.bf16.msra.mxu0 0
    %4029 = vmatprep.mubr.bf16.mxu0 0
    %4030 = vmatmul.mubr.bf16.gmra.mrb[0].mxu0 %v3995
    %v4031 = vpop.f32.mrb[0].mxu0
    %v4032 = vadd.f32 0.0, %v4031
    %v4033 = vpop.f32.mrb[0].mxu0
    %v4034 = vpop.f32.mrb[0].mxu0
    %v4035 = vpop.f32.mrb[0].mxu0
    %4036 = vdwg.mxu0
    %v4037 = vpack.c.bf16 %v4032, %v4032
    %v4039 = vsel %vm3210, %v4037, 0
    %4041 = vmatprep.subr.bf16.mxu0 0
    %4042 = vmatpush1.bf16.msra.mxu0 %v4039
    %4043 = vmatprep.subr.bf16.mxu0 0
    %4044 = vmatpush1.bf16.msra.mxu0 0
    %4045 = vmatprep.subr.bf16.mxu0 0
    %4046 = vmatpush1.bf16.msra.mxu0 0
    %4047 = vmatprep.subr.bf16.mxu0 0
    %4048 = vmatpush1.bf16.msra.mxu0 0
    %4049 = vmatprep.subr.bf16.mxu0 0
    %4050 = vmatpush1.bf16.msra.mxu0 0
    %4051 = vmatprep.subr.bf16.mxu0 0
    %4052 = vmatpush1.bf16.msra.mxu0 0
    %4053 = vmatprep.subr.bf16.mxu0 0
    %4054 = vmatpush1.bf16.msra.mxu0 0
    %4055 = vmatprep.subr.bf16.mxu0 0
    %4056 = vmatpush1.bf16.msra.mxu0 0
    %4057 = vmatprep.subr.bf16.mxu0 0
    %4058 = vmatpush1.bf16.msra.mxu0 0
    %4059 = vmatprep.subr.bf16.mxu0 0
    %4060 = vmatpush1.bf16.msra.mxu0 0
    %4061 = vmatprep.subr.bf16.mxu0 0
    %4062 = vmatpush1.bf16.msra.mxu0 0
    %4063 = vmatprep.subr.bf16.mxu0 0
    %4064 = vmatpush1.bf16.msra.mxu0 0
    %4065 = vmatprep.subr.bf16.mxu0 0
    %4066 = vmatpush1.bf16.msra.mxu0 0
    %4067 = vmatprep.subr.bf16.mxu0 0
    %4068 = vmatpush1.bf16.msra.mxu0 0
    %4069 = vmatprep.subr.bf16.mxu0 0
    %4070 = vmatpush1.bf16.msra.mxu0 0
    %4071 = vmatprep.subr.bf16.mxu0 0
    %4072 = vmatpush1.bf16.msra.mxu0 0
    %4073 = vmatprep.mubr.bf16.mxu0 0
    %4074 = vmatmul.mubr.bf16.gmra.mrb[0].mxu0 %v3851
    %v4075 = vpop.f32.mrb[0].mxu0
    %v4076 = vadd.f32 0.0, %v4075
    %v4077 = vpop.f32.mrb[0].mxu0
    %v4078 = vpop.f32.mrb[0].mxu0
    %v4079 = vadd.f32 0.0, %v4078
    %v4080 = vpop.f32.mrb[0].mxu0
    %4081 = vdwg.mxu0
    %v4082 = vmax.f32 %v4076, 1e-30
    %v4083 = vmax.f32 %v4079, 1e-30
    %v4084 = vrcp.pop %v4082
    %v4085 = vmul.f32 %v3991, %v4084
    %v4086 = vrcp.pop %v4083
    %v4087 = vmul.f32 %v3992, %v4086
    %4090 = vrot.lane.b32.xlu0 %v4085, 120
    %v4091 = vpop.permute.xlu0 %4090
    %4092 = vrot.lane.b32.xlu0 %v4087, 120
    %v4093 = vpop.permute.xlu0 %4092
    %v4096 = vadd.f32 %v4085, %v4091
    %v4097 = vadd.f32 %v4087, %v4093
    %v4098 = vpack.c.bf16 %v4097, %v4096
    %v4100 = vsel %vm3361, %v4098, 0
    %4102 = vmatprep.subr.bf16.mxu0 0
    %4103 = vmatpush1.bf16.msra.mxu0 %v3507
    %4104 = vmatprep.subr.bf16.mxu0 0
    %4105 = vmatpush1.bf16.msra.mxu0 0
    %4106 = vmatprep.subr.bf16.mxu0 0
    %4107 = vmatpush1.bf16.msra.mxu0 0
    %4108 = vmatprep.subr.bf16.mxu0 0
    %4109 = vmatpush1.bf16.msra.mxu0 0
    %4110 = vmatprep.subr.bf16.mxu0 0
    %4111 = vmatpush1.bf16.msra.mxu0 0
    %4112 = vmatprep.subr.bf16.mxu0 0
    %4113 = vmatpush1.bf16.msra.mxu0 0
    %4114 = vmatprep.subr.bf16.mxu0 0
    %4115 = vmatpush1.bf16.msra.mxu0 0
    %4116 = vmatprep.subr.bf16.mxu0 0
    %4117 = vmatpush1.bf16.msra.mxu0 0
    %4118 = vmatprep.subr.bf16.mxu0 0
    %4119 = vmatpush1.bf16.msra.mxu0 0
    %4120 = vmatprep.subr.bf16.mxu0 0
    %4121 = vmatpush1.bf16.msra.mxu0 0
    %4122 = vmatprep.subr.bf16.mxu0 0
    %4123 = vmatpush1.bf16.msra.mxu0 0
    %4124 = vmatprep.subr.bf16.mxu0 0
    %4125 = vmatpush1.bf16.msra.mxu0 0
    %4126 = vmatprep.subr.bf16.mxu0 0
    %4127 = vmatpush1.bf16.msra.mxu0 0
    %4128 = vmatprep.subr.bf16.mxu0 0
    %4129 = vmatpush1.bf16.msra.mxu0 0
    %4130 = vmatprep.subr.bf16.mxu0 0
    %4131 = vmatpush1.bf16.msra.mxu0 0
    %4132 = vmatprep.subr.bf16.mxu0 0
    %4133 = vmatpush1.bf16.msra.mxu0 0
    %4134 = vmatprep.mubr.bf16.mxu0 0
    %4135 = vmatmul.mubr.bf16.gmra.mrb[0].mxu0 %v4100
    %v4136 = vpop.f32.mrb[0].mxu0
    %v4137 = vadd.f32 0.0, %v4136
    %v4138 = vpop.f32.mrb[0].mxu0
    %v4139 = vpop.f32.mrb[0].mxu0
    %v4140 = vadd.f32 0.0, %v4139
    %v4141 = vpop.f32.mrb[0].mxu0
    %4142 = vdwg.mxu0
    %v4143 = vmul.f32 %v4137, %v3717
    %v4144 = vmul.f32 %v4140, %v3720
    %v4145 = vpack.c.bf16 %v4144, %v4143
    %4146 = vmatprep.subr.bf16.mxu0 0
    %4147 = vmatpush1.bf16.msra.mxu0 %v4145
    %4148 = vmatprep.subr.bf16.mxu0 0
    %4149 = vmatpush1.bf16.msra.mxu0 0
    %4150 = vmatprep.subr.bf16.mxu0 0
    %4151 = vmatpush1.bf16.msra.mxu0 0
    %4152 = vmatprep.subr.bf16.mxu0 0
    %4153 = vmatpush1.bf16.msra.mxu0 0
    %4154 = vmatprep.subr.bf16.mxu0 0
    %4155 = vmatpush1.bf16.msra.mxu0 0
    %4156 = vmatprep.subr.bf16.mxu0 0
    %4157 = vmatpush1.bf16.msra.mxu0 0
    %4158 = vmatprep.subr.bf16.mxu0 0
    %4159 = vmatpush1.bf16.msra.mxu0 0
    %4160 = vmatprep.subr.bf16.mxu0 0
    %4161 = vmatpush1.bf16.msra.mxu0 0
    %4162 = vmatprep.subr.bf16.mxu0 0
    %4163 = vmatpush1.bf16.msra.mxu0 0
    %4164 = vmatprep.subr.bf16.mxu0 0
    %4165 = vmatpush1.bf16.msra.mxu0 0
    %4166 = vmatprep.subr.bf16.mxu0 0
    %4167 = vmatpush1.bf16.msra.mxu0 0
    %4168 = vmatprep.subr.bf16.mxu0 0
    %4169 = vmatpush1.bf16.msra.mxu0 0
    %4170 = vmatprep.subr.bf16.mxu0 0
    %4171 = vmatpush1.bf16.msra.mxu0 0
    %4172 = vmatprep.subr.bf16.mxu0 0
    %4173 = vmatpush1.bf16.msra.mxu0 0
    %4174 = vmatprep.subr.bf16.mxu0 0
    %4175 = vmatpush1.bf16.msra.mxu0 0
    %4176 = vmatprep.subr.bf16.mxu0 0
    %4177 = vmatpush1.bf16.msra.mxu0 0
    %4178 = vmatprep.mubr.bf16.mxu0 0
    %4179 = vmatmul.mubr.bf16.gmra.mrb[0].mxu0 %v3995
    %v4180 = vpop.f32.mrb[0].mxu0
    %v4181 = vadd.f32 0.0, %v4180
    %v4182 = vpop.f32.mrb[0].mxu0
    %v4183 = vpop.f32.mrb[0].mxu0
    %v4184 = vpop.f32.mrb[0].mxu0
    %4185 = vdwg.mxu0
    %4186 = vmatprep.subr.bf16.mxu0 0
    %4187 = vmatpush1.bf16.msra.mxu0 %v3552
    %4188 = vmatprep.subr.bf16.mxu0 0
    %4189 = vmatpush1.bf16.msra.mxu0 0
    %4190 = vmatprep.subr.bf16.mxu0 0
    %4191 = vmatpush1.bf16.msra.mxu0 0
    %4192 = vmatprep.subr.bf16.mxu0 0
    %4193 = vmatpush1.bf16.msra.mxu0 0
    %4194 = vmatprep.subr.bf16.mxu0 0
    %4195 = vmatpush1.bf16.msra.mxu0 0
    %4196 = vmatprep.subr.bf16.mxu0 0
    %4197 = vmatpush1.bf16.msra.mxu0 0
    %4198 = vmatprep.subr.bf16.mxu0 0
    %4199 = vmatpush1.bf16.msra.mxu0 0
    %4200 = vmatprep.subr.bf16.mxu0 0
    %4201 = vmatpush1.bf16.msra.mxu0 0
    %4202 = vmatprep.subr.bf16.mxu0 0
    %4203 = vmatpush1.bf16.msra.mxu0 0
    %4204 = vmatprep.subr.bf16.mxu0 0
    %4205 = vmatpush1.bf16.msra.mxu0 0
    %4206 = vmatprep.subr.bf16.mxu0 0
    %4207 = vmatpush1.bf16.msra.mxu0 0
    %4208 = vmatprep.subr.bf16.mxu0 0
    %4209 = vmatpush1.bf16.msra.mxu0 0
    %4210 = vmatprep.subr.bf16.mxu0 0
    %4211 = vmatpush1.bf16.msra.mxu0 0
    %4212 = vmatprep.subr.bf16.mxu0 0
    %4213 = vmatpush1.bf16.msra.mxu0 0
    %4214 = vmatprep.subr.bf16.mxu0 0
    %4215 = vmatpush1.bf16.msra.mxu0 0
    %4216 = vmatprep.subr.bf16.mxu0 0
    %4217 = vmatpush1.bf16.msra.mxu0 0
    %4218 = vmatprep.mubr.bf16.mxu0 0
    %4219 = vmatmul.mubr.bf16.gmra.mrb[0].mxu0 %v3399
    %v4220 = vpop.f32.mrb[0].mxu0
    %v4221 = vadd.f32 %v4181, %v4220
    %v4222 = vpop.f32.mrb[0].mxu0
    %v4223 = vpop.f32.mrb[0].mxu0
    %v4224 = vpop.f32.mrb[0].mxu0
    %4225 = vdwg.mxu0
    %v4226 = vpack.c.bf16 %v4221, %v4221
    %4227 = vset.pattern.permute.xlu0 1
    %4228 = vperm.xlu0 %4227, %v67
    %v4229 = vpop.permute.xlu0 %4228
    %v4231 = vlaneseq
    %v4232 = vshrl.u32 %v4231, 7
    %v4233 = vsub.s32 2, %v4232
    %v4234 = vrot.slane %v69, %v4233
    %v4235 = vmul.f32 %v4229, %v4234
    %v4244 = vunpack.c.l.b16 %v104
    %v4245 = vunpack.c.l.b16 %v105
    %v4246 = vunpack.c.l.b16 %v106
    %v4247 = vunpack.c.l.b16 %v107
    %v4248 = vunpack.c.l.b16 %v108
    %v4249 = vunpack.c.l.b16 %v109
    %v4250 = vunpack.c.l.b16 %v110
    %v4251 = vunpack.c.l.b16 %v111
    %v4252 = vpack.c.b16 %v4245, %v4244
    %v4253 = vpack.c.b16 %v4247, %v4246
    %v4254 = vpack.c.b16 %v4249, %v4248
    %v4255 = vpack.c.b16 %v4251, %v4250
    %v4261 = vsel %vm671, %v4226, 0
    %4263 = vmatprep.subr.bf16.mxu0 0
    %4264 = vmatpush1.bf16.msra.mxu0 %v4252
    %4265 = vmatprep.subr.bf16.mxu0 0
    %4266 = vmatpush1.bf16.msra.mxu0 %v4253
    %4267 = vmatprep.subr.bf16.mxu0 0
    %4268 = vmatpush1.bf16.msra.mxu0 %v4254
    %4269 = vmatprep.subr.bf16.mxu0 0
    %4270 = vmatpush1.bf16.msra.mxu0 %v4255
    %4271 = vmatprep.subr.bf16.mxu0 0
    %4272 = vmatpush1.bf16.msra.mxu0 0
    %4273 = vmatprep.subr.bf16.mxu0 0
    %4274 = vmatpush1.bf16.msra.mxu0 0
    %4275 = vmatprep.subr.bf16.mxu0 0
    %4276 = vmatpush1.bf16.msra.mxu0 0
    %4277 = vmatprep.subr.bf16.mxu0 0
    %4278 = vmatpush1.bf16.msra.mxu0 0
    %4279 = vmatprep.subr.bf16.mxu0 0
    %4280 = vmatpush1.bf16.msra.mxu0 0
    %4281 = vmatprep.subr.bf16.mxu0 0
    %4282 = vmatpush1.bf16.msra.mxu0 0
    %4283 = vmatprep.subr.bf16.mxu0 0
    %4284 = vmatpush1.bf16.msra.mxu0 0
    %4285 = vmatprep.subr.bf16.mxu0 0
    %4286 = vmatpush1.bf16.msra.mxu0 0
    %4287 = vmatprep.subr.bf16.mxu0 0
    %4288 = vmatpush1.bf16.msra.mxu0 0
    %4289 = vmatprep.subr.bf16.mxu0 0
    %4290 = vmatpush1.bf16.msra.mxu0 0
    %4291 = vmatprep.subr.bf16.mxu0 0
    %4292 = vmatpush1.bf16.msra.mxu0 0
    %4293 = vmatprep.subr.bf16.mxu0 0
    %4294 = vmatpush1.bf16.msra.mxu0 0
    %4295 = vmatprep.mubr.bf16.mxu0 0
    %4296 = vmatmul.mubr.bf16.gmra.mrb[0].mxu0 %v4261
    %v4297 = vpop.f32.mrb[0].mxu0
    %v4298 = vadd.f32 %v4235, %v4297
    %v4299 = vpop.f32.mrb[0].mxu0
    %v4300 = vpop.f32.mrb[0].mxu0
    %v4301 = vpop.f32.mrb[0].mxu0
    %4302 = vdwg.mxu0
    %v4303 = vlaneseq
    %v4304 = vshrl.u32 %v4303, 7
    %v4305 = vsub.s32 3, %v4304
    %v4306 = vrot.slane %v69, %v4305
    %v4307 = vadd.f32 %v4298, %v4306
    %v4308 = vmul.f32 %v4307, 0.5
    %v4309 = vmul.f32 %v4307, 0.70710677
    %v4310 = verf.f32.pop %v4309
    %v4311 = vadd.f32 %v4310, 1.0
    %v4312 = vmul.f32 %v4308, %v4311
    %v4313 = vpack.c.bf16 %v4312, %v4312
    %v4314 = vlaneseq
    %v4315 = vshrl.u32 %v4314, 7
    %v4316 = vsub.s32 4, %v4315
    %v4317 = vrot.slane %v69, %v4316
    %v4322 = vunpack.c.l.b16 %v112
    %v4323 = vunpack.c.l.b16 %v113
    %v4324 = vunpack.c.l.b16 %v114
    %v4325 = vunpack.c.l.b16 %v115
    %v4326 = vpack.c.b16 %v4323, %v4322
    %v4327 = vpack.c.b16 %v4325, %v4324
    %v4331 = vsel %vm587, %v4313, 0
    %4333 = vmatprep.subr.bf16.mxu0 0
    %4334 = vmatpush1.bf16.msra.mxu0 %v4326
    %4335 = vmatprep.subr.bf16.mxu0 0
    %4336 = vmatpush1.bf16.msra.mxu0 %v4327
    %4337 = vmatprep.subr.bf16.mxu0 0
    %4338 = vmatpush1.bf16.msra.mxu0 0
    %4339 = vmatprep.subr.bf16.mxu0 0
    %4340 = vmatpush1.bf16.msra.mxu0 0
    %4341 = vmatprep.subr.bf16.mxu0 0
    %4342 = vmatpush1.bf16.msra.mxu0 0
    %4343 = vmatprep.subr.bf16.mxu0 0
    %4344 = vmatpush1.bf16.msra.mxu0 0
    %4345 = vmatprep.subr.bf16.mxu0 0
    %4346 = vmatpush1.bf16.msra.mxu0 0
    %4347 = vmatprep.subr.bf16.mxu0 0
    %4348 = vmatpush1.bf16.msra.mxu0 0
    %4349 = vmatprep.subr.bf16.mxu0 0
    %4350 = vmatpush1.bf16.msra.mxu0 0
    %4351 = vmatprep.subr.bf16.mxu0 0
    %4352 = vmatpush1.bf16.msra.mxu0 0
    %4353 = vmatprep.subr.bf16.mxu0 0
    %4354 = vmatpush1.bf16.msra.mxu0 0
    %4355 = vmatprep.subr.bf16.mxu0 0
    %4356 = vmatpush1.bf16.msra.mxu0 0
    %4357 = vmatprep.subr.bf16.mxu0 0
    %4358 = vmatpush1.bf16.msra.mxu0 0
    %4359 = vmatprep.subr.bf16.mxu0 0
    %4360 = vmatpush1.bf16.msra.mxu0 0
    %4361 = vmatprep.subr.bf16.mxu0 0
    %4362 = vmatpush1.bf16.msra.mxu0 0
    %4363 = vmatprep.subr.bf16.mxu0 0
    %4364 = vmatpush1.bf16.msra.mxu0 0
    %4365 = vmatprep.mubr.bf16.mxu0 0
    %4366 = vmatmul.mubr.bf16.gmra.mrb[0].mxu0 %v4331
    %v4367 = vpop.f32.mrb[0].mxu0
    %v4368 = vadd.f32 %v4317, %v4367
    %v4369 = vpop.f32.mrb[0].mxu0
    %v4370 = vpop.f32.mrb[0].mxu0
    %v4371 = vpop.f32.mrb[0].mxu0
    %4372 = vdwg.mxu0
    %v4373 = vxor.u32 %v4368, 2147483648
    %v4374 = vmul.f32 %v4373, 1.442695
    %v4375 = vpow.pop %v4374
    %v4376 = vadd.f32 %v4375, 1.0
    %v4377 = vrcp.pop %v4376
    %v4378 = vmul.f32 1.0, %v4377
    %4380 = vset.pattern.permute.xlu0 0
    %4381 = vperm.xlu0 %4380, %v4378
    %v4382 = vpop.permute.xlu0 %4381
    %4384 = vst [vmem:[#allocation7] sm:$0x3] %v4382
    // Predicated region
    $region46: #{tpu_custom_call.1} parent=1 // pred_check
      _
    $region47: #{tpu_custom_call.1} parent=1 // pred_check_branch
      %4386 = sbr.rel (0) target = $region49
    $region48: #{tpu_custom_call.1} parent=1 // pred_region
      %s4388 = ssub.s32 32, 32
      %4389 = vsyncadd [#allocation4], %s4388
      %s4391 = sshll.u32 [#allocation7], 4
      %s4392 = int_to_ptr.vmem [resolvable:$true] %s4391
      %4394 = dma.vmem_to_hbm [thread:$0]  %s4392, 32, %s9, [#allocation4]
    $region49: #{tpu_custom_call.1} parent=1 // pred_fallthru
      _
    // Predicated region
    $region50: #{tpu_custom_call.1} parent=1 // pred_check
      _
    $region51: #{tpu_custom_call.1} parent=1 // pred_check_branch
      %4396 = sbr.rel (0) target = $region53
    $region52: #{tpu_custom_call.1} parent=1 // pred_region
      %4397 = dma.done [#allocation4], 32
    $region53: #{tpu_custom_call.1} parent=1 // pred_fallthru
      _
    %4398 = vsyncpa [#allocation3], 1
    %4399 = vsyncpa [#allocation6], 1
    %4400 = vsyncpa [#allocation4], 1

</llo_original>
